<compile_context>
chip_gen: v6e
topology: v6e:2x2x1
jax: 0.10.0
libtpu: 0.0.40
codegen_flags: <defaults>
</compile_context>

<pallas_src>
import numpy as np
import jax
import jax.numpy as jnp
from jax.experimental import pallas as pl
from jax.experimental.pallas import tpu as pltpu

# ----- small problem sizes consistent with the module -----
B = 2                     # batch
N_VOCAB = 50              # n_vocabulary
EMB = 32                  # embedding_size
SEQ = 8                   # sequence length (== learn-conv kernel height)
CH = 6                    # CBAM channel (cat of three 2-channel conv outputs)
WOUT = EMB - 3            # width after (., 4) kernels with no width padding
HALO = 3                  # halo of the widest (7, 4) conv
LPAD = SEQ + 2 * HALO     # padded row count
KH = 7                    # unified conv kernel height
KW = 4                    # conv kernel width
LANES = CH * EMB          # 192 valid lanes (output channels tiled along lanes)
LANES_PAD = 256           # lane-padded width (same physical vregs as 192)
OUT_W = 128               # lane-dense output width (valid data in [:WOUT])


def _basic_conv_kernel(x_ref, wb_ref, bb_ref, cw1_ref, cw2_ref,
                       lwb_ref, lbb_ref, out_ref):
    f32 = jnp.float32
    x = x_ref[...].astype(f32)                               # (B, 2, SEQ, EMB)

    # ---- channel lane-tiling (once per input channel) + in-kernel halo pad ----
    zlane = jnp.zeros((B, SEQ, LANES_PAD - LANES), f32)
    zhalo = jnp.zeros((B, HALO, LANES_PAD), f32)
    xt0 = []
    for ci in range(2):
        t = jnp.concatenate([x[:, ci]] * CH + [zlane], axis=-1)   # (B, SEQ, 256)
        xt0.append(jnp.concatenate([zhalo, t, zhalo], axis=1))    # (B, LPAD, 256)

    # ---- fused multi-scale conv: one zero-padded (6, 2, 7, 4) kernel ----
    # acc[b, h, co*EMB + e] = bias[co]
    #     + sum_{ci,kh,kw} W[co,ci,kh,kw] * xpad[b, ci, h+kh, e+kw]
    acc = jnp.broadcast_to(bb_ref[...], (B, SEQ, LANES_PAD))      # bias init
    for kw in range(KW):
        if kw == 0:
            xs = xt0
        else:
            # Lazily built lane shift: xs[ci][..., l] = xt0[ci][..., l+kw]
            # (zero past the end).  Cross-block contamination only reaches
            # lanes e >= WOUT, which are never read.
            # (pltpu.roll(t, shift=LANES_PAD - kw, axis=2) is the pure-XLU
            #  alternative with the same safety envelope at these shapes.)
            zk = jnp.zeros((B, LPAD, kw), f32)
            xs = [jnp.concatenate([t[..., kw:], zk], axis=-1) for t in xt0]
        for kh in range(KH):
            for ci in range(2):
                w = wb_ref[ci, kh, kw]                       # (256,) single row load
                acc = acc + w * xs[ci][:, kh:kh + SEQ, :]    # broadcast over (B, SEQ)

    # ---- CBAM channel attention (masked global max/avg pool + shared MLP) ----
    lane = jax.lax.broadcasted_iota(jnp.int32, (1, 1, LANES_PAD), 2)
    valid = jnp.logical_and(lane % EMB < WOUT, lane < LANES)       # (1, 1, 256)
    m1 = jnp.max(jnp.where(valid, acc, -jnp.inf), axis=1)          # (B, 256)
    s1 = jnp.sum(jnp.where(valid, acc, 0.0), axis=1)               # (B, 256)

    inv_hw = 1.0 / float(SEQ * WOUT)
    mx_cols, av_cols = [], []
    for c in range(CH):                                            # aligned 32-lane blocks
        blk = slice(c * EMB, (c + 1) * EMB)
        mx_cols.append(jnp.max(m1[:, blk], axis=-1, keepdims=True))
        av_cols.append(jnp.sum(s1[:, blk], axis=-1, keepdims=True) * inv_hw)
    mx = jnp.concatenate(mx_cols, axis=-1)                         # (B, CH)
    av = jnp.concatenate(av_cols, axis=-1)                         # (B, CH)

    cw1 = cw1_ref[...]                                             # (2, CH)
    cw2 = cw2_ref[...]                                             # (CH, 2)

    def mlp(v):                                                    # (B, CH) -> (B, CH), no bias
        h = jnp.maximum(jnp.sum(v[:, None, :] * cw1[None, :, :], axis=-1), 0.0)   # (B, 2)
        return jnp.sum(h[:, None, :] * cw2[None, :, :], axis=-1)                  # (B, CH)

    attn = jax.nn.sigmoid(mlp(mx) + mlp(av))                       # (B, CH)
    attn_cols = [jnp.broadcast_to(attn[:, c:c + 1], (B, EMB)) for c in range(CH)]
    attn_cols.append(jnp.zeros((B, LANES_PAD - LANES), f32))
    attn_l = jnp.concatenate(attn_cols, axis=-1)                   # (B, 256)
    y_att = acc * attn_l[:, None, :]                               # (B, SEQ, 256)

    # ---- "learn": Conv2d(6, 2, (SEQ, 1), bias=True) + sigmoid ----
    # Both output channels in a single sweep over y_att.
    lwb = lwb_ref[...]                                             # (2, SEQ, 256)
    s2 = jnp.sum(y_att[:, None, :, :] * lwb[None, :, :, :], axis=2)  # (B, 2, 256)
    tot = s2[:, :, 0:EMB]
    for c in range(1, CH):                                         # sum the 6 channel blocks
        tot = tot + s2[:, :, c * EMB:(c + 1) * EMB]
    res = jax.nn.sigmoid(tot + lbb_ref[...][None, :, :])           # (B, 2, EMB)

    # lane-dense (128-wide) store; wrapper keeps only the first WOUT columns
    pad = jnp.zeros((B, 2, OUT_W - EMB), f32)
    out_ref[...] = jnp.concatenate([res, pad], axis=-1)            # (B, 2, 128)


def prepare_params(params):
    """One-time repacking of the module weights into the kernel's lane layout."""
    # one zero-padded (6, 2, 7, 4) kernel holding cnn3 / cnn5 / cnn7
    w6 = jnp.concatenate([
        jnp.pad(params["w3"], ((0, 0), (0, 0), (2, 2), (0, 0))),
        jnp.pad(params["w5"], ((0, 0), (0, 0), (1, 1), (0, 0))),
        params["w7"]], axis=0)                                     # (CH, 2, KH, KW)
    b6 = jnp.concatenate([params["b3"], params["b5"], params["b7"]])  # (CH,)

    # wb[ci, kh, kw, co*EMB + e] = w6[co, ci, kh, kw] ;  zero in lanes >= 192
    wl = jnp.transpose(w6, (1, 2, 3, 0))                           # (2, KH, KW, CH)
    wb = jnp.broadcast_to(wl[..., None], (2, KH, KW, CH, EMB)).reshape(2, KH, KW, LANES)
    wb = jnp.pad(wb, ((0, 0), (0, 0), (0, 0), (0, LANES_PAD - LANES)))

    bb = jnp.broadcast_to(b6[:, None], (CH, EMB)).reshape(1, LANES)
    bb = jnp.pad(bb, ((0, 0), (0, LANES_PAD - LANES)))             # (1, 256)

    # lwb[o, h, c*EMB + e] = lw[o, c, h, 0] ;  lbb[o, e] = lb[o]
    lw_t = jnp.transpose(params["lw"][..., 0], (0, 2, 1))          # (2, SEQ, CH)
    lwb = jnp.broadcast_to(lw_t[..., None], (2, SEQ, CH, EMB)).reshape(2, SEQ, LANES)
    lwb = jnp.pad(lwb, ((0, 0), (0, 0), (0, LANES_PAD - LANES)))   # (2, SEQ, 256)
    lbb = jnp.broadcast_to(params["lb"][:, None], (2, EMB))        # (2, EMB)

    # TODO(synk): on v6e/v7x cast embed/wb/lwb to bfloat16 here (f32 accumulate
    # in-kernel); keep float32 on v5e.
    return dict(embed=params["embed"], wb=wb, bb=bb,
                cw1=params["cw1"], cw2=params["cw2"], lwb=lwb, lbb=lbb)


@jax.jit
def basic_conv_forward(ids, prep):
    # TODO(synk): at production SEQ, fuse this gather into the kernel via
    # scalar-prefetched ids + row gather instead of materializing it in HBM.
    x = prep["embed"][ids]                                         # (B, 2, SEQ, EMB)

    out = pl.pallas_call(
        _basic_conv_kernel,
        out_shape=jax.ShapeDtypeStruct((B, 2, OUT_W), jnp.float32),
        grid=(1,),
        in_specs=[
            pl.BlockSpec((B, 2, SEQ, EMB), lambda i: (0, 0, 0, 0)),
            pl.BlockSpec((2, KH, KW, LANES_PAD), lambda i: (0, 0, 0, 0)),
            pl.BlockSpec((1, LANES_PAD), lambda i: (0, 0)),
            pl.BlockSpec((2, CH), lambda i: (0, 0)),
            pl.BlockSpec((CH, 2), lambda i: (0, 0)),
            pl.BlockSpec((2, SEQ, LANES_PAD), lambda i: (0, 0, 0)),
            pl.BlockSpec((2, EMB), lambda i: (0, 0)),
        ],
        out_specs=pl.BlockSpec((B, 2, OUT_W), lambda i: (0, 0, 0)),
        compiler_params=pltpu.CompilerParams(
            dimension_semantics=("arbitrary",)),
    )(x, prep["wb"], prep["bb"], prep["cw1"], prep["cw2"],
      prep["lwb"], prep["lbb"])

    return out[:, :, :WOUT].reshape(B, -1)                         # == x.view(B, -1)


# ---------------- pure-JAX reference (for correctness check) ----------------
def _conv2d(x, w, b, pad_h):
    out = jax.lax.conv_general_dilated(
        x, w, window_strides=(1, 1), padding=((pad_h, pad_h), (0, 0)),
        dimension_numbers=("NCHW", "OIHW", "NCHW"))
    if b is not None:
        out = out + b[None, :, None, None]
    return out


def reference(ids, params):
    x = params["embed"][ids]
    x3 = _conv2d(x, params["w3"], params["b3"], 1)
    x5 = _conv2d(x, params["w5"], params["b5"], 2)
    x7 = _conv2d(x, params["w7"], params["b7"], 3)
    y = jnp.concatenate([x3, x5, x7], axis=1)                      # (B, 6, SEQ, WOUT)
    mx = jnp.max(y, axis=(2, 3), keepdims=True)
    av = jnp.mean(y, axis=(2, 3), keepdims=True)

    def mlp(v):
        h = jnp.maximum(jnp.einsum("oc,bcij->boij", params["cw1"], v), 0.0)
        return jnp.einsum("oc,bcij->boij", params["cw2"], h)

    attn = jax.nn.sigmoid(mlp(mx) + mlp(av))
    y = y * attn
    out = jax.nn.sigmoid(_conv2d(y, params["lw"], params["lb"], 0))  # (B, 2, 1, WOUT)
    return out.reshape(out.shape[0], -1)


def init_params(key):
    ks = jax.random.split(key, 11)
    u = lambda k, s: jax.random.uniform(k, s, jnp.float32, -0.1, 0.1)
    return dict(
        embed=jax.random.normal(ks[0], (N_VOCAB, EMB), jnp.float32),
        w3=u(ks[1], (2, 2, 3, 4)), b3=u(ks[2], (2,)),
        w5=u(ks[3], (2, 2, 5, 4)), b5=u(ks[4], (2,)),
        w7=u(ks[5], (2, 2, 7, 4)), b7=u(ks[6], (2,)),
        cw1=u(ks[7], (2, CH)), cw2=u(ks[8], (CH, 2)),
        lw=u(ks[9], (2, CH, SEQ, 1)), lb=u(ks[10], (2,)),
    )


if __name__ == "__main__":
    key = jax.random.PRNGKey(0)
    kp, ki = jax.random.split(key)
    params = init_params(kp)
    prep = prepare_params(params)                                  # once, not per call
    ids = jax.random.randint(ki, (B, 2, SEQ), 0, N_VOCAB, dtype=jnp.int32)

    out = basic_conv_forward(ids, prep)
    jax.block_until_ready(out)

    ref = reference(ids, params)
    np.testing.assert_allclose(np.asarray(out), np.asarray(ref), rtol=1e-4, atol=1e-5)
    print("KERNEL_OK")
</pallas_src>

<mosaic_0001>
module attributes {stable_mosaic.version = 11 : i64} {
  func.func @_basic_conv_kernel(%arg0: i32, %arg1: memref<2x2x8x32xf32, #tpu.memory_space<vmem>>, %arg2: memref<2x7x4x256xf32, #tpu.memory_space<vmem>>, %arg3: memref<1x256xf32, #tpu.memory_space<vmem>>, %arg4: memref<2x6xf32, #tpu.memory_space<vmem>>, %arg5: memref<6x2xf32, #tpu.memory_space<vmem>>, %arg6: memref<2x8x256xf32, #tpu.memory_space<vmem>>, %arg7: memref<2x32xf32, #tpu.memory_space<vmem>>, %arg8: memref<2x2x128xf32, #tpu.memory_space<vmem>>) attributes {dimension_semantics = [#tpu.dimension_semantics<arbitrary>], iteration_bounds = array<i64: 1>, scalar_prefetch = 0 : i64, scratch_operands = 0 : i64, tpu.core_type = #tpu.core_type<tc>, window_params = [{pipeline_mode = #tpu.pipeline_mode<synchronous>, transform_indices = @transform_0, window_bounds = array<i64: 2, 2, 8, 32>}, {pipeline_mode = #tpu.pipeline_mode<synchronous>, transform_indices = @transform_1, window_bounds = array<i64: 2, 7, 4, 256>}, {pipeline_mode = #tpu.pipeline_mode<synchronous>, transform_indices = @transform_2, window_bounds = array<i64: 1, 256>}, {pipeline_mode = #tpu.pipeline_mode<synchronous>, transform_indices = @transform_3, window_bounds = array<i64: 2, 6>}, {pipeline_mode = #tpu.pipeline_mode<synchronous>, transform_indices = @transform_4, window_bounds = array<i64: 6, 2>}, {pipeline_mode = #tpu.pipeline_mode<synchronous>, transform_indices = @transform_5, window_bounds = array<i64: 2, 8, 256>}, {pipeline_mode = #tpu.pipeline_mode<synchronous>, transform_indices = @transform_6, window_bounds = array<i64: 2, 32>}, {pipeline_mode = #tpu.pipeline_mode<synchronous>, transform_indices = @transform_7, window_bounds = array<i64: 2, 2, 128>}]} {
    %c0 = arith.constant 0 : index
    %c0_0 = arith.constant 0 : index
    %c0_1 = arith.constant 0 : index
    %c0_2 = arith.constant 0 : index
    %0 = vector.load %arg1[%c0, %c0_0, %c0_1, %c0_2] : memref<2x2x8x32xf32, #tpu.memory_space<vmem>>, vector<2x2x8x32xf32>
    %cst = arith.constant 0.000000e+00 : f32
    %1 = vector.broadcast %cst : f32 to vector<2x8x64xf32>
    %cst_3 = arith.constant 0.000000e+00 : f32
    %2 = vector.broadcast %cst_3 : f32 to vector<2x3x256xf32>
    %3 = vector.extract_strided_slice %0 {offsets = [0, 0, 0, 0], sizes = [2, 1, 8, 32], strides = [1, 1, 1, 1]} : vector<2x2x8x32xf32> to vector<2x1x8x32xf32>
    %4 = vector.shape_cast %3 : vector<2x1x8x32xf32> to vector<2x8x32xf32>
    %5 = tpu.concatenate %4, %4, %4, %4, %4, %4, %1 in 2 : vector<2x8x32xf32>, vector<2x8x32xf32>, vector<2x8x32xf32>, vector<2x8x32xf32>, vector<2x8x32xf32>, vector<2x8x32xf32>, vector<2x8x64xf32> -> vector<2x8x256xf32>
    %6 = tpu.concatenate %2, %5, %2 in 1 : vector<2x3x256xf32>, vector<2x8x256xf32>, vector<2x3x256xf32> -> vector<2x14x256xf32>
    %7 = vector.extract_strided_slice %0 {offsets = [0, 1, 0, 0], sizes = [2, 1, 8, 32], strides = [1, 1, 1, 1]} : vector<2x2x8x32xf32> to vector<2x1x8x32xf32>
    %8 = vector.shape_cast %7 : vector<2x1x8x32xf32> to vector<2x8x32xf32>
    %9 = tpu.concatenate %8, %8, %8, %8, %8, %8, %1 in 2 : vector<2x8x32xf32>, vector<2x8x32xf32>, vector<2x8x32xf32>, vector<2x8x32xf32>, vector<2x8x32xf32>, vector<2x8x32xf32>, vector<2x8x64xf32> -> vector<2x8x256xf32>
    %10 = tpu.concatenate %2, %9, %2 in 1 : vector<2x3x256xf32>, vector<2x8x256xf32>, vector<2x3x256xf32> -> vector<2x14x256xf32>
    %c0_4 = arith.constant 0 : index
    %c0_5 = arith.constant 0 : index
    %11 = vector.load %arg3[%c0_4, %c0_5] : memref<1x256xf32, #tpu.memory_space<vmem>>, vector<1x256xf32>
    %12 = vector.shape_cast %11 : vector<1x256xf32> to vector<1x1x256xf32>
    %13 = vector.broadcast %12 : vector<1x1x256xf32> to vector<2x8x256xf32>
    %c0_6 = arith.constant 0 : index
    %c0_7 = arith.constant 0 : index
    %c0_8 = arith.constant 0 : index
    %c0_9 = arith.constant 0 : index
    %14 = vector.load %arg2[%c0_6, %c0_7, %c0_8, %c0_9] : memref<2x7x4x256xf32, #tpu.memory_space<vmem>>, vector<1x1x1x256xf32>
    %15 = vector.shape_cast %14 : vector<1x1x1x256xf32> to vector<256xf32>
    %16 = vector.extract_strided_slice %6 {offsets = [0, 0, 0], sizes = [2, 8, 256], strides = [1, 1, 1]} : vector<2x14x256xf32> to vector<2x8x256xf32>
    %17 = vector.shape_cast %15 : vector<256xf32> to vector<1x1x256xf32>
    %18 = vector.broadcast %17 : vector<1x1x256xf32> to vector<2x8x256xf32>
    %19 = arith.mulf %18, %16 : vector<2x8x256xf32>
    %20 = arith.addf %13, %19 : vector<2x8x256xf32>
    %c1 = arith.constant 1 : index
    %c0_10 = arith.constant 0 : index
    %c0_11 = arith.constant 0 : index
    %c0_12 = arith.constant 0 : index
    %21 = vector.load %arg2[%c1, %c0_10, %c0_11, %c0_12] : memref<2x7x4x256xf32, #tpu.memory_space<vmem>>, vector<1x1x1x256xf32>
    %22 = vector.shape_cast %21 : vector<1x1x1x256xf32> to vector<256xf32>
    %23 = vector.extract_strided_slice %10 {offsets = [0, 0, 0], sizes = [2, 8, 256], strides = [1, 1, 1]} : vector<2x14x256xf32> to vector<2x8x256xf32>
    %24 = vector.shape_cast %22 : vector<256xf32> to vector<1x1x256xf32>
    %25 = vector.broadcast %24 : vector<1x1x256xf32> to vector<2x8x256xf32>
    %26 = arith.mulf %25, %23 : vector<2x8x256xf32>
    %27 = arith.addf %20, %26 : vector<2x8x256xf32>
    %c0_13 = arith.constant 0 : index
    %c1_14 = arith.constant 1 : index
    %c0_15 = arith.constant 0 : index
    %c0_16 = arith.constant 0 : index
    %28 = vector.load %arg2[%c0_13, %c1_14, %c0_15, %c0_16] : memref<2x7x4x256xf32, #tpu.memory_space<vmem>>, vector<1x1x1x256xf32>
    %29 = vector.shape_cast %28 : vector<1x1x1x256xf32> to vector<256xf32>
    %30 = vector.extract_strided_slice %6 {offsets = [0, 1, 0], sizes = [2, 8, 256], strides = [1, 1, 1]} : vector<2x14x256xf32> to vector<2x8x256xf32>
    %31 = vector.shape_cast %29 : vector<256xf32> to vector<1x1x256xf32>
    %32 = vector.broadcast %31 : vector<1x1x256xf32> to vector<2x8x256xf32>
    %33 = arith.mulf %32, %30 : vector<2x8x256xf32>
    %34 = arith.addf %27, %33 : vector<2x8x256xf32>
    %c1_17 = arith.constant 1 : index
    %c1_18 = arith.constant 1 : index
    %c0_19 = arith.constant 0 : index
    %c0_20 = arith.constant 0 : index
    %35 = vector.load %arg2[%c1_17, %c1_18, %c0_19, %c0_20] : memref<2x7x4x256xf32, #tpu.memory_space<vmem>>, vector<1x1x1x256xf32>
    %36 = vector.shape_cast %35 : vector<1x1x1x256xf32> to vector<256xf32>
    %37 = vector.extract_strided_slice %10 {offsets = [0, 1, 0], sizes = [2, 8, 256], strides = [1, 1, 1]} : vector<2x14x256xf32> to vector<2x8x256xf32>
    %38 = vector.shape_cast %36 : vector<256xf32> to vector<1x1x256xf32>
    %39 = vector.broadcast %38 : vector<1x1x256xf32> to vector<2x8x256xf32>
    %40 = arith.mulf %39, %37 : vector<2x8x256xf32>
    %41 = arith.addf %34, %40 : vector<2x8x256xf32>
    %c0_21 = arith.constant 0 : index
    %c2 = arith.constant 2 : index
    %c0_22 = arith.constant 0 : index
    %c0_23 = arith.constant 0 : index
    %42 = vector.load %arg2[%c0_21, %c2, %c0_22, %c0_23] : memref<2x7x4x256xf32, #tpu.memory_space<vmem>>, vector<1x1x1x256xf32>
    %43 = vector.shape_cast %42 : vector<1x1x1x256xf32> to vector<256xf32>
    %44 = vector.extract_strided_slice %6 {offsets = [0, 2, 0], sizes = [2, 8, 256], strides = [1, 1, 1]} : vector<2x14x256xf32> to vector<2x8x256xf32>
    %45 = vector.shape_cast %43 : vector<256xf32> to vector<1x1x256xf32>
    %46 = vector.broadcast %45 : vector<1x1x256xf32> to vector<2x8x256xf32>
    %47 = arith.mulf %46, %44 : vector<2x8x256xf32>
    %48 = arith.addf %41, %47 : vector<2x8x256xf32>
    %c1_24 = arith.constant 1 : index
    %c2_25 = arith.constant 2 : index
    %c0_26 = arith.constant 0 : index
    %c0_27 = arith.constant 0 : index
    %49 = vector.load %arg2[%c1_24, %c2_25, %c0_26, %c0_27] : memref<2x7x4x256xf32, #tpu.memory_space<vmem>>, vector<1x1x1x256xf32>
    %50 = vector.shape_cast %49 : vector<1x1x1x256xf32> to vector<256xf32>
    %51 = vector.extract_strided_slice %10 {offsets = [0, 2, 0], sizes = [2, 8, 256], strides = [1, 1, 1]} : vector<2x14x256xf32> to vector<2x8x256xf32>
    %52 = vector.shape_cast %50 : vector<256xf32> to vector<1x1x256xf32>
    %53 = vector.broadcast %52 : vector<1x1x256xf32> to vector<2x8x256xf32>
    %54 = arith.mulf %53, %51 : vector<2x8x256xf32>
    %55 = arith.addf %48, %54 : vector<2x8x256xf32>
    %c0_28 = arith.constant 0 : index
    %c3 = arith.constant 3 : index
    %c0_29 = arith.constant 0 : index
    %c0_30 = arith.constant 0 : index
    %56 = vector.load %arg2[%c0_28, %c3, %c0_29, %c0_30] : memref<2x7x4x256xf32, #tpu.memory_space<vmem>>, vector<1x1x1x256xf32>
    %57 = vector.shape_cast %56 : vector<1x1x1x256xf32> to vector<256xf32>
    %58 = vector.extract_strided_slice %6 {offsets = [0, 3, 0], sizes = [2, 8, 256], strides = [1, 1, 1]} : vector<2x14x256xf32> to vector<2x8x256xf32>
    %59 = vector.shape_cast %57 : vector<256xf32> to vector<1x1x256xf32>
    %60 = vector.broadcast %59 : vector<1x1x256xf32> to vector<2x8x256xf32>
    %61 = arith.mulf %60, %58 : vector<2x8x256xf32>
    %62 = arith.addf %55, %61 : vector<2x8x256xf32>
    %c1_31 = arith.constant 1 : index
    %c3_32 = arith.constant 3 : index
    %c0_33 = arith.constant 0 : index
    %c0_34 = arith.constant 0 : index
    %63 = vector.load %arg2[%c1_31, %c3_32, %c0_33, %c0_34] : memref<2x7x4x256xf32, #tpu.memory_space<vmem>>, vector<1x1x1x256xf32>
    %64 = vector.shape_cast %63 : vector<1x1x1x256xf32> to vector<256xf32>
    %65 = vector.extract_strided_slice %10 {offsets = [0, 3, 0], sizes = [2, 8, 256], strides = [1, 1, 1]} : vector<2x14x256xf32> to vector<2x8x256xf32>
    %66 = vector.shape_cast %64 : vector<256xf32> to vector<1x1x256xf32>
    %67 = vector.broadcast %66 : vector<1x1x256xf32> to vector<2x8x256xf32>
    %68 = arith.mulf %67, %65 : vector<2x8x256xf32>
    %69 = arith.addf %62, %68 : vector<2x8x256xf32>
    %c0_35 = arith.constant 0 : index
    %c4 = arith.constant 4 : index
    %c0_36 = arith.constant 0 : index
    %c0_37 = arith.constant 0 : index
    %70 = vector.load %arg2[%c0_35, %c4, %c0_36, %c0_37] : memref<2x7x4x256xf32, #tpu.memory_space<vmem>>, vector<1x1x1x256xf32>
    %71 = vector.shape_cast %70 : vector<1x1x1x256xf32> to vector<256xf32>
    %72 = vector.extract_strided_slice %6 {offsets = [0, 4, 0], sizes = [2, 8, 256], strides = [1, 1, 1]} : vector<2x14x256xf32> to vector<2x8x256xf32>
    %73 = vector.shape_cast %71 : vector<256xf32> to vector<1x1x256xf32>
    %74 = vector.broadcast %73 : vector<1x1x256xf32> to vector<2x8x256xf32>
    %75 = arith.mulf %74, %72 : vector<2x8x256xf32>
    %76 = arith.addf %69, %75 : vector<2x8x256xf32>
    %c1_38 = arith.constant 1 : index
    %c4_39 = arith.constant 4 : index
    %c0_40 = arith.constant 0 : index
    %c0_41 = arith.constant 0 : index
    %77 = vector.load %arg2[%c1_38, %c4_39, %c0_40, %c0_41] : memref<2x7x4x256xf32, #tpu.memory_space<vmem>>, vector<1x1x1x256xf32>
    %78 = vector.shape_cast %77 : vector<1x1x1x256xf32> to vector<256xf32>
    %79 = vector.extract_strided_slice %10 {offsets = [0, 4, 0], sizes = [2, 8, 256], strides = [1, 1, 1]} : vector<2x14x256xf32> to vector<2x8x256xf32>
    %80 = vector.shape_cast %78 : vector<256xf32> to vector<1x1x256xf32>
    %81 = vector.broadcast %80 : vector<1x1x256xf32> to vector<2x8x256xf32>
    %82 = arith.mulf %81, %79 : vector<2x8x256xf32>
    %83 = arith.addf %76, %82 : vector<2x8x256xf32>
    %c0_42 = arith.constant 0 : index
    %c5 = arith.constant 5 : index
    %c0_43 = arith.constant 0 : index
    %c0_44 = arith.constant 0 : index
    %84 = vector.load %arg2[%c0_42, %c5, %c0_43, %c0_44] : memref<2x7x4x256xf32, #tpu.memory_space<vmem>>, vector<1x1x1x256xf32>
    %85 = vector.shape_cast %84 : vector<1x1x1x256xf32> to vector<256xf32>
    %86 = vector.extract_strided_slice %6 {offsets = [0, 5, 0], sizes = [2, 8, 256], strides = [1, 1, 1]} : vector<2x14x256xf32> to vector<2x8x256xf32>
    %87 = vector.shape_cast %85 : vector<256xf32> to vector<1x1x256xf32>
    %88 = vector.broadcast %87 : vector<1x1x256xf32> to vector<2x8x256xf32>
    %89 = arith.mulf %88, %86 : vector<2x8x256xf32>
    %90 = arith.addf %83, %89 : vector<2x8x256xf32>
    %c1_45 = arith.constant 1 : index
    %c5_46 = arith.constant 5 : index
    %c0_47 = arith.constant 0 : index
    %c0_48 = arith.constant 0 : index
    %91 = vector.load %arg2[%c1_45, %c5_46, %c0_47, %c0_48] : memref<2x7x4x256xf32, #tpu.memory_space<vmem>>, vector<1x1x1x256xf32>
    %92 = vector.shape_cast %91 : vector<1x1x1x256xf32> to vector<256xf32>
    %93 = vector.extract_strided_slice %10 {offsets = [0, 5, 0], sizes = [2, 8, 256], strides = [1, 1, 1]} : vector<2x14x256xf32> to vector<2x8x256xf32>
    %94 = vector.shape_cast %92 : vector<256xf32> to vector<1x1x256xf32>
    %95 = vector.broadcast %94 : vector<1x1x256xf32> to vector<2x8x256xf32>
    %96 = arith.mulf %95, %93 : vector<2x8x256xf32>
    %97 = arith.addf %90, %96 : vector<2x8x256xf32>
    %c0_49 = arith.constant 0 : index
    %c6 = arith.constant 6 : index
    %c0_50 = arith.constant 0 : index
    %c0_51 = arith.constant 0 : index
    %98 = vector.load %arg2[%c0_49, %c6, %c0_50, %c0_51] : memref<2x7x4x256xf32, #tpu.memory_space<vmem>>, vector<1x1x1x256xf32>
    %99 = vector.shape_cast %98 : vector<1x1x1x256xf32> to vector<256xf32>
    %100 = vector.extract_strided_slice %6 {offsets = [0, 6, 0], sizes = [2, 8, 256], strides = [1, 1, 1]} : vector<2x14x256xf32> to vector<2x8x256xf32>
    %101 = vector.shape_cast %99 : vector<256xf32> to vector<1x1x256xf32>
    %102 = vector.broadcast %101 : vector<1x1x256xf32> to vector<2x8x256xf32>
    %103 = arith.mulf %102, %100 : vector<2x8x256xf32>
    %104 = arith.addf %97, %103 : vector<2x8x256xf32>
    %c1_52 = arith.constant 1 : index
    %c6_53 = arith.constant 6 : index
    %c0_54 = arith.constant 0 : index
    %c0_55 = arith.constant 0 : index
    %105 = vector.load %arg2[%c1_52, %c6_53, %c0_54, %c0_55] : memref<2x7x4x256xf32, #tpu.memory_space<vmem>>, vector<1x1x1x256xf32>
    %106 = vector.shape_cast %105 : vector<1x1x1x256xf32> to vector<256xf32>
    %107 = vector.extract_strided_slice %10 {offsets = [0, 6, 0], sizes = [2, 8, 256], strides = [1, 1, 1]} : vector<2x14x256xf32> to vector<2x8x256xf32>
    %108 = vector.shape_cast %106 : vector<256xf32> to vector<1x1x256xf32>
    %109 = vector.broadcast %108 : vector<1x1x256xf32> to vector<2x8x256xf32>
    %110 = arith.mulf %109, %107 : vector<2x8x256xf32>
    %111 = arith.addf %104, %110 : vector<2x8x256xf32>
    %cst_56 = arith.constant 0.000000e+00 : f32
    %112 = vector.broadcast %cst_56 : f32 to vector<2x14x1xf32>
    %113 = vector.extract_strided_slice %6 {offsets = [0, 0, 1], sizes = [2, 14, 255], strides = [1, 1, 1]} : vector<2x14x256xf32> to vector<2x14x255xf32>
    %114 = tpu.concatenate %113, %112 in 2 : vector<2x14x255xf32>, vector<2x14x1xf32> -> vector<2x14x256xf32>
    %115 = vector.extract_strided_slice %10 {offsets = [0, 0, 1], sizes = [2, 14, 255], strides = [1, 1, 1]} : vector<2x14x256xf32> to vector<2x14x255xf32>
    %116 = tpu.concatenate %115, %112 in 2 : vector<2x14x255xf32>, vector<2x14x1xf32> -> vector<2x14x256xf32>
    %c0_57 = arith.constant 0 : index
    %c0_58 = arith.constant 0 : index
    %c1_59 = arith.constant 1 : index
    %c0_60 = arith.constant 0 : index
    %117 = vector.load %arg2[%c0_57, %c0_58, %c1_59, %c0_60] : memref<2x7x4x256xf32, #tpu.memory_space<vmem>>, vector<1x1x1x256xf32>
    %118 = vector.shape_cast %117 : vector<1x1x1x256xf32> to vector<256xf32>
    %119 = vector.extract_strided_slice %114 {offsets = [0, 0, 0], sizes = [2, 8, 256], strides = [1, 1, 1]} : vector<2x14x256xf32> to vector<2x8x256xf32>
    %120 = vector.shape_cast %118 : vector<256xf32> to vector<1x1x256xf32>
    %121 = vector.broadcast %120 : vector<1x1x256xf32> to vector<2x8x256xf32>
    %122 = arith.mulf %121, %119 : vector<2x8x256xf32>
    %123 = arith.addf %111, %122 : vector<2x8x256xf32>
    %c1_61 = arith.constant 1 : index
    %c0_62 = arith.constant 0 : index
    %c1_63 = arith.constant 1 : index
    %c0_64 = arith.constant 0 : index
    %124 = vector.load %arg2[%c1_61, %c0_62, %c1_63, %c0_64] : memref<2x7x4x256xf32, #tpu.memory_space<vmem>>, vector<1x1x1x256xf32>
    %125 = vector.shape_cast %124 : vector<1x1x1x256xf32> to vector<256xf32>
    %126 = vector.extract_strided_slice %116 {offsets = [0, 0, 0], sizes = [2, 8, 256], strides = [1, 1, 1]} : vector<2x14x256xf32> to vector<2x8x256xf32>
    %127 = vector.shape_cast %125 : vector<256xf32> to vector<1x1x256xf32>
    %128 = vector.broadcast %127 : vector<1x1x256xf32> to vector<2x8x256xf32>
    %129 = arith.mulf %128, %126 : vector<2x8x256xf32>
    %130 = arith.addf %123, %129 : vector<2x8x256xf32>
    %c0_65 = arith.constant 0 : index
    %c1_66 = arith.constant 1 : index
    %c1_67 = arith.constant 1 : index
    %c0_68 = arith.constant 0 : index
    %131 = vector.load %arg2[%c0_65, %c1_66, %c1_67, %c0_68] : memref<2x7x4x256xf32, #tpu.memory_space<vmem>>, vector<1x1x1x256xf32>
    %132 = vector.shape_cast %131 : vector<1x1x1x256xf32> to vector<256xf32>
    %133 = vector.extract_strided_slice %114 {offsets = [0, 1, 0], sizes = [2, 8, 256], strides = [1, 1, 1]} : vector<2x14x256xf32> to vector<2x8x256xf32>
    %134 = vector.shape_cast %132 : vector<256xf32> to vector<1x1x256xf32>
    %135 = vector.broadcast %134 : vector<1x1x256xf32> to vector<2x8x256xf32>
    %136 = arith.mulf %135, %133 : vector<2x8x256xf32>
    %137 = arith.addf %130, %136 : vector<2x8x256xf32>
    %c1_69 = arith.constant 1 : index
    %c1_70 = arith.constant 1 : index
    %c1_71 = arith.constant 1 : index
    %c0_72 = arith.constant 0 : index
    %138 = vector.load %arg2[%c1_69, %c1_70, %c1_71, %c0_72] : memref<2x7x4x256xf32, #tpu.memory_space<vmem>>, vector<1x1x1x256xf32>
    %139 = vector.shape_cast %138 : vector<1x1x1x256xf32> to vector<256xf32>
    %140 = vector.extract_strided_slice %116 {offsets = [0, 1, 0], sizes = [2, 8, 256], strides = [1, 1, 1]} : vector<2x14x256xf32> to vector<2x8x256xf32>
    %141 = vector.shape_cast %139 : vector<256xf32> to vector<1x1x256xf32>
    %142 = vector.broadcast %141 : vector<1x1x256xf32> to vector<2x8x256xf32>
    %143 = arith.mulf %142, %140 : vector<2x8x256xf32>
    %144 = arith.addf %137, %143 : vector<2x8x256xf32>
    %c0_73 = arith.constant 0 : index
    %c2_74 = arith.constant 2 : index
    %c1_75 = arith.constant 1 : index
    %c0_76 = arith.constant 0 : index
    %145 = vector.load %arg2[%c0_73, %c2_74, %c1_75, %c0_76] : memref<2x7x4x256xf32, #tpu.memory_space<vmem>>, vector<1x1x1x256xf32>
    %146 = vector.shape_cast %145 : vector<1x1x1x256xf32> to vector<256xf32>
    %147 = vector.extract_strided_slice %114 {offsets = [0, 2, 0], sizes = [2, 8, 256], strides = [1, 1, 1]} : vector<2x14x256xf32> to vector<2x8x256xf32>
    %148 = vector.shape_cast %146 : vector<256xf32> to vector<1x1x256xf32>
    %149 = vector.broadcast %148 : vector<1x1x256xf32> to vector<2x8x256xf32>
    %150 = arith.mulf %149, %147 : vector<2x8x256xf32>
    %151 = arith.addf %144, %150 : vector<2x8x256xf32>
    %c1_77 = arith.constant 1 : index
    %c2_78 = arith.constant 2 : index
    %c1_79 = arith.constant 1 : index
    %c0_80 = arith.constant 0 : index
    %152 = vector.load %arg2[%c1_77, %c2_78, %c1_79, %c0_80] : memref<2x7x4x256xf32, #tpu.memory_space<vmem>>, vector<1x1x1x256xf32>
    %153 = vector.shape_cast %152 : vector<1x1x1x256xf32> to vector<256xf32>
    %154 = vector.extract_strided_slice %116 {offsets = [0, 2, 0], sizes = [2, 8, 256], strides = [1, 1, 1]} : vector<2x14x256xf32> to vector<2x8x256xf32>
    %155 = vector.shape_cast %153 : vector<256xf32> to vector<1x1x256xf32>
    %156 = vector.broadcast %155 : vector<1x1x256xf32> to vector<2x8x256xf32>
    %157 = arith.mulf %156, %154 : vector<2x8x256xf32>
    %158 = arith.addf %151, %157 : vector<2x8x256xf32>
    %c0_81 = arith.constant 0 : index
    %c3_82 = arith.constant 3 : index
    %c1_83 = arith.constant 1 : index
    %c0_84 = arith.constant 0 : index
    %159 = vector.load %arg2[%c0_81, %c3_82, %c1_83, %c0_84] : memref<2x7x4x256xf32, #tpu.memory_space<vmem>>, vector<1x1x1x256xf32>
    %160 = vector.shape_cast %159 : vector<1x1x1x256xf32> to vector<256xf32>
    %161 = vector.extract_strided_slice %114 {offsets = [0, 3, 0], sizes = [2, 8, 256], strides = [1, 1, 1]} : vector<2x14x256xf32> to vector<2x8x256xf32>
    %162 = vector.shape_cast %160 : vector<256xf32> to vector<1x1x256xf32>
    %163 = vector.broadcast %162 : vector<1x1x256xf32> to vector<2x8x256xf32>
    %164 = arith.mulf %163, %161 : vector<2x8x256xf32>
    %165 = arith.addf %158, %164 : vector<2x8x256xf32>
    %c1_85 = arith.constant 1 : index
    %c3_86 = arith.constant 3 : index
    %c1_87 = arith.constant 1 : index
    %c0_88 = arith.constant 0 : index
    %166 = vector.load %arg2[%c1_85, %c3_86, %c1_87, %c0_88] : memref<2x7x4x256xf32, #tpu.memory_space<vmem>>, vector<1x1x1x256xf32>
    %167 = vector.shape_cast %166 : vector<1x1x1x256xf32> to vector<256xf32>
    %168 = vector.extract_strided_slice %116 {offsets = [0, 3, 0], sizes = [2, 8, 256], strides = [1, 1, 1]} : vector<2x14x256xf32> to vector<2x8x256xf32>
    %169 = vector.shape_cast %167 : vector<256xf32> to vector<1x1x256xf32>
    %170 = vector.broadcast %169 : vector<1x1x256xf32> to vector<2x8x256xf32>
    %171 = arith.mulf %170, %168 : vector<2x8x256xf32>
    %172 = arith.addf %165, %171 : vector<2x8x256xf32>
    %c0_89 = arith.constant 0 : index
    %c4_90 = arith.constant 4 : index
    %c1_91 = arith.constant 1 : index
    %c0_92 = arith.constant 0 : index
    %173 = vector.load %arg2[%c0_89, %c4_90, %c1_91, %c0_92] : memref<2x7x4x256xf32, #tpu.memory_space<vmem>>, vector<1x1x1x256xf32>
    %174 = vector.shape_cast %173 : vector<1x1x1x256xf32> to vector<256xf32>
    %175 = vector.extract_strided_slice %114 {offsets = [0, 4, 0], sizes = [2, 8, 256], strides = [1, 1, 1]} : vector<2x14x256xf32> to vector<2x8x256xf32>
    %176 = vector.shape_cast %174 : vector<256xf32> to vector<1x1x256xf32>
    %177 = vector.broadcast %176 : vector<1x1x256xf32> to vector<2x8x256xf32>
    %178 = arith.mulf %177, %175 : vector<2x8x256xf32>
    %179 = arith.addf %172, %178 : vector<2x8x256xf32>
    %c1_93 = arith.constant 1 : index
    %c4_94 = arith.constant 4 : index
    %c1_95 = arith.constant 1 : index
    %c0_96 = arith.constant 0 : index
    %180 = vector.load %arg2[%c1_93, %c4_94, %c1_95, %c0_96] : memref<2x7x4x256xf32, #tpu.memory_space<vmem>>, vector<1x1x1x256xf32>
    %181 = vector.shape_cast %180 : vector<1x1x1x256xf32> to vector<256xf32>
    %182 = vector.extract_strided_slice %116 {offsets = [0, 4, 0], sizes = [2, 8, 256], strides = [1, 1, 1]} : vector<2x14x256xf32> to vector<2x8x256xf32>
    %183 = vector.shape_cast %181 : vector<256xf32> to vector<1x1x256xf32>
    %184 = vector.broadcast %183 : vector<1x1x256xf32> to vector<2x8x256xf32>
    %185 = arith.mulf %184, %182 : vector<2x8x256xf32>
    %186 = arith.addf %179, %185 : vector<2x8x256xf32>
    %c0_97 = arith.constant 0 : index
    %c5_98 = arith.constant 5 : index
    %c1_99 = arith.constant 1 : index
    %c0_100 = arith.constant 0 : index
    %187 = vector.load %arg2[%c0_97, %c5_98, %c1_99, %c0_100] : memref<2x7x4x256xf32, #tpu.memory_space<vmem>>, vector<1x1x1x256xf32>
    %188 = vector.shape_cast %187 : vector<1x1x1x256xf32> to vector<256xf32>
    %189 = vector.extract_strided_slice %114 {offsets = [0, 5, 0], sizes = [2, 8, 256], strides = [1, 1, 1]} : vector<2x14x256xf32> to vector<2x8x256xf32>
    %190 = vector.shape_cast %188 : vector<256xf32> to vector<1x1x256xf32>
    %191 = vector.broadcast %190 : vector<1x1x256xf32> to vector<2x8x256xf32>
    %192 = arith.mulf %191, %189 : vector<2x8x256xf32>
    %193 = arith.addf %186, %192 : vector<2x8x256xf32>
    %c1_101 = arith.constant 1 : index
    %c5_102 = arith.constant 5 : index
    %c1_103 = arith.constant 1 : index
    %c0_104 = arith.constant 0 : index
    %194 = vector.load %arg2[%c1_101, %c5_102, %c1_103, %c0_104] : memref<2x7x4x256xf32, #tpu.memory_space<vmem>>, vector<1x1x1x256xf32>
    %195 = vector.shape_cast %194 : vector<1x1x1x256xf32> to vector<256xf32>
    %196 = vector.extract_strided_slice %116 {offsets = [0, 5, 0], sizes = [2, 8, 256], strides = [1, 1, 1]} : vector<2x14x256xf32> to vector<2x8x256xf32>
    %197 = vector.shape_cast %195 : vector<256xf32> to vector<1x1x256xf32>
    %198 = vector.broadcast %197 : vector<1x1x256xf32> to vector<2x8x256xf32>
    %199 = arith.mulf %198, %196 : vector<2x8x256xf32>
    %200 = arith.addf %193, %199 : vector<2x8x256xf32>
    %c0_105 = arith.constant 0 : index
    %c6_106 = arith.constant 6 : index
    %c1_107 = arith.constant 1 : index
    %c0_108 = arith.constant 0 : index
    %201 = vector.load %arg2[%c0_105, %c6_106, %c1_107, %c0_108] : memref<2x7x4x256xf32, #tpu.memory_space<vmem>>, vector<1x1x1x256xf32>
    %202 = vector.shape_cast %201 : vector<1x1x1x256xf32> to vector<256xf32>
    %203 = vector.extract_strided_slice %114 {offsets = [0, 6, 0], sizes = [2, 8, 256], strides = [1, 1, 1]} : vector<2x14x256xf32> to vector<2x8x256xf32>
    %204 = vector.shape_cast %202 : vector<256xf32> to vector<1x1x256xf32>
    %205 = vector.broadcast %204 : vector<1x1x256xf32> to vector<2x8x256xf32>
    %206 = arith.mulf %205, %203 : vector<2x8x256xf32>
    %207 = arith.addf %200, %206 : vector<2x8x256xf32>
    %c1_109 = arith.constant 1 : index
    %c6_110 = arith.constant 6 : index
    %c1_111 = arith.constant 1 : index
    %c0_112 = arith.constant 0 : index
    %208 = vector.load %arg2[%c1_109, %c6_110, %c1_111, %c0_112] : memref<2x7x4x256xf32, #tpu.memory_space<vmem>>, vector<1x1x1x256xf32>
    %209 = vector.shape_cast %208 : vector<1x1x1x256xf32> to vector<256xf32>
    %210 = vector.extract_strided_slice %116 {offsets = [0, 6, 0], sizes = [2, 8, 256], strides = [1, 1, 1]} : vector<2x14x256xf32> to vector<2x8x256xf32>
    %211 = vector.shape_cast %209 : vector<256xf32> to vector<1x1x256xf32>
    %212 = vector.broadcast %211 : vector<1x1x256xf32> to vector<2x8x256xf32>
    %213 = arith.mulf %212, %210 : vector<2x8x256xf32>
    %214 = arith.addf %207, %213 : vector<2x8x256xf32>
    %cst_113 = arith.constant 0.000000e+00 : f32
    %215 = vector.broadcast %cst_113 : f32 to vector<2x14x2xf32>
    %216 = vector.extract_strided_slice %6 {offsets = [0, 0, 2], sizes = [2, 14, 254], strides = [1, 1, 1]} : vector<2x14x256xf32> to vector<2x14x254xf32>
    %217 = tpu.concatenate %216, %215 in 2 : vector<2x14x254xf32>, vector<2x14x2xf32> -> vector<2x14x256xf32>
    %218 = vector.extract_strided_slice %10 {offsets = [0, 0, 2], sizes = [2, 14, 254], strides = [1, 1, 1]} : vector<2x14x256xf32> to vector<2x14x254xf32>
    %219 = tpu.concatenate %218, %215 in 2 : vector<2x14x254xf32>, vector<2x14x2xf32> -> vector<2x14x256xf32>
    %c0_114 = arith.constant 0 : index
    %c0_115 = arith.constant 0 : index
    %c2_116 = arith.constant 2 : index
    %c0_117 = arith.constant 0 : index
    %220 = vector.load %arg2[%c0_114, %c0_115, %c2_116, %c0_117] : memref<2x7x4x256xf32, #tpu.memory_space<vmem>>, vector<1x1x1x256xf32>
    %221 = vector.shape_cast %220 : vector<1x1x1x256xf32> to vector<256xf32>
    %222 = vector.extract_strided_slice %217 {offsets = [0, 0, 0], sizes = [2, 8, 256], strides = [1, 1, 1]} : vector<2x14x256xf32> to vector<2x8x256xf32>
    %223 = vector.shape_cast %221 : vector<256xf32> to vector<1x1x256xf32>
    %224 = vector.broadcast %223 : vector<1x1x256xf32> to vector<2x8x256xf32>
    %225 = arith.mulf %224, %222 : vector<2x8x256xf32>
    %226 = arith.addf %214, %225 : vector<2x8x256xf32>
    %c1_118 = arith.constant 1 : index
    %c0_119 = arith.constant 0 : index
    %c2_120 = arith.constant 2 : index
    %c0_121 = arith.constant 0 : index
    %227 = vector.load %arg2[%c1_118, %c0_119, %c2_120, %c0_121] : memref<2x7x4x256xf32, #tpu.memory_space<vmem>>, vector<1x1x1x256xf32>
    %228 = vector.shape_cast %227 : vector<1x1x1x256xf32> to vector<256xf32>
    %229 = vector.extract_strided_slice %219 {offsets = [0, 0, 0], sizes = [2, 8, 256], strides = [1, 1, 1]} : vector<2x14x256xf32> to vector<2x8x256xf32>
    %230 = vector.shape_cast %228 : vector<256xf32> to vector<1x1x256xf32>
    %231 = vector.broadcast %230 : vector<1x1x256xf32> to vector<2x8x256xf32>
    %232 = arith.mulf %231, %229 : vector<2x8x256xf32>
    %233 = arith.addf %226, %232 : vector<2x8x256xf32>
    %c0_122 = arith.constant 0 : index
    %c1_123 = arith.constant 1 : index
    %c2_124 = arith.constant 2 : index
    %c0_125 = arith.constant 0 : index
    %234 = vector.load %arg2[%c0_122, %c1_123, %c2_124, %c0_125] : memref<2x7x4x256xf32, #tpu.memory_space<vmem>>, vector<1x1x1x256xf32>
    %235 = vector.shape_cast %234 : vector<1x1x1x256xf32> to vector<256xf32>
    %236 = vector.extract_strided_slice %217 {offsets = [0, 1, 0], sizes = [2, 8, 256], strides = [1, 1, 1]} : vector<2x14x256xf32> to vector<2x8x256xf32>
    %237 = vector.shape_cast %235 : vector<256xf32> to vector<1x1x256xf32>
    %238 = vector.broadcast %237 : vector<1x1x256xf32> to vector<2x8x256xf32>
    %239 = arith.mulf %238, %236 : vector<2x8x256xf32>
    %240 = arith.addf %233, %239 : vector<2x8x256xf32>
    %c1_126 = arith.constant 1 : index
    %c1_127 = arith.constant 1 : index
    %c2_128 = arith.constant 2 : index
    %c0_129 = arith.constant 0 : index
    %241 = vector.load %arg2[%c1_126, %c1_127, %c2_128, %c0_129] : memref<2x7x4x256xf32, #tpu.memory_space<vmem>>, vector<1x1x1x256xf32>
    %242 = vector.shape_cast %241 : vector<1x1x1x256xf32> to vector<256xf32>
    %243 = vector.extract_strided_slice %219 {offsets = [0, 1, 0], sizes = [2, 8, 256], strides = [1, 1, 1]} : vector<2x14x256xf32> to vector<2x8x256xf32>
    %244 = vector.shape_cast %242 : vector<256xf32> to vector<1x1x256xf32>
    %245 = vector.broadcast %244 : vector<1x1x256xf32> to vector<2x8x256xf32>
    %246 = arith.mulf %245, %243 : vector<2x8x256xf32>
    %247 = arith.addf %240, %246 : vector<2x8x256xf32>
    %c0_130 = arith.constant 0 : index
    %c2_131 = arith.constant 2 : index
    %c2_132 = arith.constant 2 : index
    %c0_133 = arith.constant 0 : index
    %248 = vector.load %arg2[%c0_130, %c2_131, %c2_132, %c0_133] : memref<2x7x4x256xf32, #tpu.memory_space<vmem>>, vector<1x1x1x256xf32>
    %249 = vector.shape_cast %248 : vector<1x1x1x256xf32> to vector<256xf32>
    %250 = vector.extract_strided_slice %217 {offsets = [0, 2, 0], sizes = [2, 8, 256], strides = [1, 1, 1]} : vector<2x14x256xf32> to vector<2x8x256xf32>
    %251 = vector.shape_cast %249 : vector<256xf32> to vector<1x1x256xf32>
    %252 = vector.broadcast %251 : vector<1x1x256xf32> to vector<2x8x256xf32>
    %253 = arith.mulf %252, %250 : vector<2x8x256xf32>
    %254 = arith.addf %247, %253 : vector<2x8x256xf32>
    %c1_134 = arith.constant 1 : index
    %c2_135 = arith.constant 2 : index
    %c2_136 = arith.constant 2 : index
    %c0_137 = arith.constant 0 : index
    %255 = vector.load %arg2[%c1_134, %c2_135, %c2_136, %c0_137] : memref<2x7x4x256xf32, #tpu.memory_space<vmem>>, vector<1x1x1x256xf32>
    %256 = vector.shape_cast %255 : vector<1x1x1x256xf32> to vector<256xf32>
    %257 = vector.extract_strided_slice %219 {offsets = [0, 2, 0], sizes = [2, 8, 256], strides = [1, 1, 1]} : vector<2x14x256xf32> to vector<2x8x256xf32>
    %258 = vector.shape_cast %256 : vector<256xf32> to vector<1x1x256xf32>
    %259 = vector.broadcast %258 : vector<1x1x256xf32> to vector<2x8x256xf32>
    %260 = arith.mulf %259, %257 : vector<2x8x256xf32>
    %261 = arith.addf %254, %260 : vector<2x8x256xf32>
    %c0_138 = arith.constant 0 : index
    %c3_139 = arith.constant 3 : index
    %c2_140 = arith.constant 2 : index
    %c0_141 = arith.constant 0 : index
    %262 = vector.load %arg2[%c0_138, %c3_139, %c2_140, %c0_141] : memref<2x7x4x256xf32, #tpu.memory_space<vmem>>, vector<1x1x1x256xf32>
    %263 = vector.shape_cast %262 : vector<1x1x1x256xf32> to vector<256xf32>
    %264 = vector.extract_strided_slice %217 {offsets = [0, 3, 0], sizes = [2, 8, 256], strides = [1, 1, 1]} : vector<2x14x256xf32> to vector<2x8x256xf32>
    %265 = vector.shape_cast %263 : vector<256xf32> to vector<1x1x256xf32>
    %266 = vector.broadcast %265 : vector<1x1x256xf32> to vector<2x8x256xf32>
    %267 = arith.mulf %266, %264 : vector<2x8x256xf32>
    %268 = arith.addf %261, %267 : vector<2x8x256xf32>
    %c1_142 = arith.constant 1 : index
    %c3_143 = arith.constant 3 : index
    %c2_144 = arith.constant 2 : index
    %c0_145 = arith.constant 0 : index
    %269 = vector.load %arg2[%c1_142, %c3_143, %c2_144, %c0_145] : memref<2x7x4x256xf32, #tpu.memory_space<vmem>>, vector<1x1x1x256xf32>
    %270 = vector.shape_cast %269 : vector<1x1x1x256xf32> to vector<256xf32>
    %271 = vector.extract_strided_slice %219 {offsets = [0, 3, 0], sizes = [2, 8, 256], strides = [1, 1, 1]} : vector<2x14x256xf32> to vector<2x8x256xf32>
    %272 = vector.shape_cast %270 : vector<256xf32> to vector<1x1x256xf32>
    %273 = vector.broadcast %272 : vector<1x1x256xf32> to vector<2x8x256xf32>
    %274 = arith.mulf %273, %271 : vector<2x8x256xf32>
    %275 = arith.addf %268, %274 : vector<2x8x256xf32>
    %c0_146 = arith.constant 0 : index
    %c4_147 = arith.constant 4 : index
    %c2_148 = arith.constant 2 : index
    %c0_149 = arith.constant 0 : index
    %276 = vector.load %arg2[%c0_146, %c4_147, %c2_148, %c0_149] : memref<2x7x4x256xf32, #tpu.memory_space<vmem>>, vector<1x1x1x256xf32>
    %277 = vector.shape_cast %276 : vector<1x1x1x256xf32> to vector<256xf32>
    %278 = vector.extract_strided_slice %217 {offsets = [0, 4, 0], sizes = [2, 8, 256], strides = [1, 1, 1]} : vector<2x14x256xf32> to vector<2x8x256xf32>
    %279 = vector.shape_cast %277 : vector<256xf32> to vector<1x1x256xf32>
    %280 = vector.broadcast %279 : vector<1x1x256xf32> to vector<2x8x256xf32>
    %281 = arith.mulf %280, %278 : vector<2x8x256xf32>
    %282 = arith.addf %275, %281 : vector<2x8x256xf32>
    %c1_150 = arith.constant 1 : index
    %c4_151 = arith.constant 4 : index
    %c2_152 = arith.constant 2 : index
    %c0_153 = arith.constant 0 : index
    %283 = vector.load %arg2[%c1_150, %c4_151, %c2_152, %c0_153] : memref<2x7x4x256xf32, #tpu.memory_space<vmem>>, vector<1x1x1x256xf32>
    %284 = vector.shape_cast %283 : vector<1x1x1x256xf32> to vector<256xf32>
    %285 = vector.extract_strided_slice %219 {offsets = [0, 4, 0], sizes = [2, 8, 256], strides = [1, 1, 1]} : vector<2x14x256xf32> to vector<2x8x256xf32>
    %286 = vector.shape_cast %284 : vector<256xf32> to vector<1x1x256xf32>
    %287 = vector.broadcast %286 : vector<1x1x256xf32> to vector<2x8x256xf32>
    %288 = arith.mulf %287, %285 : vector<2x8x256xf32>
    %289 = arith.addf %282, %288 : vector<2x8x256xf32>
    %c0_154 = arith.constant 0 : index
    %c5_155 = arith.constant 5 : index
    %c2_156 = arith.constant 2 : index
    %c0_157 = arith.constant 0 : index
    %290 = vector.load %arg2[%c0_154, %c5_155, %c2_156, %c0_157] : memref<2x7x4x256xf32, #tpu.memory_space<vmem>>, vector<1x1x1x256xf32>
    %291 = vector.shape_cast %290 : vector<1x1x1x256xf32> to vector<256xf32>
    %292 = vector.extract_strided_slice %217 {offsets = [0, 5, 0], sizes = [2, 8, 256], strides = [1, 1, 1]} : vector<2x14x256xf32> to vector<2x8x256xf32>
    %293 = vector.shape_cast %291 : vector<256xf32> to vector<1x1x256xf32>
    %294 = vector.broadcast %293 : vector<1x1x256xf32> to vector<2x8x256xf32>
    %295 = arith.mulf %294, %292 : vector<2x8x256xf32>
    %296 = arith.addf %289, %295 : vector<2x8x256xf32>
    %c1_158 = arith.constant 1 : index
    %c5_159 = arith.constant 5 : index
    %c2_160 = arith.constant 2 : index
    %c0_161 = arith.constant 0 : index
    %297 = vector.load %arg2[%c1_158, %c5_159, %c2_160, %c0_161] : memref<2x7x4x256xf32, #tpu.memory_space<vmem>>, vector<1x1x1x256xf32>
    %298 = vector.shape_cast %297 : vector<1x1x1x256xf32> to vector<256xf32>
    %299 = vector.extract_strided_slice %219 {offsets = [0, 5, 0], sizes = [2, 8, 256], strides = [1, 1, 1]} : vector<2x14x256xf32> to vector<2x8x256xf32>
    %300 = vector.shape_cast %298 : vector<256xf32> to vector<1x1x256xf32>
    %301 = vector.broadcast %300 : vector<1x1x256xf32> to vector<2x8x256xf32>
    %302 = arith.mulf %301, %299 : vector<2x8x256xf32>
    %303 = arith.addf %296, %302 : vector<2x8x256xf32>
    %c0_162 = arith.constant 0 : index
    %c6_163 = arith.constant 6 : index
    %c2_164 = arith.constant 2 : index
    %c0_165 = arith.constant 0 : index
    %304 = vector.load %arg2[%c0_162, %c6_163, %c2_164, %c0_165] : memref<2x7x4x256xf32, #tpu.memory_space<vmem>>, vector<1x1x1x256xf32>
    %305 = vector.shape_cast %304 : vector<1x1x1x256xf32> to vector<256xf32>
    %306 = vector.extract_strided_slice %217 {offsets = [0, 6, 0], sizes = [2, 8, 256], strides = [1, 1, 1]} : vector<2x14x256xf32> to vector<2x8x256xf32>
    %307 = vector.shape_cast %305 : vector<256xf32> to vector<1x1x256xf32>
    %308 = vector.broadcast %307 : vector<1x1x256xf32> to vector<2x8x256xf32>
    %309 = arith.mulf %308, %306 : vector<2x8x256xf32>
    %310 = arith.addf %303, %309 : vector<2x8x256xf32>
    %c1_166 = arith.constant 1 : index
    %c6_167 = arith.constant 6 : index
    %c2_168 = arith.constant 2 : index
    %c0_169 = arith.constant 0 : index
    %311 = vector.load %arg2[%c1_166, %c6_167, %c2_168, %c0_169] : memref<2x7x4x256xf32, #tpu.memory_space<vmem>>, vector<1x1x1x256xf32>
    %312 = vector.shape_cast %311 : vector<1x1x1x256xf32> to vector<256xf32>
    %313 = vector.extract_strided_slice %219 {offsets = [0, 6, 0], sizes = [2, 8, 256], strides = [1, 1, 1]} : vector<2x14x256xf32> to vector<2x8x256xf32>
    %314 = vector.shape_cast %312 : vector<256xf32> to vector<1x1x256xf32>
    %315 = vector.broadcast %314 : vector<1x1x256xf32> to vector<2x8x256xf32>
    %316 = arith.mulf %315, %313 : vector<2x8x256xf32>
    %317 = arith.addf %310, %316 : vector<2x8x256xf32>
    %cst_170 = arith.constant 0.000000e+00 : f32
    %318 = vector.broadcast %cst_170 : f32 to vector<2x14x3xf32>
    %319 = vector.extract_strided_slice %6 {offsets = [0, 0, 3], sizes = [2, 14, 253], strides = [1, 1, 1]} : vector<2x14x256xf32> to vector<2x14x253xf32>
    %320 = tpu.concatenate %319, %318 in 2 : vector<2x14x253xf32>, vector<2x14x3xf32> -> vector<2x14x256xf32>
    %321 = vector.extract_strided_slice %10 {offsets = [0, 0, 3], sizes = [2, 14, 253], strides = [1, 1, 1]} : vector<2x14x256xf32> to vector<2x14x253xf32>
    %322 = tpu.concatenate %321, %318 in 2 : vector<2x14x253xf32>, vector<2x14x3xf32> -> vector<2x14x256xf32>
    %c0_171 = arith.constant 0 : index
    %c0_172 = arith.constant 0 : index
    %c3_173 = arith.constant 3 : index
    %c0_174 = arith.constant 0 : index
    %323 = vector.load %arg2[%c0_171, %c0_172, %c3_173, %c0_174] : memref<2x7x4x256xf32, #tpu.memory_space<vmem>>, vector<1x1x1x256xf32>
    %324 = vector.shape_cast %323 : vector<1x1x1x256xf32> to vector<256xf32>
    %325 = vector.extract_strided_slice %320 {offsets = [0, 0, 0], sizes = [2, 8, 256], strides = [1, 1, 1]} : vector<2x14x256xf32> to vector<2x8x256xf32>
    %326 = vector.shape_cast %324 : vector<256xf32> to vector<1x1x256xf32>
    %327 = vector.broadcast %326 : vector<1x1x256xf32> to vector<2x8x256xf32>
    %328 = arith.mulf %327, %325 : vector<2x8x256xf32>
    %329 = arith.addf %317, %328 : vector<2x8x256xf32>
    %c1_175 = arith.constant 1 : index
    %c0_176 = arith.constant 0 : index
    %c3_177 = arith.constant 3 : index
    %c0_178 = arith.constant 0 : index
    %330 = vector.load %arg2[%c1_175, %c0_176, %c3_177, %c0_178] : memref<2x7x4x256xf32, #tpu.memory_space<vmem>>, vector<1x1x1x256xf32>
    %331 = vector.shape_cast %330 : vector<1x1x1x256xf32> to vector<256xf32>
    %332 = vector.extract_strided_slice %322 {offsets = [0, 0, 0], sizes = [2, 8, 256], strides = [1, 1, 1]} : vector<2x14x256xf32> to vector<2x8x256xf32>
    %333 = vector.shape_cast %331 : vector<256xf32> to vector<1x1x256xf32>
    %334 = vector.broadcast %333 : vector<1x1x256xf32> to vector<2x8x256xf32>
    %335 = arith.mulf %334, %332 : vector<2x8x256xf32>
    %336 = arith.addf %329, %335 : vector<2x8x256xf32>
    %c0_179 = arith.constant 0 : index
    %c1_180 = arith.constant 1 : index
    %c3_181 = arith.constant 3 : index
    %c0_182 = arith.constant 0 : index
    %337 = vector.load %arg2[%c0_179, %c1_180, %c3_181, %c0_182] : memref<2x7x4x256xf32, #tpu.memory_space<vmem>>, vector<1x1x1x256xf32>
    %338 = vector.shape_cast %337 : vector<1x1x1x256xf32> to vector<256xf32>
    %339 = vector.extract_strided_slice %320 {offsets = [0, 1, 0], sizes = [2, 8, 256], strides = [1, 1, 1]} : vector<2x14x256xf32> to vector<2x8x256xf32>
    %340 = vector.shape_cast %338 : vector<256xf32> to vector<1x1x256xf32>
    %341 = vector.broadcast %340 : vector<1x1x256xf32> to vector<2x8x256xf32>
    %342 = arith.mulf %341, %339 : vector<2x8x256xf32>
    %343 = arith.addf %336, %342 : vector<2x8x256xf32>
    %c1_183 = arith.constant 1 : index
    %c1_184 = arith.constant 1 : index
    %c3_185 = arith.constant 3 : index
    %c0_186 = arith.constant 0 : index
    %344 = vector.load %arg2[%c1_183, %c1_184, %c3_185, %c0_186] : memref<2x7x4x256xf32, #tpu.memory_space<vmem>>, vector<1x1x1x256xf32>
    %345 = vector.shape_cast %344 : vector<1x1x1x256xf32> to vector<256xf32>
    %346 = vector.extract_strided_slice %322 {offsets = [0, 1, 0], sizes = [2, 8, 256], strides = [1, 1, 1]} : vector<2x14x256xf32> to vector<2x8x256xf32>
    %347 = vector.shape_cast %345 : vector<256xf32> to vector<1x1x256xf32>
    %348 = vector.broadcast %347 : vector<1x1x256xf32> to vector<2x8x256xf32>
    %349 = arith.mulf %348, %346 : vector<2x8x256xf32>
    %350 = arith.addf %343, %349 : vector<2x8x256xf32>
    %c0_187 = arith.constant 0 : index
    %c2_188 = arith.constant 2 : index
    %c3_189 = arith.constant 3 : index
    %c0_190 = arith.constant 0 : index
    %351 = vector.load %arg2[%c0_187, %c2_188, %c3_189, %c0_190] : memref<2x7x4x256xf32, #tpu.memory_space<vmem>>, vector<1x1x1x256xf32>
    %352 = vector.shape_cast %351 : vector<1x1x1x256xf32> to vector<256xf32>
    %353 = vector.extract_strided_slice %320 {offsets = [0, 2, 0], sizes = [2, 8, 256], strides = [1, 1, 1]} : vector<2x14x256xf32> to vector<2x8x256xf32>
    %354 = vector.shape_cast %352 : vector<256xf32> to vector<1x1x256xf32>
    %355 = vector.broadcast %354 : vector<1x1x256xf32> to vector<2x8x256xf32>
    %356 = arith.mulf %355, %353 : vector<2x8x256xf32>
    %357 = arith.addf %350, %356 : vector<2x8x256xf32>
    %c1_191 = arith.constant 1 : index
    %c2_192 = arith.constant 2 : index
    %c3_193 = arith.constant 3 : index
    %c0_194 = arith.constant 0 : index
    %358 = vector.load %arg2[%c1_191, %c2_192, %c3_193, %c0_194] : memref<2x7x4x256xf32, #tpu.memory_space<vmem>>, vector<1x1x1x256xf32>
    %359 = vector.shape_cast %358 : vector<1x1x1x256xf32> to vector<256xf32>
    %360 = vector.extract_strided_slice %322 {offsets = [0, 2, 0], sizes = [2, 8, 256], strides = [1, 1, 1]} : vector<2x14x256xf32> to vector<2x8x256xf32>
    %361 = vector.shape_cast %359 : vector<256xf32> to vector<1x1x256xf32>
    %362 = vector.broadcast %361 : vector<1x1x256xf32> to vector<2x8x256xf32>
    %363 = arith.mulf %362, %360 : vector<2x8x256xf32>
    %364 = arith.addf %357, %363 : vector<2x8x256xf32>
    %c0_195 = arith.constant 0 : index
    %c3_196 = arith.constant 3 : index
    %c3_197 = arith.constant 3 : index
    %c0_198 = arith.constant 0 : index
    %365 = vector.load %arg2[%c0_195, %c3_196, %c3_197, %c0_198] : memref<2x7x4x256xf32, #tpu.memory_space<vmem>>, vector<1x1x1x256xf32>
    %366 = vector.shape_cast %365 : vector<1x1x1x256xf32> to vector<256xf32>
    %367 = vector.extract_strided_slice %320 {offsets = [0, 3, 0], sizes = [2, 8, 256], strides = [1, 1, 1]} : vector<2x14x256xf32> to vector<2x8x256xf32>
    %368 = vector.shape_cast %366 : vector<256xf32> to vector<1x1x256xf32>
    %369 = vector.broadcast %368 : vector<1x1x256xf32> to vector<2x8x256xf32>
    %370 = arith.mulf %369, %367 : vector<2x8x256xf32>
    %371 = arith.addf %364, %370 : vector<2x8x256xf32>
    %c1_199 = arith.constant 1 : index
    %c3_200 = arith.constant 3 : index
    %c3_201 = arith.constant 3 : index
    %c0_202 = arith.constant 0 : index
    %372 = vector.load %arg2[%c1_199, %c3_200, %c3_201, %c0_202] : memref<2x7x4x256xf32, #tpu.memory_space<vmem>>, vector<1x1x1x256xf32>
    %373 = vector.shape_cast %372 : vector<1x1x1x256xf32> to vector<256xf32>
    %374 = vector.extract_strided_slice %322 {offsets = [0, 3, 0], sizes = [2, 8, 256], strides = [1, 1, 1]} : vector<2x14x256xf32> to vector<2x8x256xf32>
    %375 = vector.shape_cast %373 : vector<256xf32> to vector<1x1x256xf32>
    %376 = vector.broadcast %375 : vector<1x1x256xf32> to vector<2x8x256xf32>
    %377 = arith.mulf %376, %374 : vector<2x8x256xf32>
    %378 = arith.addf %371, %377 : vector<2x8x256xf32>
    %c0_203 = arith.constant 0 : index
    %c4_204 = arith.constant 4 : index
    %c3_205 = arith.constant 3 : index
    %c0_206 = arith.constant 0 : index
    %379 = vector.load %arg2[%c0_203, %c4_204, %c3_205, %c0_206] : memref<2x7x4x256xf32, #tpu.memory_space<vmem>>, vector<1x1x1x256xf32>
    %380 = vector.shape_cast %379 : vector<1x1x1x256xf32> to vector<256xf32>
    %381 = vector.extract_strided_slice %320 {offsets = [0, 4, 0], sizes = [2, 8, 256], strides = [1, 1, 1]} : vector<2x14x256xf32> to vector<2x8x256xf32>
    %382 = vector.shape_cast %380 : vector<256xf32> to vector<1x1x256xf32>
    %383 = vector.broadcast %382 : vector<1x1x256xf32> to vector<2x8x256xf32>
    %384 = arith.mulf %383, %381 : vector<2x8x256xf32>
    %385 = arith.addf %378, %384 : vector<2x8x256xf32>
    %c1_207 = arith.constant 1 : index
    %c4_208 = arith.constant 4 : index
    %c3_209 = arith.constant 3 : index
    %c0_210 = arith.constant 0 : index
    %386 = vector.load %arg2[%c1_207, %c4_208, %c3_209, %c0_210] : memref<2x7x4x256xf32, #tpu.memory_space<vmem>>, vector<1x1x1x256xf32>
    %387 = vector.shape_cast %386 : vector<1x1x1x256xf32> to vector<256xf32>
    %388 = vector.extract_strided_slice %322 {offsets = [0, 4, 0], sizes = [2, 8, 256], strides = [1, 1, 1]} : vector<2x14x256xf32> to vector<2x8x256xf32>
    %389 = vector.shape_cast %387 : vector<256xf32> to vector<1x1x256xf32>
    %390 = vector.broadcast %389 : vector<1x1x256xf32> to vector<2x8x256xf32>
    %391 = arith.mulf %390, %388 : vector<2x8x256xf32>
    %392 = arith.addf %385, %391 : vector<2x8x256xf32>
    %c0_211 = arith.constant 0 : index
    %c5_212 = arith.constant 5 : index
    %c3_213 = arith.constant 3 : index
    %c0_214 = arith.constant 0 : index
    %393 = vector.load %arg2[%c0_211, %c5_212, %c3_213, %c0_214] : memref<2x7x4x256xf32, #tpu.memory_space<vmem>>, vector<1x1x1x256xf32>
    %394 = vector.shape_cast %393 : vector<1x1x1x256xf32> to vector<256xf32>
    %395 = vector.extract_strided_slice %320 {offsets = [0, 5, 0], sizes = [2, 8, 256], strides = [1, 1, 1]} : vector<2x14x256xf32> to vector<2x8x256xf32>
    %396 = vector.shape_cast %394 : vector<256xf32> to vector<1x1x256xf32>
    %397 = vector.broadcast %396 : vector<1x1x256xf32> to vector<2x8x256xf32>
    %398 = arith.mulf %397, %395 : vector<2x8x256xf32>
    %399 = arith.addf %392, %398 : vector<2x8x256xf32>
    %c1_215 = arith.constant 1 : index
    %c5_216 = arith.constant 5 : index
    %c3_217 = arith.constant 3 : index
    %c0_218 = arith.constant 0 : index
    %400 = vector.load %arg2[%c1_215, %c5_216, %c3_217, %c0_218] : memref<2x7x4x256xf32, #tpu.memory_space<vmem>>, vector<1x1x1x256xf32>
    %401 = vector.shape_cast %400 : vector<1x1x1x256xf32> to vector<256xf32>
    %402 = vector.extract_strided_slice %322 {offsets = [0, 5, 0], sizes = [2, 8, 256], strides = [1, 1, 1]} : vector<2x14x256xf32> to vector<2x8x256xf32>
    %403 = vector.shape_cast %401 : vector<256xf32> to vector<1x1x256xf32>
    %404 = vector.broadcast %403 : vector<1x1x256xf32> to vector<2x8x256xf32>
    %405 = arith.mulf %404, %402 : vector<2x8x256xf32>
    %406 = arith.addf %399, %405 : vector<2x8x256xf32>
    %c0_219 = arith.constant 0 : index
    %c6_220 = arith.constant 6 : index
    %c3_221 = arith.constant 3 : index
    %c0_222 = arith.constant 0 : index
    %407 = vector.load %arg2[%c0_219, %c6_220, %c3_221, %c0_222] : memref<2x7x4x256xf32, #tpu.memory_space<vmem>>, vector<1x1x1x256xf32>
    %408 = vector.shape_cast %407 : vector<1x1x1x256xf32> to vector<256xf32>
    %409 = vector.extract_strided_slice %320 {offsets = [0, 6, 0], sizes = [2, 8, 256], strides = [1, 1, 1]} : vector<2x14x256xf32> to vector<2x8x256xf32>
    %410 = vector.shape_cast %408 : vector<256xf32> to vector<1x1x256xf32>
    %411 = vector.broadcast %410 : vector<1x1x256xf32> to vector<2x8x256xf32>
    %412 = arith.mulf %411, %409 : vector<2x8x256xf32>
    %413 = arith.addf %406, %412 : vector<2x8x256xf32>
    %c1_223 = arith.constant 1 : index
    %c6_224 = arith.constant 6 : index
    %c3_225 = arith.constant 3 : index
    %c0_226 = arith.constant 0 : index
    %414 = vector.load %arg2[%c1_223, %c6_224, %c3_225, %c0_226] : memref<2x7x4x256xf32, #tpu.memory_space<vmem>>, vector<1x1x1x256xf32>
    %415 = vector.shape_cast %414 : vector<1x1x1x256xf32> to vector<256xf32>
    %416 = vector.extract_strided_slice %322 {offsets = [0, 6, 0], sizes = [2, 8, 256], strides = [1, 1, 1]} : vector<2x14x256xf32> to vector<2x8x256xf32>
    %417 = vector.shape_cast %415 : vector<256xf32> to vector<1x1x256xf32>
    %418 = vector.broadcast %417 : vector<1x1x256xf32> to vector<2x8x256xf32>
    %419 = arith.mulf %418, %416 : vector<2x8x256xf32>
    %420 = arith.addf %413, %419 : vector<2x8x256xf32>
    %421 = tpu.iota {dimensions = array<i32: 2>} : vector<1x1x256xi32>
    %c32_i32 = arith.constant 32 : i32
    %c0_i32 = arith.constant 0 : i32
    %422 = arith.cmpi eq, %c32_i32, %c0_i32 : i32
    %c1_i32 = arith.constant 1 : i32
    %423 = arith.select %422, %c1_i32, %c32_i32 : i32
    %424 = vector.broadcast %423 : i32 to vector<1x1x256xi32>
    %425 = arith.remsi %421, %424 : vector<1x1x256xi32>
    %c0_i32_227 = arith.constant 0 : i32
    %426 = vector.broadcast %c0_i32_227 : i32 to vector<1x1x256xi32>
    %427 = arith.cmpi ne, %425, %426 : vector<1x1x256xi32>
    %c0_i32_228 = arith.constant 0 : i32
    %428 = vector.broadcast %c0_i32_228 : i32 to vector<1x1x256xi32>
    %429 = arith.cmpi slt, %425, %428 : vector<1x1x256xi32>
    %c0_i32_229 = arith.constant 0 : i32
    %430 = arith.cmpi slt, %423, %c0_i32_229 : i32
    %431 = vector.broadcast %430 : i1 to vector<1x1x256xi1>
    %432 = vector.broadcast %431 : vector<1x1x256xi1> to vector<1x1x256xi1>
    %433 = arith.xori %429, %432 : vector<1x1x256xi1>
    %434 = arith.andi %433, %427 : vector<1x1x256xi1>
    %435 = vector.broadcast %423 : i32 to vector<1x1x256xi32>
    %436 = arith.addi %425, %435 : vector<1x1x256xi32>
    %437 = arith.select %434, %436, %425 : vector<1x1x256xi1>, vector<1x1x256xi32>
    %c29_i32 = arith.constant 29 : i32
    %438 = vector.broadcast %c29_i32 : i32 to vector<1x1x256xi32>
    %439 = arith.cmpi slt, %437, %438 : vector<1x1x256xi32>
    %c192_i32 = arith.constant 192 : i32
    %440 = vector.broadcast %c192_i32 : i32 to vector<1x1x256xi32>
    %441 = arith.cmpi slt, %421, %440 : vector<1x1x256xi32>
    %442 = arith.andi %439, %441 : vector<1x1x256xi1>
    %cst_230 = arith.constant 0xFF800000 : f32
    %443 = vector.shape_cast %442 : vector<1x1x256xi1> to vector<1x1x256xi1>
    %444 = vector.broadcast %443 : vector<1x1x256xi1> to vector<2x8x256xi1>
    %445 = vector.broadcast %cst_230 : f32 to vector<2x8x256xf32>
    %446 = arith.select %444, %420, %445 : vector<2x8x256xi1>, vector<2x8x256xf32>
    %cst_231 = arith.constant dense<0xFF800000> : vector<2x256xf32>
    %447 = vector.multi_reduction <maximumf>, %446, %cst_231 [1] : vector<2x8x256xf32> to vector<2x256xf32>
    %cst_232 = arith.constant 0.000000e+00 : f32
    %448 = vector.shape_cast %442 : vector<1x1x256xi1> to vector<1x1x256xi1>
    %449 = vector.broadcast %448 : vector<1x1x256xi1> to vector<2x8x256xi1>
    %450 = vector.broadcast %cst_232 : f32 to vector<2x8x256xf32>
    %451 = arith.select %449, %420, %450 : vector<2x8x256xi1>, vector<2x8x256xf32>
    %cst_233 = arith.constant dense<0.000000e+00> : vector<2x256xf32>
    %452 = vector.multi_reduction <add>, %451, %cst_233 [1] : vector<2x8x256xf32> to vector<2x256xf32>
    %453 = vector.extract_strided_slice %447 {offsets = [0, 0], sizes = [2, 32], strides = [1, 1]} : vector<2x256xf32> to vector<2x32xf32>
    %cst_234 = arith.constant dense<0xFF800000> : vector<2xf32>
    %454 = vector.multi_reduction <maximumf>, %453, %cst_234 [1] : vector<2x32xf32> to vector<2xf32>
    %455 = vector.shape_cast %454 : vector<2xf32> to vector<2x1xf32>
    %456 = vector.extract_strided_slice %452 {offsets = [0, 0], sizes = [2, 32], strides = [1, 1]} : vector<2x256xf32> to vector<2x32xf32>
    %cst_235 = arith.constant dense<0.000000e+00> : vector<2xf32>
    %457 = vector.multi_reduction <add>, %456, %cst_235 [1] : vector<2x32xf32> to vector<2xf32>
    %458 = vector.shape_cast %457 : vector<2xf32> to vector<2x1xf32>
    %cst_236 = arith.constant 0.00431034481 : f32
    %459 = vector.broadcast %cst_236 : f32 to vector<2x1xf32>
    %460 = arith.mulf %458, %459 : vector<2x1xf32>
    %461 = vector.extract_strided_slice %447 {offsets = [0, 32], sizes = [2, 32], strides = [1, 1]} : vector<2x256xf32> to vector<2x32xf32>
    %cst_237 = arith.constant dense<0xFF800000> : vector<2xf32>
    %462 = vector.multi_reduction <maximumf>, %461, %cst_237 [1] : vector<2x32xf32> to vector<2xf32>
    %463 = vector.shape_cast %462 : vector<2xf32> to vector<2x1xf32>
    %464 = vector.extract_strided_slice %452 {offsets = [0, 32], sizes = [2, 32], strides = [1, 1]} : vector<2x256xf32> to vector<2x32xf32>
    %cst_238 = arith.constant dense<0.000000e+00> : vector<2xf32>
    %465 = vector.multi_reduction <add>, %464, %cst_238 [1] : vector<2x32xf32> to vector<2xf32>
    %466 = vector.shape_cast %465 : vector<2xf32> to vector<2x1xf32>
    %cst_239 = arith.constant 0.00431034481 : f32
    %467 = vector.broadcast %cst_239 : f32 to vector<2x1xf32>
    %468 = arith.mulf %466, %467 : vector<2x1xf32>
    %469 = vector.extract_strided_slice %447 {offsets = [0, 64], sizes = [2, 32], strides = [1, 1]} : vector<2x256xf32> to vector<2x32xf32>
    %cst_240 = arith.constant dense<0xFF800000> : vector<2xf32>
    %470 = vector.multi_reduction <maximumf>, %469, %cst_240 [1] : vector<2x32xf32> to vector<2xf32>
    %471 = vector.shape_cast %470 : vector<2xf32> to vector<2x1xf32>
    %472 = vector.extract_strided_slice %452 {offsets = [0, 64], sizes = [2, 32], strides = [1, 1]} : vector<2x256xf32> to vector<2x32xf32>
    %cst_241 = arith.constant dense<0.000000e+00> : vector<2xf32>
    %473 = vector.multi_reduction <add>, %472, %cst_241 [1] : vector<2x32xf32> to vector<2xf32>
    %474 = vector.shape_cast %473 : vector<2xf32> to vector<2x1xf32>
    %cst_242 = arith.constant 0.00431034481 : f32
    %475 = vector.broadcast %cst_242 : f32 to vector<2x1xf32>
    %476 = arith.mulf %474, %475 : vector<2x1xf32>
    %477 = vector.extract_strided_slice %447 {offsets = [0, 96], sizes = [2, 32], strides = [1, 1]} : vector<2x256xf32> to vector<2x32xf32>
    %cst_243 = arith.constant dense<0xFF800000> : vector<2xf32>
    %478 = vector.multi_reduction <maximumf>, %477, %cst_243 [1] : vector<2x32xf32> to vector<2xf32>
    %479 = vector.shape_cast %478 : vector<2xf32> to vector<2x1xf32>
    %480 = vector.extract_strided_slice %452 {offsets = [0, 96], sizes = [2, 32], strides = [1, 1]} : vector<2x256xf32> to vector<2x32xf32>
    %cst_244 = arith.constant dense<0.000000e+00> : vector<2xf32>
    %481 = vector.multi_reduction <add>, %480, %cst_244 [1] : vector<2x32xf32> to vector<2xf32>
    %482 = vector.shape_cast %481 : vector<2xf32> to vector<2x1xf32>
    %cst_245 = arith.constant 0.00431034481 : f32
    %483 = vector.broadcast %cst_245 : f32 to vector<2x1xf32>
    %484 = arith.mulf %482, %483 : vector<2x1xf32>
    %485 = vector.extract_strided_slice %447 {offsets = [0, 128], sizes = [2, 32], strides = [1, 1]} : vector<2x256xf32> to vector<2x32xf32>
    %cst_246 = arith.constant dense<0xFF800000> : vector<2xf32>
    %486 = vector.multi_reduction <maximumf>, %485, %cst_246 [1] : vector<2x32xf32> to vector<2xf32>
    %487 = vector.shape_cast %486 : vector<2xf32> to vector<2x1xf32>
    %488 = vector.extract_strided_slice %452 {offsets = [0, 128], sizes = [2, 32], strides = [1, 1]} : vector<2x256xf32> to vector<2x32xf32>
    %cst_247 = arith.constant dense<0.000000e+00> : vector<2xf32>
    %489 = vector.multi_reduction <add>, %488, %cst_247 [1] : vector<2x32xf32> to vector<2xf32>
    %490 = vector.shape_cast %489 : vector<2xf32> to vector<2x1xf32>
    %cst_248 = arith.constant 0.00431034481 : f32
    %491 = vector.broadcast %cst_248 : f32 to vector<2x1xf32>
    %492 = arith.mulf %490, %491 : vector<2x1xf32>
    %493 = vector.extract_strided_slice %447 {offsets = [0, 160], sizes = [2, 32], strides = [1, 1]} : vector<2x256xf32> to vector<2x32xf32>
    %cst_249 = arith.constant dense<0xFF800000> : vector<2xf32>
    %494 = vector.multi_reduction <maximumf>, %493, %cst_249 [1] : vector<2x32xf32> to vector<2xf32>
    %495 = vector.shape_cast %494 : vector<2xf32> to vector<2x1xf32>
    %496 = vector.extract_strided_slice %452 {offsets = [0, 160], sizes = [2, 32], strides = [1, 1]} : vector<2x256xf32> to vector<2x32xf32>
    %cst_250 = arith.constant dense<0.000000e+00> : vector<2xf32>
    %497 = vector.multi_reduction <add>, %496, %cst_250 [1] : vector<2x32xf32> to vector<2xf32>
    %498 = vector.shape_cast %497 : vector<2xf32> to vector<2x1xf32>
    %cst_251 = arith.constant 0.00431034481 : f32
    %499 = vector.broadcast %cst_251 : f32 to vector<2x1xf32>
    %500 = arith.mulf %498, %499 : vector<2x1xf32>
    %501 = tpu.concatenate %455, %463, %471, %479, %487, %495 in 1 : vector<2x1xf32>, vector<2x1xf32>, vector<2x1xf32>, vector<2x1xf32>, vector<2x1xf32>, vector<2x1xf32> -> vector<2x6xf32>
    %502 = tpu.concatenate %460, %468, %476, %484, %492, %500 in 1 : vector<2x1xf32>, vector<2x1xf32>, vector<2x1xf32>, vector<2x1xf32>, vector<2x1xf32>, vector<2x1xf32> -> vector<2x6xf32>
    %c0_252 = arith.constant 0 : index
    %c0_253 = arith.constant 0 : index
    %503 = vector.load %arg4[%c0_252, %c0_253] : memref<2x6xf32, #tpu.memory_space<vmem>>, vector<2x6xf32>
    %c0_254 = arith.constant 0 : index
    %c0_255 = arith.constant 0 : index
    %504 = vector.load %arg5[%c0_254, %c0_255] : memref<6x2xf32, #tpu.memory_space<vmem>>, vector<6x2xf32>
    %505 = vector.shape_cast %501 : vector<2x6xf32> to vector<2x1x6xf32>
    %506 = vector.shape_cast %503 : vector<2x6xf32> to vector<1x2x6xf32>
    %507 = vector.broadcast %505 : vector<2x1x6xf32> to vector<2x2x6xf32>
    %508 = vector.broadcast %506 : vector<1x2x6xf32> to vector<2x2x6xf32>
    %509 = arith.mulf %507, %508 : vector<2x2x6xf32>
    %cst_256 = arith.constant dense<0.000000e+00> : vector<2x2xf32>
    %510 = vector.multi_reduction <add>, %509, %cst_256 [2] : vector<2x2x6xf32> to vector<2x2xf32>
    %cst_257 = arith.constant 0.000000e+00 : f32
    %511 = vector.broadcast %cst_257 : f32 to vector<2x2xf32>
    %512 = arith.maximumf %510, %511 : vector<2x2xf32>
    %513 = vector.shape_cast %512 : vector<2x2xf32> to vector<2x1x2xf32>
    %514 = vector.shape_cast %504 : vector<6x2xf32> to vector<1x6x2xf32>
    %515 = vector.broadcast %513 : vector<2x1x2xf32> to vector<2x6x2xf32>
    %516 = vector.broadcast %514 : vector<1x6x2xf32> to vector<2x6x2xf32>
    %517 = arith.mulf %515, %516 : vector<2x6x2xf32>
    %cst_258 = arith.constant dense<0.000000e+00> : vector<2x6xf32>
    %518 = vector.multi_reduction <add>, %517, %cst_258 [2] : vector<2x6x2xf32> to vector<2x6xf32>
    %519 = vector.shape_cast %502 : vector<2x6xf32> to vector<2x1x6xf32>
    %520 = vector.shape_cast %503 : vector<2x6xf32> to vector<1x2x6xf32>
    %521 = vector.broadcast %519 : vector<2x1x6xf32> to vector<2x2x6xf32>
    %522 = vector.broadcast %520 : vector<1x2x6xf32> to vector<2x2x6xf32>
    %523 = arith.mulf %521, %522 : vector<2x2x6xf32>
    %cst_259 = arith.constant dense<0.000000e+00> : vector<2x2xf32>
    %524 = vector.multi_reduction <add>, %523, %cst_259 [2] : vector<2x2x6xf32> to vector<2x2xf32>
    %cst_260 = arith.constant 0.000000e+00 : f32
    %525 = vector.broadcast %cst_260 : f32 to vector<2x2xf32>
    %526 = arith.maximumf %524, %525 : vector<2x2xf32>
    %527 = vector.shape_cast %526 : vector<2x2xf32> to vector<2x1x2xf32>
    %528 = vector.shape_cast %504 : vector<6x2xf32> to vector<1x6x2xf32>
    %529 = vector.broadcast %527 : vector<2x1x2xf32> to vector<2x6x2xf32>
    %530 = vector.broadcast %528 : vector<1x6x2xf32> to vector<2x6x2xf32>
    %531 = arith.mulf %529, %530 : vector<2x6x2xf32>
    %cst_261 = arith.constant dense<0.000000e+00> : vector<2x6xf32>
    %532 = vector.multi_reduction <add>, %531, %cst_261 [2] : vector<2x6x2xf32> to vector<2x6xf32>
    %533 = arith.addf %518, %532 : vector<2x6xf32>
    %534 = arith.negf %533 : vector<2x6xf32>
    %535 = math.exp %534 : vector<2x6xf32>
    %cst_262 = arith.constant 1.000000e+00 : f32
    %536 = vector.broadcast %cst_262 : f32 to vector<2x6xf32>
    %537 = arith.addf %536, %535 : vector<2x6xf32>
    %538 = arith.divf %536, %537 : vector<2x6xf32>
    %539 = vector.extract_strided_slice %538 {offsets = [0, 0], sizes = [2, 1], strides = [1, 1]} : vector<2x6xf32> to vector<2x1xf32>
    %540 = vector.shape_cast %539 : vector<2x1xf32> to vector<2x1xf32>
    %541 = vector.broadcast %540 : vector<2x1xf32> to vector<2x32xf32>
    %542 = vector.extract_strided_slice %538 {offsets = [0, 1], sizes = [2, 1], strides = [1, 1]} : vector<2x6xf32> to vector<2x1xf32>
    %543 = vector.shape_cast %542 : vector<2x1xf32> to vector<2x1xf32>
    %544 = vector.broadcast %543 : vector<2x1xf32> to vector<2x32xf32>
    %545 = vector.extract_strided_slice %538 {offsets = [0, 2], sizes = [2, 1], strides = [1, 1]} : vector<2x6xf32> to vector<2x1xf32>
    %546 = vector.shape_cast %545 : vector<2x1xf32> to vector<2x1xf32>
    %547 = vector.broadcast %546 : vector<2x1xf32> to vector<2x32xf32>
    %548 = vector.extract_strided_slice %538 {offsets = [0, 3], sizes = [2, 1], strides = [1, 1]} : vector<2x6xf32> to vector<2x1xf32>
    %549 = vector.shape_cast %548 : vector<2x1xf32> to vector<2x1xf32>
    %550 = vector.broadcast %549 : vector<2x1xf32> to vector<2x32xf32>
    %551 = vector.extract_strided_slice %538 {offsets = [0, 4], sizes = [2, 1], strides = [1, 1]} : vector<2x6xf32> to vector<2x1xf32>
    %552 = vector.shape_cast %551 : vector<2x1xf32> to vector<2x1xf32>
    %553 = vector.broadcast %552 : vector<2x1xf32> to vector<2x32xf32>
    %554 = vector.extract_strided_slice %538 {offsets = [0, 5], sizes = [2, 1], strides = [1, 1]} : vector<2x6xf32> to vector<2x1xf32>
    %555 = vector.shape_cast %554 : vector<2x1xf32> to vector<2x1xf32>
    %556 = vector.broadcast %555 : vector<2x1xf32> to vector<2x32xf32>
    %cst_263 = arith.constant 0.000000e+00 : f32
    %557 = vector.broadcast %cst_263 : f32 to vector<2x64xf32>
    %558 = tpu.concatenate %541, %544, %547, %550, %553, %556, %557 in 1 : vector<2x32xf32>, vector<2x32xf32>, vector<2x32xf32>, vector<2x32xf32>, vector<2x32xf32>, vector<2x32xf32>, vector<2x64xf32> -> vector<2x256xf32>
    %559 = vector.shape_cast %558 : vector<2x256xf32> to vector<2x1x256xf32>
    %560 = vector.broadcast %559 : vector<2x1x256xf32> to vector<2x8x256xf32>
    %561 = arith.mulf %420, %560 : vector<2x8x256xf32>
    %c0_264 = arith.constant 0 : index
    %c0_265 = arith.constant 0 : index
    %c0_266 = arith.constant 0 : index
    %562 = vector.load %arg6[%c0_264, %c0_265, %c0_266] : memref<2x8x256xf32, #tpu.memory_space<vmem>>, vector<2x8x256xf32>
    %563 = vector.shape_cast %561 : vector<2x8x256xf32> to vector<2x1x8x256xf32>
    %564 = vector.shape_cast %562 : vector<2x8x256xf32> to vector<1x2x8x256xf32>
    %565 = vector.broadcast %563 : vector<2x1x8x256xf32> to vector<2x2x8x256xf32>
    %566 = vector.broadcast %564 : vector<1x2x8x256xf32> to vector<2x2x8x256xf32>
    %567 = arith.mulf %565, %566 : vector<2x2x8x256xf32>
    %cst_267 = arith.constant dense<0.000000e+00> : vector<2x2x256xf32>
    %568 = vector.multi_reduction <add>, %567, %cst_267 [2] : vector<2x2x8x256xf32> to vector<2x2x256xf32>
    %569 = vector.extract_strided_slice %568 {offsets = [0, 0, 0], sizes = [2, 2, 32], strides = [1, 1, 1]} : vector<2x2x256xf32> to vector<2x2x32xf32>
    %570 = vector.extract_strided_slice %568 {offsets = [0, 0, 32], sizes = [2, 2, 32], strides = [1, 1, 1]} : vector<2x2x256xf32> to vector<2x2x32xf32>
    %571 = arith.addf %569, %570 : vector<2x2x32xf32>
    %572 = vector.extract_strided_slice %568 {offsets = [0, 0, 64], sizes = [2, 2, 32], strides = [1, 1, 1]} : vector<2x2x256xf32> to vector<2x2x32xf32>
    %573 = arith.addf %571, %572 : vector<2x2x32xf32>
    %574 = vector.extract_strided_slice %568 {offsets = [0, 0, 96], sizes = [2, 2, 32], strides = [1, 1, 1]} : vector<2x2x256xf32> to vector<2x2x32xf32>
    %575 = arith.addf %573, %574 : vector<2x2x32xf32>
    %576 = vector.extract_strided_slice %568 {offsets = [0, 0, 128], sizes = [2, 2, 32], strides = [1, 1, 1]} : vector<2x2x256xf32> to vector<2x2x32xf32>
    %577 = arith.addf %575, %576 : vector<2x2x32xf32>
    %578 = vector.extract_strided_slice %568 {offsets = [0, 0, 160], sizes = [2, 2, 32], strides = [1, 1, 1]} : vector<2x2x256xf32> to vector<2x2x32xf32>
    %579 = arith.addf %577, %578 : vector<2x2x32xf32>
    %c0_268 = arith.constant 0 : index
    %c0_269 = arith.constant 0 : index
    %580 = vector.load %arg7[%c0_268, %c0_269] : memref<2x32xf32, #tpu.memory_space<vmem>>, vector<2x32xf32>
    %581 = vector.shape_cast %580 : vector<2x32xf32> to vector<1x2x32xf32>
    %582 = vector.broadcast %581 : vector<1x2x32xf32> to vector<2x2x32xf32>
    %583 = arith.addf %579, %582 : vector<2x2x32xf32>
    %584 = arith.negf %583 : vector<2x2x32xf32>
    %585 = math.exp %584 : vector<2x2x32xf32>
    %cst_270 = arith.constant 1.000000e+00 : f32
    %586 = vector.broadcast %cst_270 : f32 to vector<2x2x32xf32>
    %587 = arith.addf %586, %585 : vector<2x2x32xf32>
    %588 = arith.divf %586, %587 : vector<2x2x32xf32>
    %cst_271 = arith.constant 0.000000e+00 : f32
    %589 = vector.broadcast %cst_271 : f32 to vector<2x2x96xf32>
    %590 = tpu.concatenate %588, %589 in 2 : vector<2x2x32xf32>, vector<2x2x96xf32> -> vector<2x2x128xf32>
    %c0_272 = arith.constant 0 : index
    %c0_273 = arith.constant 0 : index
    %c0_274 = arith.constant 0 : index
    %591 = vector.load %arg8[%c0_272, %c0_273, %c0_274] : memref<2x2x128xf32, #tpu.memory_space<vmem>>, vector<2x2x128xf32>
    tpu.vector_store %arg8[%c0_272, %c0_273, %c0_274], %590 {strides = array<i32>} : memref<2x2x128xf32, #tpu.memory_space<vmem>>, vector<2x2x128xf32>,
    return
  }
  func.func @transform_0(%arg0: i32) -> (i32, i32, i32, i32) {
    %c0_i32 = arith.constant 0 : i32
    %c0_i32_0 = arith.constant 0 : i32
    %c0_i32_1 = arith.constant 0 : i32
    %c0_i32_2 = arith.constant 0 : i32
    %c0_i32_3 = arith.constant 0 : i32
    return %c0_i32, %c0_i32_0, %c0_i32_1, %c0_i32_2 : i32, i32, i32, i32
  }
  func.func @transform_1(%arg0: i32) -> (i32, i32, i32, i32) {
    %c0_i32 = arith.constant 0 : i32
    %c0_i32_0 = arith.constant 0 : i32
    %c0_i32_1 = arith.constant 0 : i32
    %c0_i32_2 = arith.constant 0 : i32
    %c0_i32_3 = arith.constant 0 : i32
    return %c0_i32, %c0_i32_0, %c0_i32_1, %c0_i32_2 : i32, i32, i32, i32
  }
  func.func @transform_2(%arg0: i32) -> (i32, i32) {
    %c0_i32 = arith.constant 0 : i32
    %c0_i32_0 = arith.constant 0 : i32
    %c0_i32_1 = arith.constant 0 : i32
    return %c0_i32, %c0_i32_0 : i32, i32
  }
  func.func @transform_3(%arg0: i32) -> (i32, i32) {
    %c0_i32 = arith.constant 0 : i32
    %c0_i32_0 = arith.constant 0 : i32
    %c0_i32_1 = arith.constant 0 : i32
    return %c0_i32, %c0_i32_0 : i32, i32
  }
  func.func @transform_4(%arg0: i32) -> (i32, i32) {
    %c0_i32 = arith.constant 0 : i32
    %c0_i32_0 = arith.constant 0 : i32
    %c0_i32_1 = arith.constant 0 : i32
    return %c0_i32, %c0_i32_0 : i32, i32
  }
  func.func @transform_5(%arg0: i32) -> (i32, i32, i32) {
    %c0_i32 = arith.constant 0 : i32
    %c0_i32_0 = arith.constant 0 : i32
    %c0_i32_1 = arith.constant 0 : i32
    %c0_i32_2 = arith.constant 0 : i32
    return %c0_i32, %c0_i32_0, %c0_i32_1 : i32, i32, i32
  }
  func.func @transform_6(%arg0: i32) -> (i32, i32) {
    %c0_i32 = arith.constant 0 : i32
    %c0_i32_0 = arith.constant 0 : i32
    %c0_i32_1 = arith.constant 0 : i32
    return %c0_i32, %c0_i32_0 : i32, i32
  }
  func.func @transform_7(%arg0: i32) -> (i32, i32, i32) {
    %c0_i32 = arith.constant 0 : i32
    %c0_i32_0 = arith.constant 0 : i32
    %c0_i32_1 = arith.constant 0 : i32
    %c0_i32_2 = arith.constant 0 : i32
    return %c0_i32, %c0_i32_0, %c0_i32_1 : i32, i32, i32
  }
}

</mosaic_0001>

<llo_original>
// kernel: basic_conv_forward.1
$region0: #{basic_conv_forward.1}
  #allocation0 [shape = 'u32[]', space=smem, size = 0x4, offset = 0x4, fixed_abs, tag = 'smem constant byte address 0x4 - core index']
  #allocation1 [shape = 'u32[144,128]{1,0:T(1,128)}', space=vmem, size = 0x12000, scoped, tag = 'internal scratch']
  %s0 = inlined_call_operand.vmem [shape: f32[2,2,8,32], index: 0, kind: input, shape index: {}]
  %s1 = inlined_call_operand.vmem [shape: f32[2,7,4,256], index: 1, kind: input, shape index: {}]
  %s2 = inlined_call_operand.vmem [shape: f32[1,256], index: 2, kind: input, shape index: {}]
  %s3 = inlined_call_operand.vmem [shape: f32[2,6], index: 3, kind: input, shape index: {}]
  %s4 = inlined_call_operand.vmem [shape: f32[6,2], index: 4, kind: input, shape index: {}]
  %s5 = inlined_call_operand.vmem [shape: f32[2,8,256], index: 5, kind: input, shape index: {}]
  %s6 = inlined_call_operand.vmem [shape: f32[2,32], index: 6, kind: input, shape index: {}]
  %s7 = inlined_call_operand.vmem [shape: f32[2,2,128], index: 7, kind: output, shape index: {}]
  %s8 = sld [smem:[#allocation0]]
  $region38: #{basic_conv_forward.1} parent=0
    _
  %s10 = ssub.s32 1, %s8
  %s11 = scalar_select 0, %s10, %s8
  // Predicated region
  $region2: #{basic_conv_forward.1} parent=0 // pred_check
    _
  $region3: #{basic_conv_forward.1} parent=0 // pred_check_branch
    %13 = sbr.rel (0) target = $region5
  $region4: #{basic_conv_forward.1} parent=0 // pred_region
    _
  $region5: #{basic_conv_forward.1} parent=0 // pred_fallthru
    _
  // Predicated region
  $region6: #{basic_conv_forward.1} parent=0 // pred_check
    _
  $region7: #{basic_conv_forward.1} parent=0 // pred_check_branch
    %15 = sbr.rel (0) target = $region9
  $region8: #{basic_conv_forward.1} parent=0 // pred_region
    _
  $region9: #{basic_conv_forward.1} parent=0 // pred_fallthru
    _
  // Predicated region
  $region10: #{basic_conv_forward.1} parent=0 // pred_check
    _
  $region11: #{basic_conv_forward.1} parent=0 // pred_check_branch
    %17 = sbr.rel (0) target = $region13
  $region12: #{basic_conv_forward.1} parent=0 // pred_region
    _
  $region13: #{basic_conv_forward.1} parent=0 // pred_fallthru
    _
  // Predicated region
  $region14: #{basic_conv_forward.1} parent=0 // pred_check
    _
  $region15: #{basic_conv_forward.1} parent=0 // pred_check_branch
    %19 = sbr.rel (0) target = $region17
  $region16: #{basic_conv_forward.1} parent=0 // pred_region
    _
  $region17: #{basic_conv_forward.1} parent=0 // pred_fallthru
    _
  // Predicated region
  $region18: #{basic_conv_forward.1} parent=0 // pred_check
    _
  $region19: #{basic_conv_forward.1} parent=0 // pred_check_branch
    %21 = sbr.rel (0) target = $region21
  $region20: #{basic_conv_forward.1} parent=0 // pred_region
    _
  $region21: #{basic_conv_forward.1} parent=0 // pred_fallthru
    _
  // Predicated region
  $region22: #{basic_conv_forward.1} parent=0 // pred_check
    _
  $region23: #{basic_conv_forward.1} parent=0 // pred_check_branch
    %23 = sbr.rel (0) target = $region25
  $region24: #{basic_conv_forward.1} parent=0 // pred_region
    _
  $region25: #{basic_conv_forward.1} parent=0 // pred_fallthru
    _
  // Predicated region
  $region26: #{basic_conv_forward.1} parent=0 // pred_check
    _
  $region27: #{basic_conv_forward.1} parent=0 // pred_check_branch
    %25 = sbr.rel (0) target = $region29
  $region28: #{basic_conv_forward.1} parent=0 // pred_region
    _
  $region29: #{basic_conv_forward.1} parent=0 // pred_fallthru
    _
  %v26 = vld [vmem:[%s0] sm:$0xff]
  %v27 = vld [vmem:[%s0 + $0x8] sm:$0xff]
  %v28 = vld [vmem:[%s0 + $0x10] sm:$0xff]
  %v29 = vld [vmem:[%s0 + $0x18] sm:$0xff]
  %32 = vrot.lane.b32.xlu0 %v26, 32
  %v33 = vpop.permute.xlu0 %32
  %34 = vrot.lane.b32.xlu0 %v28, 32
  %v35 = vpop.permute.xlu0 %34
  %38 = vrot.lane.b32.xlu0 %v26, 64
  %v39 = vpop.permute.xlu0 %38
  %40 = vrot.lane.b32.xlu0 %v28, 64
  %v41 = vpop.permute.xlu0 %40
  %44 = vrot.lane.b32.xlu0 %v26, 96
  %v45 = vpop.permute.xlu0 %44
  %46 = vrot.lane.b32.xlu0 %v28, 96
  %v47 = vpop.permute.xlu0 %46
  %vm50 = vcmask 261120
  %v51 = vsel %vm50, %v26, %v33
  %v52 = vsel %vm50, %v28, %v35
  %vm53 = vcmask 523264
  %v54 = vsel %vm53, %v51, %v39
  %v55 = vsel %vm53, %v52, %v41
  %vm56 = vcmask 785408
  %v57 = vsel %vm56, %v54, %v45
  %v58 = vsel %vm56, %v55, %v47
  %v59 = vsel %vm53, %v51, 0.0
  %v60 = vsel %vm53, %v52, 0.0
  %v65 = vrot.slane %v57, 5
  %v66 = vrot.slane %v59, 5
  %v67 = vrot.slane %v58, 5
  %v68 = vrot.slane %v60, 5
  %vm73 = vcmask 1042432
  %v74 = vsel %vm73, 0.0, %v65
  %v75 = vsel %vm73, 0.0, %v66
  %v76 = vsel %vm73, 0.0, %v67
  %v77 = vsel %vm73, 0.0, %v68
  %v78 = vsel %vm73, %v65, 0.0
  %v79 = vsel %vm73, %v66, 0.0
  %v80 = vsel %vm73, %v67, 0.0
  %v81 = vsel %vm73, %v68, 0.0
  %84 = vrot.lane.b32.xlu0 %v27, 32
  %v85 = vpop.permute.xlu0 %84
  %86 = vrot.lane.b32.xlu0 %v29, 32
  %v87 = vpop.permute.xlu0 %86
  %90 = vrot.lane.b32.xlu0 %v27, 64
  %v91 = vpop.permute.xlu0 %90
  %92 = vrot.lane.b32.xlu0 %v29, 64
  %v93 = vpop.permute.xlu0 %92
  %96 = vrot.lane.b32.xlu0 %v27, 96
  %v97 = vpop.permute.xlu0 %96
  %98 = vrot.lane.b32.xlu0 %v29, 96
  %v99 = vpop.permute.xlu0 %98
  %v102 = vsel %vm50, %v27, %v85
  %v103 = vsel %vm50, %v29, %v87
  %v104 = vsel %vm53, %v102, %v91
  %v105 = vsel %vm53, %v103, %v93
  %v106 = vsel %vm56, %v104, %v97
  %v107 = vsel %vm56, %v105, %v99
  %v108 = vsel %vm53, %v102, 0.0
  %v109 = vsel %vm53, %v103, 0.0
  %v114 = vrot.slane %v106, 5
  %v115 = vrot.slane %v108, 5
  %v116 = vrot.slane %v107, 5
  %v117 = vrot.slane %v109, 5
  %v122 = vsel %vm73, 0.0, %v114
  %v123 = vsel %vm73, 0.0, %v115
  %v124 = vsel %vm73, 0.0, %v116
  %v125 = vsel %vm73, 0.0, %v117
  %v126 = vsel %vm73, %v114, 0.0
  %v127 = vsel %vm73, %v115, 0.0
  %v128 = vsel %vm73, %v116, 0.0
  %v129 = vsel %vm73, %v117, 0.0
  %v130 = vld [vmem:[%s2] sm:$0x3]
  %v132 = vlaneseq
  %v133 = vshrl.u32 %v132, 7
  %v134 = vsub.s32 0, %v133
  %v135 = vrot.slane %v130, %v134
  %v136 = vlaneseq
  %v137 = vshrl.u32 %v136, 7
  %v138 = vsub.s32 1, %v137
  %v139 = vrot.slane %v130, %v138
  %v142 = vld [vmem:[%s1] ss:$4 sm:$0x3]
  %v144 = vlaneseq
  %v145 = vshrl.u32 %v144, 7
  %v146 = vsub.s32 0, %v145
  %v147 = vrot.slane %v142, %v146
  %v148 = vlaneseq
  %v149 = vshrl.u32 %v148, 7
  %v150 = vsub.s32 1, %v149
  %v151 = vrot.slane %v142, %v150
  %v154 = vmul.f32 %v147, %v74
  %v155 = vmul.f32 %v151, %v75
  %v156 = vmul.f32 %v147, %v76
  %v157 = vmul.f32 %v151, %v77
  %v158 = vadd.f32 %v135, %v154
  %v159 = vadd.f32 %v139, %v155
  %v160 = vadd.f32 %v135, %v156
  %v161 = vadd.f32 %v139, %v157
  %s162 = scalar_lea.vmem %s1, 56
  %v163 = vld [vmem:[%s162] ss:$4 sm:$0x3]
  %v165 = vlaneseq
  %v166 = vshrl.u32 %v165, 7
  %v167 = vsub.s32 0, %v166
  %v168 = vrot.slane %v163, %v167
  %v169 = vlaneseq
  %v170 = vshrl.u32 %v169, 7
  %v171 = vsub.s32 1, %v170
  %v172 = vrot.slane %v163, %v171
  %v175 = vmul.f32 %v168, %v122
  %v176 = vmul.f32 %v172, %v123
  %v177 = vmul.f32 %v168, %v124
  %v178 = vmul.f32 %v172, %v125
  %v179 = vadd.f32 %v158, %v175
  %v180 = vadd.f32 %v159, %v176
  %v181 = vadd.f32 %v160, %v177
  %v182 = vadd.f32 %v161, %v178
  %s183 = scalar_lea.vmem %s1, 8
  %v184 = vld [vmem:[%s183] ss:$4 sm:$0x3]
  %v186 = vlaneseq
  %v187 = vshrl.u32 %v186, 7
  %v188 = vsub.s32 0, %v187
  %v189 = vrot.slane %v184, %v188
  %v190 = vlaneseq
  %v191 = vshrl.u32 %v190, 7
  %v192 = vsub.s32 1, %v191
  %v193 = vrot.slane %v184, %v192
  %v196 = vmul.f32 %v189, %v74
  %v197 = vmul.f32 %v193, %v75
  %v198 = vmul.f32 %v189, %v78
  %v199 = vmul.f32 %v193, %v79
  %v200 = vmul.f32 %v189, %v76
  %v201 = vmul.f32 %v193, %v77
  %v202 = vmul.f32 %v189, %v80
  %v203 = vmul.f32 %v193, %v81
  %vm212 = vcmask 1046528
  %v213 = vrot.slane %v196, 1
  %v214 = vrot.slane %v198, 1
  %v215 = vsel %vm212, %v213, %v214
  %v216 = vrot.slane %v197, 1
  %v217 = vrot.slane %v199, 1
  %v218 = vsel %vm212, %v216, %v217
  %v219 = vrot.slane %v200, 1
  %v220 = vrot.slane %v202, 1
  %v221 = vsel %vm212, %v219, %v220
  %v222 = vrot.slane %v201, 1
  %v223 = vrot.slane %v203, 1
  %v224 = vsel %vm212, %v222, %v223
  %v229 = vadd.f32 %v179, %v215
  %v230 = vadd.f32 %v180, %v218
  %v231 = vadd.f32 %v181, %v221
  %v232 = vadd.f32 %v182, %v224
  %s233 = scalar_lea.vmem %s1, 64
  %v234 = vld [vmem:[%s233] ss:$4 sm:$0x3]
  %v236 = vlaneseq
  %v237 = vshrl.u32 %v236, 7
  %v238 = vsub.s32 0, %v237
  %v239 = vrot.slane %v234, %v238
  %v240 = vlaneseq
  %v241 = vshrl.u32 %v240, 7
  %v242 = vsub.s32 1, %v241
  %v243 = vrot.slane %v234, %v242
  %v246 = vmul.f32 %v239, %v122
  %v247 = vmul.f32 %v243, %v123
  %v248 = vmul.f32 %v239, %v126
  %v249 = vmul.f32 %v243, %v127
  %v250 = vmul.f32 %v239, %v124
  %v251 = vmul.f32 %v243, %v125
  %v252 = vmul.f32 %v239, %v128
  %v253 = vmul.f32 %v243, %v129
  %v262 = vrot.slane %v246, 1
  %v263 = vrot.slane %v248, 1
  %v264 = vsel %vm212, %v262, %v263
  %v265 = vrot.slane %v247, 1
  %v266 = vrot.slane %v249, 1
  %v267 = vsel %vm212, %v265, %v266
  %v268 = vrot.slane %v250, 1
  %v269 = vrot.slane %v252, 1
  %v270 = vsel %vm212, %v268, %v269
  %v271 = vrot.slane %v251, 1
  %v272 = vrot.slane %v253, 1
  %v273 = vsel %vm212, %v271, %v272
  %v278 = vadd.f32 %v229, %v264
  %v279 = vadd.f32 %v230, %v267
  %v280 = vadd.f32 %v231, %v270
  %v281 = vadd.f32 %v232, %v273
  %s282 = scalar_lea.vmem %s1, 16
  %v283 = vld [vmem:[%s282] ss:$4 sm:$0x3]
  %v285 = vlaneseq
  %v286 = vshrl.u32 %v285, 7
  %v287 = vsub.s32 0, %v286
  %v288 = vrot.slane %v283, %v287
  %v289 = vlaneseq
  %v290 = vshrl.u32 %v289, 7
  %v291 = vsub.s32 1, %v290
  %v292 = vrot.slane %v283, %v291
  %v295 = vmul.f32 %v288, %v74
  %v296 = vmul.f32 %v292, %v75
  %v297 = vmul.f32 %v288, %v78
  %v298 = vmul.f32 %v292, %v79
  %v299 = vmul.f32 %v288, %v76
  %v300 = vmul.f32 %v292, %v77
  %v301 = vmul.f32 %v288, %v80
  %v302 = vmul.f32 %v292, %v81
  %vm311 = vcmask 1045504
  %v312 = vrot.slane %v295, 2
  %v313 = vrot.slane %v297, 2
  %v314 = vsel %vm311, %v312, %v313
  %v315 = vrot.slane %v296, 2
  %v316 = vrot.slane %v298, 2
  %v317 = vsel %vm311, %v315, %v316
  %v318 = vrot.slane %v299, 2
  %v319 = vrot.slane %v301, 2
  %v320 = vsel %vm311, %v318, %v319
  %v321 = vrot.slane %v300, 2
  %v322 = vrot.slane %v302, 2
  %v323 = vsel %vm311, %v321, %v322
  %v328 = vadd.f32 %v278, %v314
  %v329 = vadd.f32 %v279, %v317
  %v330 = vadd.f32 %v280, %v320
  %v331 = vadd.f32 %v281, %v323
  %s332 = scalar_lea.vmem %s1, 72
  %v333 = vld [vmem:[%s332] ss:$4 sm:$0x3]
  %v335 = vlaneseq
  %v336 = vshrl.u32 %v335, 7
  %v337 = vsub.s32 0, %v336
  %v338 = vrot.slane %v333, %v337
  %v339 = vlaneseq
  %v340 = vshrl.u32 %v339, 7
  %v341 = vsub.s32 1, %v340
  %v342 = vrot.slane %v333, %v341
  %v345 = vmul.f32 %v338, %v122
  %v346 = vmul.f32 %v342, %v123
  %v347 = vmul.f32 %v338, %v126
  %v348 = vmul.f32 %v342, %v127
  %v349 = vmul.f32 %v338, %v124
  %v350 = vmul.f32 %v342, %v125
  %v351 = vmul.f32 %v338, %v128
  %v352 = vmul.f32 %v342, %v129
  %v361 = vrot.slane %v345, 2
  %v362 = vrot.slane %v347, 2
  %v363 = vsel %vm311, %v361, %v362
  %v364 = vrot.slane %v346, 2
  %v365 = vrot.slane %v348, 2
  %v366 = vsel %vm311, %v364, %v365
  %v367 = vrot.slane %v349, 2
  %v368 = vrot.slane %v351, 2
  %v369 = vsel %vm311, %v367, %v368
  %v370 = vrot.slane %v350, 2
  %v371 = vrot.slane %v352, 2
  %v372 = vsel %vm311, %v370, %v371
  %v377 = vadd.f32 %v328, %v363
  %v378 = vadd.f32 %v329, %v366
  %v379 = vadd.f32 %v330, %v369
  %v380 = vadd.f32 %v331, %v372
  %s381 = scalar_lea.vmem %s1, 24
  %v382 = vld [vmem:[%s381] ss:$4 sm:$0x3]
  %v384 = vlaneseq
  %v385 = vshrl.u32 %v384, 7
  %v386 = vsub.s32 0, %v385
  %v387 = vrot.slane %v382, %v386
  %v388 = vlaneseq
  %v389 = vshrl.u32 %v388, 7
  %v390 = vsub.s32 1, %v389
  %v391 = vrot.slane %v382, %v390
  %v394 = vmul.f32 %v387, %v74
  %v395 = vmul.f32 %v391, %v75
  %v396 = vmul.f32 %v387, %v78
  %v397 = vmul.f32 %v391, %v79
  %v398 = vmul.f32 %v387, %v76
  %v399 = vmul.f32 %v391, %v77
  %v400 = vmul.f32 %v387, %v80
  %v401 = vmul.f32 %v391, %v81
  %vm410 = vcmask 1044480
  %v411 = vrot.slane %v394, 3
  %v412 = vrot.slane %v396, 3
  %v413 = vsel %vm410, %v411, %v412
  %v414 = vrot.slane %v395, 3
  %v415 = vrot.slane %v397, 3
  %v416 = vsel %vm410, %v414, %v415
  %v417 = vrot.slane %v398, 3
  %v418 = vrot.slane %v400, 3
  %v419 = vsel %vm410, %v417, %v418
  %v420 = vrot.slane %v399, 3
  %v421 = vrot.slane %v401, 3
  %v422 = vsel %vm410, %v420, %v421
  %v427 = vadd.f32 %v377, %v413
  %v428 = vadd.f32 %v378, %v416
  %v429 = vadd.f32 %v379, %v419
  %v430 = vadd.f32 %v380, %v422
  %s431 = scalar_lea.vmem %s1, 80
  %v432 = vld [vmem:[%s431] ss:$4 sm:$0x3]
  %v434 = vlaneseq
  %v435 = vshrl.u32 %v434, 7
  %v436 = vsub.s32 0, %v435
  %v437 = vrot.slane %v432, %v436
  %v438 = vlaneseq
  %v439 = vshrl.u32 %v438, 7
  %v440 = vsub.s32 1, %v439
  %v441 = vrot.slane %v432, %v440
  %v444 = vmul.f32 %v437, %v122
  %v445 = vmul.f32 %v441, %v123
  %v446 = vmul.f32 %v437, %v126
  %v447 = vmul.f32 %v441, %v127
  %v448 = vmul.f32 %v437, %v124
  %v449 = vmul.f32 %v441, %v125
  %v450 = vmul.f32 %v437, %v128
  %v451 = vmul.f32 %v441, %v129
  %v460 = vrot.slane %v444, 3
  %v461 = vrot.slane %v446, 3
  %v462 = vsel %vm410, %v460, %v461
  %v463 = vrot.slane %v445, 3
  %v464 = vrot.slane %v447, 3
  %v465 = vsel %vm410, %v463, %v464
  %v466 = vrot.slane %v448, 3
  %v467 = vrot.slane %v450, 3
  %v468 = vsel %vm410, %v466, %v467
  %v469 = vrot.slane %v449, 3
  %v470 = vrot.slane %v451, 3
  %v471 = vsel %vm410, %v469, %v470
  %v476 = vadd.f32 %v427, %v462
  %v477 = vadd.f32 %v428, %v465
  %v478 = vadd.f32 %v429, %v468
  %v479 = vadd.f32 %v430, %v471
  %s480 = scalar_lea.vmem %s1, 32
  %v481 = vld [vmem:[%s480] ss:$4 sm:$0x3]
  %v483 = vlaneseq
  %v484 = vshrl.u32 %v483, 7
  %v485 = vsub.s32 0, %v484
  %v486 = vrot.slane %v481, %v485
  %v487 = vlaneseq
  %v488 = vshrl.u32 %v487, 7
  %v489 = vsub.s32 1, %v488
  %v490 = vrot.slane %v481, %v489
  %v493 = vmul.f32 %v486, %v74
  %v494 = vmul.f32 %v490, %v75
  %v495 = vmul.f32 %v486, %v78
  %v496 = vmul.f32 %v490, %v79
  %v497 = vmul.f32 %v486, %v76
  %v498 = vmul.f32 %v490, %v77
  %v499 = vmul.f32 %v486, %v80
  %v500 = vmul.f32 %v490, %v81
  %vm509 = vcmask 1043456
  %v510 = vrot.slane %v493, 4
  %v511 = vrot.slane %v495, 4
  %v512 = vsel %vm509, %v510, %v511
  %v513 = vrot.slane %v494, 4
  %v514 = vrot.slane %v496, 4
  %v515 = vsel %vm509, %v513, %v514
  %v516 = vrot.slane %v497, 4
  %v517 = vrot.slane %v499, 4
  %v518 = vsel %vm509, %v516, %v517
  %v519 = vrot.slane %v498, 4
  %v520 = vrot.slane %v500, 4
  %v521 = vsel %vm509, %v519, %v520
  %v526 = vadd.f32 %v476, %v512
  %v527 = vadd.f32 %v477, %v515
  %v528 = vadd.f32 %v478, %v518
  %v529 = vadd.f32 %v479, %v521
  %s530 = scalar_lea.vmem %s1, 88
  %v531 = vld [vmem:[%s530] ss:$4 sm:$0x3]
  %v533 = vlaneseq
  %v534 = vshrl.u32 %v533, 7
  %v535 = vsub.s32 0, %v534
  %v536 = vrot.slane %v531, %v535
  %v537 = vlaneseq
  %v538 = vshrl.u32 %v537, 7
  %v539 = vsub.s32 1, %v538
  %v540 = vrot.slane %v531, %v539
  %v543 = vmul.f32 %v536, %v122
  %v544 = vmul.f32 %v540, %v123
  %v545 = vmul.f32 %v536, %v126
  %v546 = vmul.f32 %v540, %v127
  %v547 = vmul.f32 %v536, %v124
  %v548 = vmul.f32 %v540, %v125
  %v549 = vmul.f32 %v536, %v128
  %v550 = vmul.f32 %v540, %v129
  %v559 = vrot.slane %v543, 4
  %v560 = vrot.slane %v545, 4
  %v561 = vsel %vm509, %v559, %v560
  %v562 = vrot.slane %v544, 4
  %v563 = vrot.slane %v546, 4
  %v564 = vsel %vm509, %v562, %v563
  %v565 = vrot.slane %v547, 4
  %v566 = vrot.slane %v549, 4
  %v567 = vsel %vm509, %v565, %v566
  %v568 = vrot.slane %v548, 4
  %v569 = vrot.slane %v550, 4
  %v570 = vsel %vm509, %v568, %v569
  %v575 = vadd.f32 %v526, %v561
  %v576 = vadd.f32 %v527, %v564
  %v577 = vadd.f32 %v528, %v567
  %v578 = vadd.f32 %v529, %v570
  %s579 = scalar_lea.vmem %s1, 40
  %v580 = vld [vmem:[%s579] ss:$4 sm:$0x3]
  %v582 = vlaneseq
  %v583 = vshrl.u32 %v582, 7
  %v584 = vsub.s32 0, %v583
  %v585 = vrot.slane %v580, %v584
  %v586 = vlaneseq
  %v587 = vshrl.u32 %v586, 7
  %v588 = vsub.s32 1, %v587
  %v589 = vrot.slane %v580, %v588
  %v592 = vmul.f32 %v585, %v74
  %v593 = vmul.f32 %v589, %v75
  %v594 = vmul.f32 %v585, %v78
  %v595 = vmul.f32 %v589, %v79
  %v596 = vmul.f32 %v585, %v76
  %v597 = vmul.f32 %v589, %v77
  %v598 = vmul.f32 %v585, %v80
  %v599 = vmul.f32 %v589, %v81
  %v608 = vrot.slane %v592, 5
  %v609 = vrot.slane %v594, 5
  %v610 = vsel %vm73, %v608, %v609
  %v611 = vrot.slane %v593, 5
  %v612 = vrot.slane %v595, 5
  %v613 = vsel %vm73, %v611, %v612
  %v614 = vrot.slane %v596, 5
  %v615 = vrot.slane %v598, 5
  %v616 = vsel %vm73, %v614, %v615
  %v617 = vrot.slane %v597, 5
  %v618 = vrot.slane %v599, 5
  %v619 = vsel %vm73, %v617, %v618
  %v624 = vadd.f32 %v575, %v610
  %v625 = vadd.f32 %v576, %v613
  %v626 = vadd.f32 %v577, %v616
  %v627 = vadd.f32 %v578, %v619
  %s628 = scalar_lea.vmem %s1, 96
  %v629 = vld [vmem:[%s628] ss:$4 sm:$0x3]
  %v631 = vlaneseq
  %v632 = vshrl.u32 %v631, 7
  %v633 = vsub.s32 0, %v632
  %v634 = vrot.slane %v629, %v633
  %v635 = vlaneseq
  %v636 = vshrl.u32 %v635, 7
  %v637 = vsub.s32 1, %v636
  %v638 = vrot.slane %v629, %v637
  %v641 = vmul.f32 %v634, %v122
  %v642 = vmul.f32 %v638, %v123
  %v643 = vmul.f32 %v634, %v126
  %v644 = vmul.f32 %v638, %v127
  %v645 = vmul.f32 %v634, %v124
  %v646 = vmul.f32 %v638, %v125
  %v647 = vmul.f32 %v634, %v128
  %v648 = vmul.f32 %v638, %v129
  %v657 = vrot.slane %v641, 5
  %v658 = vrot.slane %v643, 5
  %v659 = vsel %vm73, %v657, %v658
  %v660 = vrot.slane %v642, 5
  %v661 = vrot.slane %v644, 5
  %v662 = vsel %vm73, %v660, %v661
  %v663 = vrot.slane %v645, 5
  %v664 = vrot.slane %v647, 5
  %v665 = vsel %vm73, %v663, %v664
  %v666 = vrot.slane %v646, 5
  %v667 = vrot.slane %v648, 5
  %v668 = vsel %vm73, %v666, %v667
  %v673 = vadd.f32 %v624, %v659
  %v674 = vadd.f32 %v625, %v662
  %v675 = vadd.f32 %v626, %v665
  %v676 = vadd.f32 %v627, %v668
  %s677 = scalar_lea.vmem %s1, 48
  %v678 = vld [vmem:[%s677] ss:$4 sm:$0x3]
  %v680 = vlaneseq
  %v681 = vshrl.u32 %v680, 7
  %v682 = vsub.s32 0, %v681
  %v683 = vrot.slane %v678, %v682
  %v684 = vlaneseq
  %v685 = vshrl.u32 %v684, 7
  %v686 = vsub.s32 1, %v685
  %v687 = vrot.slane %v678, %v686
  %v690 = vmul.f32 %v683, %v74
  %v691 = vmul.f32 %v687, %v75
  %v692 = vmul.f32 %v683, %v78
  %v693 = vmul.f32 %v687, %v79
  %v694 = vmul.f32 %v683, %v76
  %v695 = vmul.f32 %v687, %v77
  %v696 = vmul.f32 %v683, %v80
  %v697 = vmul.f32 %v687, %v81
  %vm706 = vcmask 1041408
  %v707 = vrot.slane %v690, 6
  %v708 = vrot.slane %v692, 6
  %v709 = vsel %vm706, %v707, %v708
  %v710 = vrot.slane %v691, 6
  %v711 = vrot.slane %v693, 6
  %v712 = vsel %vm706, %v710, %v711
  %v713 = vrot.slane %v694, 6
  %v714 = vrot.slane %v696, 6
  %v715 = vsel %vm706, %v713, %v714
  %v716 = vrot.slane %v695, 6
  %v717 = vrot.slane %v697, 6
  %v718 = vsel %vm706, %v716, %v717
  %v723 = vadd.f32 %v673, %v709
  %v724 = vadd.f32 %v674, %v712
  %v725 = vadd.f32 %v675, %v715
  %v726 = vadd.f32 %v676, %v718
  %s727 = scalar_lea.vmem %s1, 104
  %v728 = vld [vmem:[%s727] ss:$4 sm:$0x3]
  %v730 = vlaneseq
  %v731 = vshrl.u32 %v730, 7
  %v732 = vsub.s32 0, %v731
  %v733 = vrot.slane %v728, %v732
  %v734 = vlaneseq
  %v735 = vshrl.u32 %v734, 7
  %v736 = vsub.s32 1, %v735
  %v737 = vrot.slane %v728, %v736
  %v740 = vmul.f32 %v733, %v122
  %v741 = vmul.f32 %v737, %v123
  %v742 = vmul.f32 %v733, %v126
  %v743 = vmul.f32 %v737, %v127
  %v744 = vmul.f32 %v733, %v124
  %v745 = vmul.f32 %v737, %v125
  %v746 = vmul.f32 %v733, %v128
  %v747 = vmul.f32 %v737, %v129
  %v756 = vrot.slane %v740, 6
  %v757 = vrot.slane %v742, 6
  %v758 = vsel %vm706, %v756, %v757
  %v759 = vrot.slane %v741, 6
  %v760 = vrot.slane %v743, 6
  %v761 = vsel %vm706, %v759, %v760
  %v762 = vrot.slane %v744, 6
  %v763 = vrot.slane %v746, 6
  %v764 = vsel %vm706, %v762, %v763
  %v765 = vrot.slane %v745, 6
  %v766 = vrot.slane %v747, 6
  %v767 = vsel %vm706, %v765, %v766
  %v772 = vadd.f32 %v723, %v758
  %v773 = vadd.f32 %v724, %v761
  %v774 = vadd.f32 %v725, %v764
  %v775 = vadd.f32 %v726, %v767
  %784 = vrot.lane.b32.xlu0 %v74, 127
  %v785 = vpop.permute.xlu0 %784
  %786 = vrot.lane.b32.xlu0 %v75, 127
  %v787 = vpop.permute.xlu0 %786
  %788 = vrot.lane.b32.xlu0 %v78, 127
  %v789 = vpop.permute.xlu0 %788
  %790 = vrot.lane.b32.xlu0 %v79, 127
  %v791 = vpop.permute.xlu0 %790
  %792 = vrot.lane.b32.xlu0 %v76, 127
  %v793 = vpop.permute.xlu0 %792
  %794 = vrot.lane.b32.xlu0 %v77, 127
  %v795 = vpop.permute.xlu0 %794
  %796 = vrot.lane.b32.xlu0 %v80, 127
  %v797 = vpop.permute.xlu0 %796
  %798 = vrot.lane.b32.xlu0 %v81, 127
  %v799 = vpop.permute.xlu0 %798
  %vm800 = vcmask 1039360
  %v801 = vsel %vm800, %v785, %v787
  %v802 = vsel %vm800, %v789, %v791
  %v803 = vsel %vm800, %v793, %v795
  %v804 = vsel %vm800, %v797, %v799
  %v813 = vsel %vm800, %v787, 0.0
  %v814 = vsel %vm800, %v791, 0.0
  %v815 = vsel %vm800, %v795, 0.0
  %v816 = vsel %vm800, %v799, 0.0
  %825 = vrot.lane.b32.xlu0 %v122, 127
  %v826 = vpop.permute.xlu0 %825
  %827 = vrot.lane.b32.xlu0 %v123, 127
  %v828 = vpop.permute.xlu0 %827
  %829 = vrot.lane.b32.xlu0 %v126, 127
  %v830 = vpop.permute.xlu0 %829
  %831 = vrot.lane.b32.xlu0 %v127, 127
  %v832 = vpop.permute.xlu0 %831
  %833 = vrot.lane.b32.xlu0 %v124, 127
  %v834 = vpop.permute.xlu0 %833
  %835 = vrot.lane.b32.xlu0 %v125, 127
  %v836 = vpop.permute.xlu0 %835
  %837 = vrot.lane.b32.xlu0 %v128, 127
  %v838 = vpop.permute.xlu0 %837
  %839 = vrot.lane.b32.xlu0 %v129, 127
  %v840 = vpop.permute.xlu0 %839
  %v841 = vsel %vm800, %v826, %v828
  %v842 = vsel %vm800, %v830, %v832
  %v843 = vsel %vm800, %v834, %v836
  %v844 = vsel %vm800, %v838, %v840
  %v853 = vsel %vm800, %v828, 0.0
  %v854 = vsel %vm800, %v832, 0.0
  %v855 = vsel %vm800, %v836, 0.0
  %v856 = vsel %vm800, %v840, 0.0
  %s857 = scalar_lea.vmem %s1, 1
  %v858 = vld [vmem:[%s857] ss:$4 sm:$0x3]
  %v860 = vlaneseq
  %v861 = vshrl.u32 %v860, 7
  %v862 = vsub.s32 0, %v861
  %v863 = vrot.slane %v858, %v862
  %v864 = vlaneseq
  %v865 = vshrl.u32 %v864, 7
  %v866 = vsub.s32 1, %v865
  %v867 = vrot.slane %v858, %v866
  %v870 = vmul.f32 %v863, %v801
  %v871 = vmul.f32 %v867, %v813
  %v872 = vmul.f32 %v863, %v803
  %v873 = vmul.f32 %v867, %v815
  %v874 = vadd.f32 %v772, %v870
  %v875 = vadd.f32 %v773, %v871
  %v876 = vadd.f32 %v774, %v872
  %v877 = vadd.f32 %v775, %v873
  %s878 = scalar_lea.vmem %s162, 1
  %v879 = vld [vmem:[%s878] ss:$4 sm:$0x3]
  %v881 = vlaneseq
  %v882 = vshrl.u32 %v881, 7
  %v883 = vsub.s32 0, %v882
  %v884 = vrot.slane %v879, %v883
  %v885 = vlaneseq
  %v886 = vshrl.u32 %v885, 7
  %v887 = vsub.s32 1, %v886
  %v888 = vrot.slane %v879, %v887
  %v891 = vmul.f32 %v884, %v841
  %v892 = vmul.f32 %v888, %v853
  %v893 = vmul.f32 %v884, %v843
  %v894 = vmul.f32 %v888, %v855
  %v895 = vadd.f32 %v874, %v891
  %v896 = vadd.f32 %v875, %v892
  %v897 = vadd.f32 %v876, %v893
  %v898 = vadd.f32 %v877, %v894
  %s899 = scalar_lea.vmem %s183, 1
  %v900 = vld [vmem:[%s899] ss:$4 sm:$0x3]
  %v902 = vlaneseq
  %v903 = vshrl.u32 %v902, 7
  %v904 = vsub.s32 0, %v903
  %v905 = vrot.slane %v900, %v904
  %v906 = vlaneseq
  %v907 = vshrl.u32 %v906, 7
  %v908 = vsub.s32 1, %v907
  %v909 = vrot.slane %v900, %v908
  %v912 = vmul.f32 %v905, %v801
  %v913 = vmul.f32 %v909, %v813
  %v914 = vmul.f32 %v905, %v802
  %v915 = vmul.f32 %v909, %v814
  %v916 = vmul.f32 %v905, %v803
  %v917 = vmul.f32 %v909, %v815
  %v918 = vmul.f32 %v905, %v804
  %v919 = vmul.f32 %v909, %v816
  %v928 = vrot.slane %v912, 1
  %v929 = vrot.slane %v914, 1
  %v930 = vsel %vm212, %v928, %v929
  %v931 = vrot.slane %v913, 1
  %v932 = vrot.slane %v915, 1
  %v933 = vsel %vm212, %v931, %v932
  %v934 = vrot.slane %v916, 1
  %v935 = vrot.slane %v918, 1
  %v936 = vsel %vm212, %v934, %v935
  %v937 = vrot.slane %v917, 1
  %v938 = vrot.slane %v919, 1
  %v939 = vsel %vm212, %v937, %v938
  %v944 = vadd.f32 %v895, %v930
  %v945 = vadd.f32 %v896, %v933
  %v946 = vadd.f32 %v897, %v936
  %v947 = vadd.f32 %v898, %v939
  %s948 = scalar_lea.vmem %s233, 1
  %v949 = vld [vmem:[%s948] ss:$4 sm:$0x3]
  %v951 = vlaneseq
  %v952 = vshrl.u32 %v951, 7
  %v953 = vsub.s32 0, %v952
  %v954 = vrot.slane %v949, %v953
  %v955 = vlaneseq
  %v956 = vshrl.u32 %v955, 7
  %v957 = vsub.s32 1, %v956
  %v958 = vrot.slane %v949, %v957
  %v961 = vmul.f32 %v954, %v841
  %v962 = vmul.f32 %v958, %v853
  %v963 = vmul.f32 %v954, %v842
  %v964 = vmul.f32 %v958, %v854
  %v965 = vmul.f32 %v954, %v843
  %v966 = vmul.f32 %v958, %v855
  %v967 = vmul.f32 %v954, %v844
  %v968 = vmul.f32 %v958, %v856
  %v977 = vrot.slane %v961, 1
  %v978 = vrot.slane %v963, 1
  %v979 = vsel %vm212, %v977, %v978
  %v980 = vrot.slane %v962, 1
  %v981 = vrot.slane %v964, 1
  %v982 = vsel %vm212, %v980, %v981
  %v983 = vrot.slane %v965, 1
  %v984 = vrot.slane %v967, 1
  %v985 = vsel %vm212, %v983, %v984
  %v986 = vrot.slane %v966, 1
  %v987 = vrot.slane %v968, 1
  %v988 = vsel %vm212, %v986, %v987
  %v993 = vadd.f32 %v944, %v979
  %v994 = vadd.f32 %v945, %v982
  %v995 = vadd.f32 %v946, %v985
  %v996 = vadd.f32 %v947, %v988
  %s997 = scalar_lea.vmem %s282, 1
  %v998 = vld [vmem:[%s997] ss:$4 sm:$0x3]
  %v1000 = vlaneseq
  %v1001 = vshrl.u32 %v1000, 7
  %v1002 = vsub.s32 0, %v1001
  %v1003 = vrot.slane %v998, %v1002
  %v1004 = vlaneseq
  %v1005 = vshrl.u32 %v1004, 7
  %v1006 = vsub.s32 1, %v1005
  %v1007 = vrot.slane %v998, %v1006
  %v1010 = vmul.f32 %v1003, %v801
  %v1011 = vmul.f32 %v1007, %v813
  %v1012 = vmul.f32 %v1003, %v802
  %v1013 = vmul.f32 %v1007, %v814
  %v1014 = vmul.f32 %v1003, %v803
  %v1015 = vmul.f32 %v1007, %v815
  %v1016 = vmul.f32 %v1003, %v804
  %v1017 = vmul.f32 %v1007, %v816
  %v1026 = vrot.slane %v1010, 2
  %v1027 = vrot.slane %v1012, 2
  %v1028 = vsel %vm311, %v1026, %v1027
  %v1029 = vrot.slane %v1011, 2
  %v1030 = vrot.slane %v1013, 2
  %v1031 = vsel %vm311, %v1029, %v1030
  %v1032 = vrot.slane %v1014, 2
  %v1033 = vrot.slane %v1016, 2
  %v1034 = vsel %vm311, %v1032, %v1033
  %v1035 = vrot.slane %v1015, 2
  %v1036 = vrot.slane %v1017, 2
  %v1037 = vsel %vm311, %v1035, %v1036
  %v1042 = vadd.f32 %v993, %v1028
  %v1043 = vadd.f32 %v994, %v1031
  %v1044 = vadd.f32 %v995, %v1034
  %v1045 = vadd.f32 %v996, %v1037
  %s1046 = scalar_lea.vmem %s332, 1
  %v1047 = vld [vmem:[%s1046] ss:$4 sm:$0x3]
  %v1049 = vlaneseq
  %v1050 = vshrl.u32 %v1049, 7
  %v1051 = vsub.s32 0, %v1050
  %v1052 = vrot.slane %v1047, %v1051
  %v1053 = vlaneseq
  %v1054 = vshrl.u32 %v1053, 7
  %v1055 = vsub.s32 1, %v1054
  %v1056 = vrot.slane %v1047, %v1055
  %v1059 = vmul.f32 %v1052, %v841
  %v1060 = vmul.f32 %v1056, %v853
  %v1061 = vmul.f32 %v1052, %v842
  %v1062 = vmul.f32 %v1056, %v854
  %v1063 = vmul.f32 %v1052, %v843
  %v1064 = vmul.f32 %v1056, %v855
  %v1065 = vmul.f32 %v1052, %v844
  %v1066 = vmul.f32 %v1056, %v856
  %v1075 = vrot.slane %v1059, 2
  %v1076 = vrot.slane %v1061, 2
  %v1077 = vsel %vm311, %v1075, %v1076
  %v1078 = vrot.slane %v1060, 2
  %v1079 = vrot.slane %v1062, 2
  %v1080 = vsel %vm311, %v1078, %v1079
  %v1081 = vrot.slane %v1063, 2
  %v1082 = vrot.slane %v1065, 2
  %v1083 = vsel %vm311, %v1081, %v1082
  %v1084 = vrot.slane %v1064, 2
  %v1085 = vrot.slane %v1066, 2
  %v1086 = vsel %vm311, %v1084, %v1085
  %v1091 = vadd.f32 %v1042, %v1077
  %v1092 = vadd.f32 %v1043, %v1080
  %v1093 = vadd.f32 %v1044, %v1083
  %v1094 = vadd.f32 %v1045, %v1086
  %s1095 = scalar_lea.vmem %s381, 1
  %v1096 = vld [vmem:[%s1095] ss:$4 sm:$0x3]
  %v1098 = vlaneseq
  %v1099 = vshrl.u32 %v1098, 7
  %v1100 = vsub.s32 0, %v1099
  %v1101 = vrot.slane %v1096, %v1100
  %v1102 = vlaneseq
  %v1103 = vshrl.u32 %v1102, 7
  %v1104 = vsub.s32 1, %v1103
  %v1105 = vrot.slane %v1096, %v1104
  %v1108 = vmul.f32 %v1101, %v801
  %v1109 = vmul.f32 %v1105, %v813
  %v1110 = vmul.f32 %v1101, %v802
  %v1111 = vmul.f32 %v1105, %v814
  %v1112 = vmul.f32 %v1101, %v803
  %v1113 = vmul.f32 %v1105, %v815
  %v1114 = vmul.f32 %v1101, %v804
  %v1115 = vmul.f32 %v1105, %v816
  %v1124 = vrot.slane %v1108, 3
  %v1125 = vrot.slane %v1110, 3
  %v1126 = vsel %vm410, %v1124, %v1125
  %v1127 = vrot.slane %v1109, 3
  %v1128 = vrot.slane %v1111, 3
  %v1129 = vsel %vm410, %v1127, %v1128
  %v1130 = vrot.slane %v1112, 3
  %v1131 = vrot.slane %v1114, 3
  %v1132 = vsel %vm410, %v1130, %v1131
  %v1133 = vrot.slane %v1113, 3
  %v1134 = vrot.slane %v1115, 3
  %v1135 = vsel %vm410, %v1133, %v1134
  %v1140 = vadd.f32 %v1091, %v1126
  %v1141 = vadd.f32 %v1092, %v1129
  %v1142 = vadd.f32 %v1093, %v1132
  %v1143 = vadd.f32 %v1094, %v1135
  %s1144 = scalar_lea.vmem %s431, 1
  %v1145 = vld [vmem:[%s1144] ss:$4 sm:$0x3]
  %v1147 = vlaneseq
  %v1148 = vshrl.u32 %v1147, 7
  %v1149 = vsub.s32 0, %v1148
  %v1150 = vrot.slane %v1145, %v1149
  %v1151 = vlaneseq
  %v1152 = vshrl.u32 %v1151, 7
  %v1153 = vsub.s32 1, %v1152
  %v1154 = vrot.slane %v1145, %v1153
  %v1157 = vmul.f32 %v1150, %v841
  %v1158 = vmul.f32 %v1154, %v853
  %v1159 = vmul.f32 %v1150, %v842
  %v1160 = vmul.f32 %v1154, %v854
  %v1161 = vmul.f32 %v1150, %v843
  %v1162 = vmul.f32 %v1154, %v855
  %v1163 = vmul.f32 %v1150, %v844
  %v1164 = vmul.f32 %v1154, %v856
  %v1173 = vrot.slane %v1157, 3
  %v1174 = vrot.slane %v1159, 3
  %v1175 = vsel %vm410, %v1173, %v1174
  %v1176 = vrot.slane %v1158, 3
  %v1177 = vrot.slane %v1160, 3
  %v1178 = vsel %vm410, %v1176, %v1177
  %v1179 = vrot.slane %v1161, 3
  %v1180 = vrot.slane %v1163, 3
  %v1181 = vsel %vm410, %v1179, %v1180
  %v1182 = vrot.slane %v1162, 3
  %v1183 = vrot.slane %v1164, 3
  %v1184 = vsel %vm410, %v1182, %v1183
  %v1189 = vadd.f32 %v1140, %v1175
  %v1190 = vadd.f32 %v1141, %v1178
  %v1191 = vadd.f32 %v1142, %v1181
  %v1192 = vadd.f32 %v1143, %v1184
  %s1193 = scalar_lea.vmem %s480, 1
  %v1194 = vld [vmem:[%s1193] ss:$4 sm:$0x3]
  %v1196 = vlaneseq
  %v1197 = vshrl.u32 %v1196, 7
  %v1198 = vsub.s32 0, %v1197
  %v1199 = vrot.slane %v1194, %v1198
  %v1200 = vlaneseq
  %v1201 = vshrl.u32 %v1200, 7
  %v1202 = vsub.s32 1, %v1201
  %v1203 = vrot.slane %v1194, %v1202
  %v1206 = vmul.f32 %v1199, %v801
  %v1207 = vmul.f32 %v1203, %v813
  %v1208 = vmul.f32 %v1199, %v802
  %v1209 = vmul.f32 %v1203, %v814
  %v1210 = vmul.f32 %v1199, %v803
  %v1211 = vmul.f32 %v1203, %v815
  %v1212 = vmul.f32 %v1199, %v804
  %v1213 = vmul.f32 %v1203, %v816
  %v1222 = vrot.slane %v1206, 4
  %v1223 = vrot.slane %v1208, 4
  %v1224 = vsel %vm509, %v1222, %v1223
  %v1225 = vrot.slane %v1207, 4
  %v1226 = vrot.slane %v1209, 4
  %v1227 = vsel %vm509, %v1225, %v1226
  %v1228 = vrot.slane %v1210, 4
  %v1229 = vrot.slane %v1212, 4
  %v1230 = vsel %vm509, %v1228, %v1229
  %v1231 = vrot.slane %v1211, 4
  %v1232 = vrot.slane %v1213, 4
  %v1233 = vsel %vm509, %v1231, %v1232
  %v1238 = vadd.f32 %v1189, %v1224
  %v1239 = vadd.f32 %v1190, %v1227
  %v1240 = vadd.f32 %v1191, %v1230
  %v1241 = vadd.f32 %v1192, %v1233
  %s1242 = scalar_lea.vmem %s530, 1
  %v1243 = vld [vmem:[%s1242] ss:$4 sm:$0x3]
  %v1245 = vlaneseq
  %v1246 = vshrl.u32 %v1245, 7
  %v1247 = vsub.s32 0, %v1246
  %v1248 = vrot.slane %v1243, %v1247
  %v1249 = vlaneseq
  %v1250 = vshrl.u32 %v1249, 7
  %v1251 = vsub.s32 1, %v1250
  %v1252 = vrot.slane %v1243, %v1251
  %v1255 = vmul.f32 %v1248, %v841
  %v1256 = vmul.f32 %v1252, %v853
  %v1257 = vmul.f32 %v1248, %v842
  %v1258 = vmul.f32 %v1252, %v854
  %v1259 = vmul.f32 %v1248, %v843
  %v1260 = vmul.f32 %v1252, %v855
  %v1261 = vmul.f32 %v1248, %v844
  %v1262 = vmul.f32 %v1252, %v856
  %v1271 = vrot.slane %v1255, 4
  %v1272 = vrot.slane %v1257, 4
  %v1273 = vsel %vm509, %v1271, %v1272
  %v1274 = vrot.slane %v1256, 4
  %v1275 = vrot.slane %v1258, 4
  %v1276 = vsel %vm509, %v1274, %v1275
  %v1277 = vrot.slane %v1259, 4
  %v1278 = vrot.slane %v1261, 4
  %v1279 = vsel %vm509, %v1277, %v1278
  %v1280 = vrot.slane %v1260, 4
  %v1281 = vrot.slane %v1262, 4
  %v1282 = vsel %vm509, %v1280, %v1281
  %v1287 = vadd.f32 %v1238, %v1273
  %v1288 = vadd.f32 %v1239, %v1276
  %v1289 = vadd.f32 %v1240, %v1279
  %v1290 = vadd.f32 %v1241, %v1282
  %s1291 = scalar_lea.vmem %s579, 1
  %v1292 = vld [vmem:[%s1291] ss:$4 sm:$0x3]
  %v1294 = vlaneseq
  %v1295 = vshrl.u32 %v1294, 7
  %v1296 = vsub.s32 0, %v1295
  %v1297 = vrot.slane %v1292, %v1296
  %v1298 = vlaneseq
  %v1299 = vshrl.u32 %v1298, 7
  %v1300 = vsub.s32 1, %v1299
  %v1301 = vrot.slane %v1292, %v1300
  %v1304 = vmul.f32 %v1297, %v801
  %v1305 = vmul.f32 %v1301, %v813
  %v1306 = vmul.f32 %v1297, %v802
  %v1307 = vmul.f32 %v1301, %v814
  %v1308 = vmul.f32 %v1297, %v803
  %v1309 = vmul.f32 %v1301, %v815
  %v1310 = vmul.f32 %v1297, %v804
  %v1311 = vmul.f32 %v1301, %v816
  %v1320 = vrot.slane %v1304, 5
  %v1321 = vrot.slane %v1306, 5
  %v1322 = vsel %vm73, %v1320, %v1321
  %v1323 = vrot.slane %v1305, 5
  %v1324 = vrot.slane %v1307, 5
  %v1325 = vsel %vm73, %v1323, %v1324
  %v1326 = vrot.slane %v1308, 5
  %v1327 = vrot.slane %v1310, 5
  %v1328 = vsel %vm73, %v1326, %v1327
  %v1329 = vrot.slane %v1309, 5
  %v1330 = vrot.slane %v1311, 5
  %v1331 = vsel %vm73, %v1329, %v1330
  %v1336 = vadd.f32 %v1287, %v1322
  %v1337 = vadd.f32 %v1288, %v1325
  %v1338 = vadd.f32 %v1289, %v1328
  %v1339 = vadd.f32 %v1290, %v1331
  %s1340 = scalar_lea.vmem %s628, 1
  %v1341 = vld [vmem:[%s1340] ss:$4 sm:$0x3]
  %v1343 = vlaneseq
  %v1344 = vshrl.u32 %v1343, 7
  %v1345 = vsub.s32 0, %v1344
  %v1346 = vrot.slane %v1341, %v1345
  %v1347 = vlaneseq
  %v1348 = vshrl.u32 %v1347, 7
  %v1349 = vsub.s32 1, %v1348
  %v1350 = vrot.slane %v1341, %v1349
  %v1353 = vmul.f32 %v1346, %v841
  %v1354 = vmul.f32 %v1350, %v853
  %v1355 = vmul.f32 %v1346, %v842
  %v1356 = vmul.f32 %v1350, %v854
  %v1357 = vmul.f32 %v1346, %v843
  %v1358 = vmul.f32 %v1350, %v855
  %v1359 = vmul.f32 %v1346, %v844
  %v1360 = vmul.f32 %v1350, %v856
  %v1369 = vrot.slane %v1353, 5
  %v1370 = vrot.slane %v1355, 5
  %v1371 = vsel %vm73, %v1369, %v1370
  %v1372 = vrot.slane %v1354, 5
  %v1373 = vrot.slane %v1356, 5
  %v1374 = vsel %vm73, %v1372, %v1373
  %v1375 = vrot.slane %v1357, 5
  %v1376 = vrot.slane %v1359, 5
  %v1377 = vsel %vm73, %v1375, %v1376
  %v1378 = vrot.slane %v1358, 5
  %v1379 = vrot.slane %v1360, 5
  %v1380 = vsel %vm73, %v1378, %v1379
  %v1385 = vadd.f32 %v1336, %v1371
  %v1386 = vadd.f32 %v1337, %v1374
  %v1387 = vadd.f32 %v1338, %v1377
  %v1388 = vadd.f32 %v1339, %v1380
  %s1389 = scalar_lea.vmem %s677, 1
  %v1390 = vld [vmem:[%s1389] ss:$4 sm:$0x3]
  %v1392 = vlaneseq
  %v1393 = vshrl.u32 %v1392, 7
  %v1394 = vsub.s32 0, %v1393
  %v1395 = vrot.slane %v1390, %v1394
  %v1396 = vlaneseq
  %v1397 = vshrl.u32 %v1396, 7
  %v1398 = vsub.s32 1, %v1397
  %v1399 = vrot.slane %v1390, %v1398
  %v1402 = vmul.f32 %v1395, %v801
  %v1403 = vmul.f32 %v1399, %v813
  %v1404 = vmul.f32 %v1395, %v802
  %v1405 = vmul.f32 %v1399, %v814
  %v1406 = vmul.f32 %v1395, %v803
  %v1407 = vmul.f32 %v1399, %v815
  %v1408 = vmul.f32 %v1395, %v804
  %v1409 = vmul.f32 %v1399, %v816
  %v1418 = vrot.slane %v1402, 6
  %v1419 = vrot.slane %v1404, 6
  %v1420 = vsel %vm706, %v1418, %v1419
  %v1421 = vrot.slane %v1403, 6
  %v1422 = vrot.slane %v1405, 6
  %v1423 = vsel %vm706, %v1421, %v1422
  %v1424 = vrot.slane %v1406, 6
  %v1425 = vrot.slane %v1408, 6
  %v1426 = vsel %vm706, %v1424, %v1425
  %v1427 = vrot.slane %v1407, 6
  %v1428 = vrot.slane %v1409, 6
  %v1429 = vsel %vm706, %v1427, %v1428
  %v1434 = vadd.f32 %v1385, %v1420
  %v1435 = vadd.f32 %v1386, %v1423
  %v1436 = vadd.f32 %v1387, %v1426
  %v1437 = vadd.f32 %v1388, %v1429
  %s1438 = scalar_lea.vmem %s727, 1
  %v1439 = vld [vmem:[%s1438] ss:$4 sm:$0x3]
  %v1441 = vlaneseq
  %v1442 = vshrl.u32 %v1441, 7
  %v1443 = vsub.s32 0, %v1442
  %v1444 = vrot.slane %v1439, %v1443
  %v1445 = vlaneseq
  %v1446 = vshrl.u32 %v1445, 7
  %v1447 = vsub.s32 1, %v1446
  %v1448 = vrot.slane %v1439, %v1447
  %v1451 = vmul.f32 %v1444, %v841
  %v1452 = vmul.f32 %v1448, %v853
  %v1453 = vmul.f32 %v1444, %v842
  %v1454 = vmul.f32 %v1448, %v854
  %v1455 = vmul.f32 %v1444, %v843
  %v1456 = vmul.f32 %v1448, %v855
  %v1457 = vmul.f32 %v1444, %v844
  %v1458 = vmul.f32 %v1448, %v856
  %v1467 = vrot.slane %v1451, 6
  %v1468 = vrot.slane %v1453, 6
  %v1469 = vsel %vm706, %v1467, %v1468
  %v1470 = vrot.slane %v1452, 6
  %v1471 = vrot.slane %v1454, 6
  %v1472 = vsel %vm706, %v1470, %v1471
  %v1473 = vrot.slane %v1455, 6
  %v1474 = vrot.slane %v1457, 6
  %v1475 = vsel %vm706, %v1473, %v1474
  %v1476 = vrot.slane %v1456, 6
  %v1477 = vrot.slane %v1458, 6
  %v1478 = vsel %vm706, %v1476, %v1477
  %v1483 = vadd.f32 %v1434, %v1469
  %v1484 = vadd.f32 %v1435, %v1472
  %v1485 = vadd.f32 %v1436, %v1475
  %v1486 = vadd.f32 %v1437, %v1478
  %1487 = vrot.lane.b32.xlu0 %v74, 126
  %v1488 = vpop.permute.xlu0 %1487
  %1489 = vrot.lane.b32.xlu0 %v75, 126
  %v1490 = vpop.permute.xlu0 %1489
  %1491 = vrot.lane.b32.xlu0 %v78, 126
  %v1492 = vpop.permute.xlu0 %1491
  %1493 = vrot.lane.b32.xlu0 %v79, 126
  %v1494 = vpop.permute.xlu0 %1493
  %1495 = vrot.lane.b32.xlu0 %v76, 126
  %v1496 = vpop.permute.xlu0 %1495
  %1497 = vrot.lane.b32.xlu0 %v77, 126
  %v1498 = vpop.permute.xlu0 %1497
  %1499 = vrot.lane.b32.xlu0 %v80, 126
  %v1500 = vpop.permute.xlu0 %1499
  %1501 = vrot.lane.b32.xlu0 %v81, 126
  %v1502 = vpop.permute.xlu0 %1501
  %vm1503 = vcmask 1031168
  %v1504 = vsel %vm1503, %v1488, %v1490
  %v1505 = vsel %vm1503, %v1492, %v1494
  %v1506 = vsel %vm1503, %v1496, %v1498
  %v1507 = vsel %vm1503, %v1500, %v1502
  %v1516 = vsel %vm1503, %v1490, 0.0
  %v1517 = vsel %vm1503, %v1494, 0.0
  %v1518 = vsel %vm1503, %v1498, 0.0
  %v1519 = vsel %vm1503, %v1502, 0.0
  %1520 = vrot.lane.b32.xlu0 %v122, 126
  %v1521 = vpop.permute.xlu0 %1520
  %1522 = vrot.lane.b32.xlu0 %v123, 126
  %v1523 = vpop.permute.xlu0 %1522
  %1524 = vrot.lane.b32.xlu0 %v126, 126
  %v1525 = vpop.permute.xlu0 %1524
  %1526 = vrot.lane.b32.xlu0 %v127, 126
  %v1527 = vpop.permute.xlu0 %1526
  %1528 = vrot.lane.b32.xlu0 %v124, 126
  %v1529 = vpop.permute.xlu0 %1528
  %1530 = vrot.lane.b32.xlu0 %v125, 126
  %v1531 = vpop.permute.xlu0 %1530
  %1532 = vrot.lane.b32.xlu0 %v128, 126
  %v1533 = vpop.permute.xlu0 %1532
  %1534 = vrot.lane.b32.xlu0 %v129, 126
  %v1535 = vpop.permute.xlu0 %1534
  %v1536 = vsel %vm1503, %v1521, %v1523
  %v1537 = vsel %vm1503, %v1525, %v1527
  %v1538 = vsel %vm1503, %v1529, %v1531
  %v1539 = vsel %vm1503, %v1533, %v1535
  %v1548 = vsel %vm1503, %v1523, 0.0
  %v1549 = vsel %vm1503, %v1527, 0.0
  %v1550 = vsel %vm1503, %v1531, 0.0
  %v1551 = vsel %vm1503, %v1535, 0.0
  %s1552 = scalar_lea.vmem %s1, 2
  %v1553 = vld [vmem:[%s1552] ss:$4 sm:$0x3]
  %v1555 = vlaneseq
  %v1556 = vshrl.u32 %v1555, 7
  %v1557 = vsub.s32 0, %v1556
  %v1558 = vrot.slane %v1553, %v1557
  %v1559 = vlaneseq
  %v1560 = vshrl.u32 %v1559, 7
  %v1561 = vsub.s32 1, %v1560
  %v1562 = vrot.slane %v1553, %v1561
  %v1565 = vmul.f32 %v1558, %v1504
  %v1566 = vmul.f32 %v1562, %v1516
  %v1567 = vmul.f32 %v1558, %v1506
  %v1568 = vmul.f32 %v1562, %v1518
  %v1569 = vadd.f32 %v1483, %v1565
  %v1570 = vadd.f32 %v1484, %v1566
  %v1571 = vadd.f32 %v1485, %v1567
  %v1572 = vadd.f32 %v1486, %v1568
  %s1573 = scalar_lea.vmem %s162, 2
  %v1574 = vld [vmem:[%s1573] ss:$4 sm:$0x3]
  %v1576 = vlaneseq
  %v1577 = vshrl.u32 %v1576, 7
  %v1578 = vsub.s32 0, %v1577
  %v1579 = vrot.slane %v1574, %v1578
  %v1580 = vlaneseq
  %v1581 = vshrl.u32 %v1580, 7
  %v1582 = vsub.s32 1, %v1581
  %v1583 = vrot.slane %v1574, %v1582
  %v1586 = vmul.f32 %v1579, %v1536
  %v1587 = vmul.f32 %v1583, %v1548
  %v1588 = vmul.f32 %v1579, %v1538
  %v1589 = vmul.f32 %v1583, %v1550
  %v1590 = vadd.f32 %v1569, %v1586
  %v1591 = vadd.f32 %v1570, %v1587
  %v1592 = vadd.f32 %v1571, %v1588
  %v1593 = vadd.f32 %v1572, %v1589
  %s1594 = scalar_lea.vmem %s183, 2
  %v1595 = vld [vmem:[%s1594] ss:$4 sm:$0x3]
  %v1597 = vlaneseq
  %v1598 = vshrl.u32 %v1597, 7
  %v1599 = vsub.s32 0, %v1598
  %v1600 = vrot.slane %v1595, %v1599
  %v1601 = vlaneseq
  %v1602 = vshrl.u32 %v1601, 7
  %v1603 = vsub.s32 1, %v1602
  %v1604 = vrot.slane %v1595, %v1603
  %v1607 = vmul.f32 %v1600, %v1504
  %v1608 = vmul.f32 %v1604, %v1516
  %v1609 = vmul.f32 %v1600, %v1505
  %v1610 = vmul.f32 %v1604, %v1517
  %v1611 = vmul.f32 %v1600, %v1506
  %v1612 = vmul.f32 %v1604, %v1518
  %v1613 = vmul.f32 %v1600, %v1507
  %v1614 = vmul.f32 %v1604, %v1519
  %v1623 = vrot.slane %v1607, 1
  %v1624 = vrot.slane %v1609, 1
  %v1625 = vsel %vm212, %v1623, %v1624
  %v1626 = vrot.slane %v1608, 1
  %v1627 = vrot.slane %v1610, 1
  %v1628 = vsel %vm212, %v1626, %v1627
  %v1629 = vrot.slane %v1611, 1
  %v1630 = vrot.slane %v1613, 1
  %v1631 = vsel %vm212, %v1629, %v1630
  %v1632 = vrot.slane %v1612, 1
  %v1633 = vrot.slane %v1614, 1
  %v1634 = vsel %vm212, %v1632, %v1633
  %v1639 = vadd.f32 %v1590, %v1625
  %v1640 = vadd.f32 %v1591, %v1628
  %v1641 = vadd.f32 %v1592, %v1631
  %v1642 = vadd.f32 %v1593, %v1634
  %s1643 = scalar_lea.vmem %s233, 2
  %v1644 = vld [vmem:[%s1643] ss:$4 sm:$0x3]
  %v1646 = vlaneseq
  %v1647 = vshrl.u32 %v1646, 7
  %v1648 = vsub.s32 0, %v1647
  %v1649 = vrot.slane %v1644, %v1648
  %v1650 = vlaneseq
  %v1651 = vshrl.u32 %v1650, 7
  %v1652 = vsub.s32 1, %v1651
  %v1653 = vrot.slane %v1644, %v1652
  %v1656 = vmul.f32 %v1649, %v1536
  %v1657 = vmul.f32 %v1653, %v1548
  %v1658 = vmul.f32 %v1649, %v1537
  %v1659 = vmul.f32 %v1653, %v1549
  %v1660 = vmul.f32 %v1649, %v1538
  %v1661 = vmul.f32 %v1653, %v1550
  %v1662 = vmul.f32 %v1649, %v1539
  %v1663 = vmul.f32 %v1653, %v1551
  %v1672 = vrot.slane %v1656, 1
  %v1673 = vrot.slane %v1658, 1
  %v1674 = vsel %vm212, %v1672, %v1673
  %v1675 = vrot.slane %v1657, 1
  %v1676 = vrot.slane %v1659, 1
  %v1677 = vsel %vm212, %v1675, %v1676
  %v1678 = vrot.slane %v1660, 1
  %v1679 = vrot.slane %v1662, 1
  %v1680 = vsel %vm212, %v1678, %v1679
  %v1681 = vrot.slane %v1661, 1
  %v1682 = vrot.slane %v1663, 1
  %v1683 = vsel %vm212, %v1681, %v1682
  %v1688 = vadd.f32 %v1639, %v1674
  %v1689 = vadd.f32 %v1640, %v1677
  %v1690 = vadd.f32 %v1641, %v1680
  %v1691 = vadd.f32 %v1642, %v1683
  %s1692 = scalar_lea.vmem %s282, 2
  %v1693 = vld [vmem:[%s1692] ss:$4 sm:$0x3]
  %v1695 = vlaneseq
  %v1696 = vshrl.u32 %v1695, 7
  %v1697 = vsub.s32 0, %v1696
  %v1698 = vrot.slane %v1693, %v1697
  %v1699 = vlaneseq
  %v1700 = vshrl.u32 %v1699, 7
  %v1701 = vsub.s32 1, %v1700
  %v1702 = vrot.slane %v1693, %v1701
  %v1705 = vmul.f32 %v1698, %v1504
  %v1706 = vmul.f32 %v1702, %v1516
  %v1707 = vmul.f32 %v1698, %v1505
  %v1708 = vmul.f32 %v1702, %v1517
  %v1709 = vmul.f32 %v1698, %v1506
  %v1710 = vmul.f32 %v1702, %v1518
  %v1711 = vmul.f32 %v1698, %v1507
  %v1712 = vmul.f32 %v1702, %v1519
  %v1721 = vrot.slane %v1705, 2
  %v1722 = vrot.slane %v1707, 2
  %v1723 = vsel %vm311, %v1721, %v1722
  %v1724 = vrot.slane %v1706, 2
  %v1725 = vrot.slane %v1708, 2
  %v1726 = vsel %vm311, %v1724, %v1725
  %v1727 = vrot.slane %v1709, 2
  %v1728 = vrot.slane %v1711, 2
  %v1729 = vsel %vm311, %v1727, %v1728
  %v1730 = vrot.slane %v1710, 2
  %v1731 = vrot.slane %v1712, 2
  %v1732 = vsel %vm311, %v1730, %v1731
  %v1737 = vadd.f32 %v1688, %v1723
  %v1738 = vadd.f32 %v1689, %v1726
  %v1739 = vadd.f32 %v1690, %v1729
  %v1740 = vadd.f32 %v1691, %v1732
  %s1741 = scalar_lea.vmem %s332, 2
  %v1742 = vld [vmem:[%s1741] ss:$4 sm:$0x3]
  %v1744 = vlaneseq
  %v1745 = vshrl.u32 %v1744, 7
  %v1746 = vsub.s32 0, %v1745
  %v1747 = vrot.slane %v1742, %v1746
  %v1748 = vlaneseq
  %v1749 = vshrl.u32 %v1748, 7
  %v1750 = vsub.s32 1, %v1749
  %v1751 = vrot.slane %v1742, %v1750
  %v1754 = vmul.f32 %v1747, %v1536
  %v1755 = vmul.f32 %v1751, %v1548
  %v1756 = vmul.f32 %v1747, %v1537
  %v1757 = vmul.f32 %v1751, %v1549
  %v1758 = vmul.f32 %v1747, %v1538
  %v1759 = vmul.f32 %v1751, %v1550
  %v1760 = vmul.f32 %v1747, %v1539
  %v1761 = vmul.f32 %v1751, %v1551
  %v1770 = vrot.slane %v1754, 2
  %v1771 = vrot.slane %v1756, 2
  %v1772 = vsel %vm311, %v1770, %v1771
  %v1773 = vrot.slane %v1755, 2
  %v1774 = vrot.slane %v1757, 2
  %v1775 = vsel %vm311, %v1773, %v1774
  %v1776 = vrot.slane %v1758, 2
  %v1777 = vrot.slane %v1760, 2
  %v1778 = vsel %vm311, %v1776, %v1777
  %v1779 = vrot.slane %v1759, 2
  %v1780 = vrot.slane %v1761, 2
  %v1781 = vsel %vm311, %v1779, %v1780
  %v1786 = vadd.f32 %v1737, %v1772
  %v1787 = vadd.f32 %v1738, %v1775
  %v1788 = vadd.f32 %v1739, %v1778
  %v1789 = vadd.f32 %v1740, %v1781
  %s1790 = scalar_lea.vmem %s381, 2
  %v1791 = vld [vmem:[%s1790] ss:$4 sm:$0x3]
  %v1793 = vlaneseq
  %v1794 = vshrl.u32 %v1793, 7
  %v1795 = vsub.s32 0, %v1794
  %v1796 = vrot.slane %v1791, %v1795
  %v1797 = vlaneseq
  %v1798 = vshrl.u32 %v1797, 7
  %v1799 = vsub.s32 1, %v1798
  %v1800 = vrot.slane %v1791, %v1799
  %v1803 = vmul.f32 %v1796, %v1504
  %v1804 = vmul.f32 %v1800, %v1516
  %v1805 = vmul.f32 %v1796, %v1505
  %v1806 = vmul.f32 %v1800, %v1517
  %v1807 = vmul.f32 %v1796, %v1506
  %v1808 = vmul.f32 %v1800, %v1518
  %v1809 = vmul.f32 %v1796, %v1507
  %v1810 = vmul.f32 %v1800, %v1519
  %v1819 = vrot.slane %v1803, 3
  %v1820 = vrot.slane %v1805, 3
  %v1821 = vsel %vm410, %v1819, %v1820
  %v1822 = vrot.slane %v1804, 3
  %v1823 = vrot.slane %v1806, 3
  %v1824 = vsel %vm410, %v1822, %v1823
  %v1825 = vrot.slane %v1807, 3
  %v1826 = vrot.slane %v1809, 3
  %v1827 = vsel %vm410, %v1825, %v1826
  %v1828 = vrot.slane %v1808, 3
  %v1829 = vrot.slane %v1810, 3
  %v1830 = vsel %vm410, %v1828, %v1829
  %v1835 = vadd.f32 %v1786, %v1821
  %v1836 = vadd.f32 %v1787, %v1824
  %v1837 = vadd.f32 %v1788, %v1827
  %v1838 = vadd.f32 %v1789, %v1830
  %s1839 = scalar_lea.vmem %s431, 2
  %v1840 = vld [vmem:[%s1839] ss:$4 sm:$0x3]
  %v1842 = vlaneseq
  %v1843 = vshrl.u32 %v1842, 7
  %v1844 = vsub.s32 0, %v1843
  %v1845 = vrot.slane %v1840, %v1844
  %v1846 = vlaneseq
  %v1847 = vshrl.u32 %v1846, 7
  %v1848 = vsub.s32 1, %v1847
  %v1849 = vrot.slane %v1840, %v1848
  %v1852 = vmul.f32 %v1845, %v1536
  %v1853 = vmul.f32 %v1849, %v1548
  %v1854 = vmul.f32 %v1845, %v1537
  %v1855 = vmul.f32 %v1849, %v1549
  %v1856 = vmul.f32 %v1845, %v1538
  %v1857 = vmul.f32 %v1849, %v1550
  %v1858 = vmul.f32 %v1845, %v1539
  %v1859 = vmul.f32 %v1849, %v1551
  %v1868 = vrot.slane %v1852, 3
  %v1869 = vrot.slane %v1854, 3
  %v1870 = vsel %vm410, %v1868, %v1869
  %v1871 = vrot.slane %v1853, 3
  %v1872 = vrot.slane %v1855, 3
  %v1873 = vsel %vm410, %v1871, %v1872
  %v1874 = vrot.slane %v1856, 3
  %v1875 = vrot.slane %v1858, 3
  %v1876 = vsel %vm410, %v1874, %v1875
  %v1877 = vrot.slane %v1857, 3
  %v1878 = vrot.slane %v1859, 3
  %v1879 = vsel %vm410, %v1877, %v1878
  %v1884 = vadd.f32 %v1835, %v1870
  %v1885 = vadd.f32 %v1836, %v1873
  %v1886 = vadd.f32 %v1837, %v1876
  %v1887 = vadd.f32 %v1838, %v1879
  %s1888 = scalar_lea.vmem %s480, 2
  %v1889 = vld [vmem:[%s1888] ss:$4 sm:$0x3]
  %v1891 = vlaneseq
  %v1892 = vshrl.u32 %v1891, 7
  %v1893 = vsub.s32 0, %v1892
  %v1894 = vrot.slane %v1889, %v1893
  %v1895 = vlaneseq
  %v1896 = vshrl.u32 %v1895, 7
  %v1897 = vsub.s32 1, %v1896
  %v1898 = vrot.slane %v1889, %v1897
  %v1901 = vmul.f32 %v1894, %v1504
  %v1902 = vmul.f32 %v1898, %v1516
  %v1903 = vmul.f32 %v1894, %v1505
  %v1904 = vmul.f32 %v1898, %v1517
  %v1905 = vmul.f32 %v1894, %v1506
  %v1906 = vmul.f32 %v1898, %v1518
  %v1907 = vmul.f32 %v1894, %v1507
  %v1908 = vmul.f32 %v1898, %v1519
  %v1917 = vrot.slane %v1901, 4
  %v1918 = vrot.slane %v1903, 4
  %v1919 = vsel %vm509, %v1917, %v1918
  %v1920 = vrot.slane %v1902, 4
  %v1921 = vrot.slane %v1904, 4
  %v1922 = vsel %vm509, %v1920, %v1921
  %v1923 = vrot.slane %v1905, 4
  %v1924 = vrot.slane %v1907, 4
  %v1925 = vsel %vm509, %v1923, %v1924
  %v1926 = vrot.slane %v1906, 4
  %v1927 = vrot.slane %v1908, 4
  %v1928 = vsel %vm509, %v1926, %v1927
  %v1933 = vadd.f32 %v1884, %v1919
  %v1934 = vadd.f32 %v1885, %v1922
  %v1935 = vadd.f32 %v1886, %v1925
  %v1936 = vadd.f32 %v1887, %v1928
  %s1937 = scalar_lea.vmem %s530, 2
  %v1938 = vld [vmem:[%s1937] ss:$4 sm:$0x3]
  %v1940 = vlaneseq
  %v1941 = vshrl.u32 %v1940, 7
  %v1942 = vsub.s32 0, %v1941
  %v1943 = vrot.slane %v1938, %v1942
  %v1944 = vlaneseq
  %v1945 = vshrl.u32 %v1944, 7
  %v1946 = vsub.s32 1, %v1945
  %v1947 = vrot.slane %v1938, %v1946
  %v1950 = vmul.f32 %v1943, %v1536
  %v1951 = vmul.f32 %v1947, %v1548
  %v1952 = vmul.f32 %v1943, %v1537
  %v1953 = vmul.f32 %v1947, %v1549
  %v1954 = vmul.f32 %v1943, %v1538
  %v1955 = vmul.f32 %v1947, %v1550
  %v1956 = vmul.f32 %v1943, %v1539
  %v1957 = vmul.f32 %v1947, %v1551
  %v1966 = vrot.slane %v1950, 4
  %v1967 = vrot.slane %v1952, 4
  %v1968 = vsel %vm509, %v1966, %v1967
  %v1969 = vrot.slane %v1951, 4
  %v1970 = vrot.slane %v1953, 4
  %v1971 = vsel %vm509, %v1969, %v1970
  %v1972 = vrot.slane %v1954, 4
  %v1973 = vrot.slane %v1956, 4
  %v1974 = vsel %vm509, %v1972, %v1973
  %v1975 = vrot.slane %v1955, 4
  %v1976 = vrot.slane %v1957, 4
  %v1977 = vsel %vm509, %v1975, %v1976
  %v1982 = vadd.f32 %v1933, %v1968
  %v1983 = vadd.f32 %v1934, %v1971
  %v1984 = vadd.f32 %v1935, %v1974
  %v1985 = vadd.f32 %v1936, %v1977
  %s1986 = scalar_lea.vmem %s579, 2
  %v1987 = vld [vmem:[%s1986] ss:$4 sm:$0x3]
  %v1989 = vlaneseq
  %v1990 = vshrl.u32 %v1989, 7
  %v1991 = vsub.s32 0, %v1990
  %v1992 = vrot.slane %v1987, %v1991
  %v1993 = vlaneseq
  %v1994 = vshrl.u32 %v1993, 7
  %v1995 = vsub.s32 1, %v1994
  %v1996 = vrot.slane %v1987, %v1995
  %v1999 = vmul.f32 %v1992, %v1504
  %v2000 = vmul.f32 %v1996, %v1516
  %v2001 = vmul.f32 %v1992, %v1505
  %v2002 = vmul.f32 %v1996, %v1517
  %v2003 = vmul.f32 %v1992, %v1506
  %v2004 = vmul.f32 %v1996, %v1518
  %v2005 = vmul.f32 %v1992, %v1507
  %v2006 = vmul.f32 %v1996, %v1519
  %v2015 = vrot.slane %v1999, 5
  %v2016 = vrot.slane %v2001, 5
  %v2017 = vsel %vm73, %v2015, %v2016
  %v2018 = vrot.slane %v2000, 5
  %v2019 = vrot.slane %v2002, 5
  %v2020 = vsel %vm73, %v2018, %v2019
  %v2021 = vrot.slane %v2003, 5
  %v2022 = vrot.slane %v2005, 5
  %v2023 = vsel %vm73, %v2021, %v2022
  %v2024 = vrot.slane %v2004, 5
  %v2025 = vrot.slane %v2006, 5
  %v2026 = vsel %vm73, %v2024, %v2025
  %v2031 = vadd.f32 %v1982, %v2017
  %v2032 = vadd.f32 %v1983, %v2020
  %v2033 = vadd.f32 %v1984, %v2023
  %v2034 = vadd.f32 %v1985, %v2026
  %s2035 = scalar_lea.vmem %s628, 2
  %v2036 = vld [vmem:[%s2035] ss:$4 sm:$0x3]
  %v2038 = vlaneseq
  %v2039 = vshrl.u32 %v2038, 7
  %v2040 = vsub.s32 0, %v2039
  %v2041 = vrot.slane %v2036, %v2040
  %v2042 = vlaneseq
  %v2043 = vshrl.u32 %v2042, 7
  %v2044 = vsub.s32 1, %v2043
  %v2045 = vrot.slane %v2036, %v2044
  %v2048 = vmul.f32 %v2041, %v1536
  %v2049 = vmul.f32 %v2045, %v1548
  %v2050 = vmul.f32 %v2041, %v1537
  %v2051 = vmul.f32 %v2045, %v1549
  %v2052 = vmul.f32 %v2041, %v1538
  %v2053 = vmul.f32 %v2045, %v1550
  %v2054 = vmul.f32 %v2041, %v1539
  %v2055 = vmul.f32 %v2045, %v1551
  %v2064 = vrot.slane %v2048, 5
  %v2065 = vrot.slane %v2050, 5
  %v2066 = vsel %vm73, %v2064, %v2065
  %v2067 = vrot.slane %v2049, 5
  %v2068 = vrot.slane %v2051, 5
  %v2069 = vsel %vm73, %v2067, %v2068
  %v2070 = vrot.slane %v2052, 5
  %v2071 = vrot.slane %v2054, 5
  %v2072 = vsel %vm73, %v2070, %v2071
  %v2073 = vrot.slane %v2053, 5
  %v2074 = vrot.slane %v2055, 5
  %v2075 = vsel %vm73, %v2073, %v2074
  %v2080 = vadd.f32 %v2031, %v2066
  %v2081 = vadd.f32 %v2032, %v2069
  %v2082 = vadd.f32 %v2033, %v2072
  %v2083 = vadd.f32 %v2034, %v2075
  %s2084 = scalar_lea.vmem %s677, 2
  %v2085 = vld [vmem:[%s2084] ss:$4 sm:$0x3]
  %v2087 = vlaneseq
  %v2088 = vshrl.u32 %v2087, 7
  %v2089 = vsub.s32 0, %v2088
  %v2090 = vrot.slane %v2085, %v2089
  %v2091 = vlaneseq
  %v2092 = vshrl.u32 %v2091, 7
  %v2093 = vsub.s32 1, %v2092
  %v2094 = vrot.slane %v2085, %v2093
  %v2097 = vmul.f32 %v2090, %v1504
  %v2098 = vmul.f32 %v2094, %v1516
  %v2099 = vmul.f32 %v2090, %v1505
  %v2100 = vmul.f32 %v2094, %v1517
  %v2101 = vmul.f32 %v2090, %v1506
  %v2102 = vmul.f32 %v2094, %v1518
  %v2103 = vmul.f32 %v2090, %v1507
  %v2104 = vmul.f32 %v2094, %v1519
  %v2113 = vrot.slane %v2097, 6
  %v2114 = vrot.slane %v2099, 6
  %v2115 = vsel %vm706, %v2113, %v2114
  %v2116 = vrot.slane %v2098, 6
  %v2117 = vrot.slane %v2100, 6
  %v2118 = vsel %vm706, %v2116, %v2117
  %v2119 = vrot.slane %v2101, 6
  %v2120 = vrot.slane %v2103, 6
  %v2121 = vsel %vm706, %v2119, %v2120
  %v2122 = vrot.slane %v2102, 6
  %v2123 = vrot.slane %v2104, 6
  %v2124 = vsel %vm706, %v2122, %v2123
  %v2129 = vadd.f32 %v2080, %v2115
  %v2130 = vadd.f32 %v2081, %v2118
  %v2131 = vadd.f32 %v2082, %v2121
  %v2132 = vadd.f32 %v2083, %v2124
  %s2133 = scalar_lea.vmem %s727, 2
  %v2134 = vld [vmem:[%s2133] ss:$4 sm:$0x3]
  %v2136 = vlaneseq
  %v2137 = vshrl.u32 %v2136, 7
  %v2138 = vsub.s32 0, %v2137
  %v2139 = vrot.slane %v2134, %v2138
  %v2140 = vlaneseq
  %v2141 = vshrl.u32 %v2140, 7
  %v2142 = vsub.s32 1, %v2141
  %v2143 = vrot.slane %v2134, %v2142
  %v2146 = vmul.f32 %v2139, %v1536
  %v2147 = vmul.f32 %v2143, %v1548
  %v2148 = vmul.f32 %v2139, %v1537
  %v2149 = vmul.f32 %v2143, %v1549
  %v2150 = vmul.f32 %v2139, %v1538
  %v2151 = vmul.f32 %v2143, %v1550
  %v2152 = vmul.f32 %v2139, %v1539
  %v2153 = vmul.f32 %v2143, %v1551
  %v2162 = vrot.slane %v2146, 6
  %v2163 = vrot.slane %v2148, 6
  %v2164 = vsel %vm706, %v2162, %v2163
  %v2165 = vrot.slane %v2147, 6
  %v2166 = vrot.slane %v2149, 6
  %v2167 = vsel %vm706, %v2165, %v2166
  %v2168 = vrot.slane %v2150, 6
  %v2169 = vrot.slane %v2152, 6
  %v2170 = vsel %vm706, %v2168, %v2169
  %v2171 = vrot.slane %v2151, 6
  %v2172 = vrot.slane %v2153, 6
  %v2173 = vsel %vm706, %v2171, %v2172
  %v2178 = vadd.f32 %v2129, %v2164
  %v2179 = vadd.f32 %v2130, %v2167
  %v2180 = vadd.f32 %v2131, %v2170
  %v2181 = vadd.f32 %v2132, %v2173
  %2182 = vrot.lane.b32.xlu0 %v74, 125
  %v2183 = vpop.permute.xlu0 %2182
  %2184 = vrot.lane.b32.xlu0 %v75, 125
  %v2185 = vpop.permute.xlu0 %2184
  %2186 = vrot.lane.b32.xlu0 %v78, 125
  %v2187 = vpop.permute.xlu0 %2186
  %2188 = vrot.lane.b32.xlu0 %v79, 125
  %v2189 = vpop.permute.xlu0 %2188
  %2190 = vrot.lane.b32.xlu0 %v76, 125
  %v2191 = vpop.permute.xlu0 %2190
  %2192 = vrot.lane.b32.xlu0 %v77, 125
  %v2193 = vpop.permute.xlu0 %2192
  %2194 = vrot.lane.b32.xlu0 %v80, 125
  %v2195 = vpop.permute.xlu0 %2194
  %2196 = vrot.lane.b32.xlu0 %v81, 125
  %v2197 = vpop.permute.xlu0 %2196
  %vm2198 = vcmask 1022976
  %v2199 = vsel %vm2198, %v2183, %v2185
  %v2200 = vsel %vm2198, %v2187, %v2189
  %v2201 = vsel %vm2198, %v2191, %v2193
  %v2202 = vsel %vm2198, %v2195, %v2197
  %v2211 = vsel %vm2198, %v2185, 0.0
  %v2212 = vsel %vm2198, %v2189, 0.0
  %v2213 = vsel %vm2198, %v2193, 0.0
  %v2214 = vsel %vm2198, %v2197, 0.0
  %2215 = vrot.lane.b32.xlu0 %v122, 125
  %v2216 = vpop.permute.xlu0 %2215
  %2217 = vrot.lane.b32.xlu0 %v123, 125
  %v2218 = vpop.permute.xlu0 %2217
  %2219 = vrot.lane.b32.xlu0 %v126, 125
  %v2220 = vpop.permute.xlu0 %2219
  %2221 = vrot.lane.b32.xlu0 %v127, 125
  %v2222 = vpop.permute.xlu0 %2221
  %2223 = vrot.lane.b32.xlu0 %v124, 125
  %v2224 = vpop.permute.xlu0 %2223
  %2225 = vrot.lane.b32.xlu0 %v125, 125
  %v2226 = vpop.permute.xlu0 %2225
  %2227 = vrot.lane.b32.xlu0 %v128, 125
  %v2228 = vpop.permute.xlu0 %2227
  %2229 = vrot.lane.b32.xlu0 %v129, 125
  %v2230 = vpop.permute.xlu0 %2229
  %v2231 = vsel %vm2198, %v2216, %v2218
  %v2232 = vsel %vm2198, %v2220, %v2222
  %v2233 = vsel %vm2198, %v2224, %v2226
  %v2234 = vsel %vm2198, %v2228, %v2230
  %v2243 = vsel %vm2198, %v2218, 0.0
  %v2244 = vsel %vm2198, %v2222, 0.0
  %v2245 = vsel %vm2198, %v2226, 0.0
  %v2246 = vsel %vm2198, %v2230, 0.0
  %s2247 = scalar_lea.vmem %s1, 3
  %v2248 = vld [vmem:[%s2247] ss:$4 sm:$0x3]
  %v2250 = vlaneseq
  %v2251 = vshrl.u32 %v2250, 7
  %v2252 = vsub.s32 0, %v2251
  %v2253 = vrot.slane %v2248, %v2252
  %v2254 = vlaneseq
  %v2255 = vshrl.u32 %v2254, 7
  %v2256 = vsub.s32 1, %v2255
  %v2257 = vrot.slane %v2248, %v2256
  %v2260 = vmul.f32 %v2253, %v2199
  %v2261 = vmul.f32 %v2257, %v2211
  %v2262 = vmul.f32 %v2253, %v2201
  %v2263 = vmul.f32 %v2257, %v2213
  %v2264 = vadd.f32 %v2178, %v2260
  %v2265 = vadd.f32 %v2179, %v2261
  %v2266 = vadd.f32 %v2180, %v2262
  %v2267 = vadd.f32 %v2181, %v2263
  %s2268 = scalar_lea.vmem %s162, 3
  %v2269 = vld [vmem:[%s2268] ss:$4 sm:$0x3]
  %v2271 = vlaneseq
  %v2272 = vshrl.u32 %v2271, 7
  %v2273 = vsub.s32 0, %v2272
  %v2274 = vrot.slane %v2269, %v2273
  %v2275 = vlaneseq
  %v2276 = vshrl.u32 %v2275, 7
  %v2277 = vsub.s32 1, %v2276
  %v2278 = vrot.slane %v2269, %v2277
  %v2281 = vmul.f32 %v2274, %v2231
  %v2282 = vmul.f32 %v2278, %v2243
  %v2283 = vmul.f32 %v2274, %v2233
  %v2284 = vmul.f32 %v2278, %v2245
  %v2285 = vadd.f32 %v2264, %v2281
  %v2286 = vadd.f32 %v2265, %v2282
  %v2287 = vadd.f32 %v2266, %v2283
  %v2288 = vadd.f32 %v2267, %v2284
  %s2289 = scalar_lea.vmem %s183, 3
  %v2290 = vld [vmem:[%s2289] ss:$4 sm:$0x3]
  %v2292 = vlaneseq
  %v2293 = vshrl.u32 %v2292, 7
  %v2294 = vsub.s32 0, %v2293
  %v2295 = vrot.slane %v2290, %v2294
  %v2296 = vlaneseq
  %v2297 = vshrl.u32 %v2296, 7
  %v2298 = vsub.s32 1, %v2297
  %v2299 = vrot.slane %v2290, %v2298
  %v2302 = vmul.f32 %v2295, %v2199
  %v2303 = vmul.f32 %v2299, %v2211
  %v2304 = vmul.f32 %v2295, %v2200
  %v2305 = vmul.f32 %v2299, %v2212
  %v2306 = vmul.f32 %v2295, %v2201
  %v2307 = vmul.f32 %v2299, %v2213
  %v2308 = vmul.f32 %v2295, %v2202
  %v2309 = vmul.f32 %v2299, %v2214
  %v2318 = vrot.slane %v2302, 1
  %v2319 = vrot.slane %v2304, 1
  %v2320 = vsel %vm212, %v2318, %v2319
  %v2321 = vrot.slane %v2303, 1
  %v2322 = vrot.slane %v2305, 1
  %v2323 = vsel %vm212, %v2321, %v2322
  %v2324 = vrot.slane %v2306, 1
  %v2325 = vrot.slane %v2308, 1
  %v2326 = vsel %vm212, %v2324, %v2325
  %v2327 = vrot.slane %v2307, 1
  %v2328 = vrot.slane %v2309, 1
  %v2329 = vsel %vm212, %v2327, %v2328
  %v2334 = vadd.f32 %v2285, %v2320
  %v2335 = vadd.f32 %v2286, %v2323
  %v2336 = vadd.f32 %v2287, %v2326
  %v2337 = vadd.f32 %v2288, %v2329
  %s2338 = scalar_lea.vmem %s233, 3
  %v2339 = vld [vmem:[%s2338] ss:$4 sm:$0x3]
  %v2341 = vlaneseq
  %v2342 = vshrl.u32 %v2341, 7
  %v2343 = vsub.s32 0, %v2342
  %v2344 = vrot.slane %v2339, %v2343
  %v2345 = vlaneseq
  %v2346 = vshrl.u32 %v2345, 7
  %v2347 = vsub.s32 1, %v2346
  %v2348 = vrot.slane %v2339, %v2347
  %v2351 = vmul.f32 %v2344, %v2231
  %v2352 = vmul.f32 %v2348, %v2243
  %v2353 = vmul.f32 %v2344, %v2232
  %v2354 = vmul.f32 %v2348, %v2244
  %v2355 = vmul.f32 %v2344, %v2233
  %v2356 = vmul.f32 %v2348, %v2245
  %v2357 = vmul.f32 %v2344, %v2234
  %v2358 = vmul.f32 %v2348, %v2246
  %v2367 = vrot.slane %v2351, 1
  %v2368 = vrot.slane %v2353, 1
  %v2369 = vsel %vm212, %v2367, %v2368
  %v2370 = vrot.slane %v2352, 1
  %v2371 = vrot.slane %v2354, 1
  %v2372 = vsel %vm212, %v2370, %v2371
  %v2373 = vrot.slane %v2355, 1
  %v2374 = vrot.slane %v2357, 1
  %v2375 = vsel %vm212, %v2373, %v2374
  %v2376 = vrot.slane %v2356, 1
  %v2377 = vrot.slane %v2358, 1
  %v2378 = vsel %vm212, %v2376, %v2377
  %v2383 = vadd.f32 %v2334, %v2369
  %v2384 = vadd.f32 %v2335, %v2372
  %v2385 = vadd.f32 %v2336, %v2375
  %v2386 = vadd.f32 %v2337, %v2378
  %s2387 = scalar_lea.vmem %s282, 3
  %v2388 = vld [vmem:[%s2387] ss:$4 sm:$0x3]
  %v2390 = vlaneseq
  %v2391 = vshrl.u32 %v2390, 7
  %v2392 = vsub.s32 0, %v2391
  %v2393 = vrot.slane %v2388, %v2392
  %v2394 = vlaneseq
  %v2395 = vshrl.u32 %v2394, 7
  %v2396 = vsub.s32 1, %v2395
  %v2397 = vrot.slane %v2388, %v2396
  %v2400 = vmul.f32 %v2393, %v2199
  %v2401 = vmul.f32 %v2397, %v2211
  %v2402 = vmul.f32 %v2393, %v2200
  %v2403 = vmul.f32 %v2397, %v2212
  %v2404 = vmul.f32 %v2393, %v2201
  %v2405 = vmul.f32 %v2397, %v2213
  %v2406 = vmul.f32 %v2393, %v2202
  %v2407 = vmul.f32 %v2397, %v2214
  %v2416 = vrot.slane %v2400, 2
  %v2417 = vrot.slane %v2402, 2
  %v2418 = vsel %vm311, %v2416, %v2417
  %v2419 = vrot.slane %v2401, 2
  %v2420 = vrot.slane %v2403, 2
  %v2421 = vsel %vm311, %v2419, %v2420
  %v2422 = vrot.slane %v2404, 2
  %v2423 = vrot.slane %v2406, 2
  %v2424 = vsel %vm311, %v2422, %v2423
  %v2425 = vrot.slane %v2405, 2
  %v2426 = vrot.slane %v2407, 2
  %v2427 = vsel %vm311, %v2425, %v2426
  %v2432 = vadd.f32 %v2383, %v2418
  %v2433 = vadd.f32 %v2384, %v2421
  %v2434 = vadd.f32 %v2385, %v2424
  %v2435 = vadd.f32 %v2386, %v2427
  %s2436 = scalar_lea.vmem %s332, 3
  %v2437 = vld [vmem:[%s2436] ss:$4 sm:$0x3]
  %v2439 = vlaneseq
  %v2440 = vshrl.u32 %v2439, 7
  %v2441 = vsub.s32 0, %v2440
  %v2442 = vrot.slane %v2437, %v2441
  %v2443 = vlaneseq
  %v2444 = vshrl.u32 %v2443, 7
  %v2445 = vsub.s32 1, %v2444
  %v2446 = vrot.slane %v2437, %v2445
  %v2449 = vmul.f32 %v2442, %v2231
  %v2450 = vmul.f32 %v2446, %v2243
  %v2451 = vmul.f32 %v2442, %v2232
  %v2452 = vmul.f32 %v2446, %v2244
  %v2453 = vmul.f32 %v2442, %v2233
  %v2454 = vmul.f32 %v2446, %v2245
  %v2455 = vmul.f32 %v2442, %v2234
  %v2456 = vmul.f32 %v2446, %v2246
  %v2465 = vrot.slane %v2449, 2
  %v2466 = vrot.slane %v2451, 2
  %v2467 = vsel %vm311, %v2465, %v2466
  %v2468 = vrot.slane %v2450, 2
  %v2469 = vrot.slane %v2452, 2
  %v2470 = vsel %vm311, %v2468, %v2469
  %v2471 = vrot.slane %v2453, 2
  %v2472 = vrot.slane %v2455, 2
  %v2473 = vsel %vm311, %v2471, %v2472
  %v2474 = vrot.slane %v2454, 2
  %v2475 = vrot.slane %v2456, 2
  %v2476 = vsel %vm311, %v2474, %v2475
  %v2481 = vadd.f32 %v2432, %v2467
  %v2482 = vadd.f32 %v2433, %v2470
  %v2483 = vadd.f32 %v2434, %v2473
  %v2484 = vadd.f32 %v2435, %v2476
  %s2485 = scalar_lea.vmem %s381, 3
  %v2486 = vld [vmem:[%s2485] ss:$4 sm:$0x3]
  %v2488 = vlaneseq
  %v2489 = vshrl.u32 %v2488, 7
  %v2490 = vsub.s32 0, %v2489
  %v2491 = vrot.slane %v2486, %v2490
  %v2492 = vlaneseq
  %v2493 = vshrl.u32 %v2492, 7
  %v2494 = vsub.s32 1, %v2493
  %v2495 = vrot.slane %v2486, %v2494
  %v2498 = vmul.f32 %v2491, %v2199
  %v2499 = vmul.f32 %v2495, %v2211
  %v2500 = vmul.f32 %v2491, %v2200
  %v2501 = vmul.f32 %v2495, %v2212
  %v2502 = vmul.f32 %v2491, %v2201
  %v2503 = vmul.f32 %v2495, %v2213
  %v2504 = vmul.f32 %v2491, %v2202
  %v2505 = vmul.f32 %v2495, %v2214
  %v2514 = vrot.slane %v2498, 3
  %v2515 = vrot.slane %v2500, 3
  %v2516 = vsel %vm410, %v2514, %v2515
  %v2517 = vrot.slane %v2499, 3
  %v2518 = vrot.slane %v2501, 3
  %v2519 = vsel %vm410, %v2517, %v2518
  %v2520 = vrot.slane %v2502, 3
  %v2521 = vrot.slane %v2504, 3
  %v2522 = vsel %vm410, %v2520, %v2521
  %v2523 = vrot.slane %v2503, 3
  %v2524 = vrot.slane %v2505, 3
  %v2525 = vsel %vm410, %v2523, %v2524
  %v2530 = vadd.f32 %v2481, %v2516
  %v2531 = vadd.f32 %v2482, %v2519
  %v2532 = vadd.f32 %v2483, %v2522
  %v2533 = vadd.f32 %v2484, %v2525
  %s2534 = scalar_lea.vmem %s431, 3
  %v2535 = vld [vmem:[%s2534] ss:$4 sm:$0x3]
  %v2537 = vlaneseq
  %v2538 = vshrl.u32 %v2537, 7
  %v2539 = vsub.s32 0, %v2538
  %v2540 = vrot.slane %v2535, %v2539
  %v2541 = vlaneseq
  %v2542 = vshrl.u32 %v2541, 7
  %v2543 = vsub.s32 1, %v2542
  %v2544 = vrot.slane %v2535, %v2543
  %v2547 = vmul.f32 %v2540, %v2231
  %v2548 = vmul.f32 %v2544, %v2243
  %v2549 = vmul.f32 %v2540, %v2232
  %v2550 = vmul.f32 %v2544, %v2244
  %v2551 = vmul.f32 %v2540, %v2233
  %v2552 = vmul.f32 %v2544, %v2245
  %v2553 = vmul.f32 %v2540, %v2234
  %v2554 = vmul.f32 %v2544, %v2246
  %v2563 = vrot.slane %v2547, 3
  %v2564 = vrot.slane %v2549, 3
  %v2565 = vsel %vm410, %v2563, %v2564
  %v2566 = vrot.slane %v2548, 3
  %v2567 = vrot.slane %v2550, 3
  %v2568 = vsel %vm410, %v2566, %v2567
  %v2569 = vrot.slane %v2551, 3
  %v2570 = vrot.slane %v2553, 3
  %v2571 = vsel %vm410, %v2569, %v2570
  %v2572 = vrot.slane %v2552, 3
  %v2573 = vrot.slane %v2554, 3
  %v2574 = vsel %vm410, %v2572, %v2573
  %v2579 = vadd.f32 %v2530, %v2565
  %v2580 = vadd.f32 %v2531, %v2568
  %v2581 = vadd.f32 %v2532, %v2571
  %v2582 = vadd.f32 %v2533, %v2574
  %s2583 = scalar_lea.vmem %s480, 3
  %v2584 = vld [vmem:[%s2583] ss:$4 sm:$0x3]
  %v2586 = vlaneseq
  %v2587 = vshrl.u32 %v2586, 7
  %v2588 = vsub.s32 0, %v2587
  %v2589 = vrot.slane %v2584, %v2588
  %v2590 = vlaneseq
  %v2591 = vshrl.u32 %v2590, 7
  %v2592 = vsub.s32 1, %v2591
  %v2593 = vrot.slane %v2584, %v2592
  %v2596 = vmul.f32 %v2589, %v2199
  %v2597 = vmul.f32 %v2593, %v2211
  %v2598 = vmul.f32 %v2589, %v2200
  %v2599 = vmul.f32 %v2593, %v2212
  %v2600 = vmul.f32 %v2589, %v2201
  %v2601 = vmul.f32 %v2593, %v2213
  %v2602 = vmul.f32 %v2589, %v2202
  %v2603 = vmul.f32 %v2593, %v2214
  %v2612 = vrot.slane %v2596, 4
  %v2613 = vrot.slane %v2598, 4
  %v2614 = vsel %vm509, %v2612, %v2613
  %v2615 = vrot.slane %v2597, 4
  %v2616 = vrot.slane %v2599, 4
  %v2617 = vsel %vm509, %v2615, %v2616
  %v2618 = vrot.slane %v2600, 4
  %v2619 = vrot.slane %v2602, 4
  %v2620 = vsel %vm509, %v2618, %v2619
  %v2621 = vrot.slane %v2601, 4
  %v2622 = vrot.slane %v2603, 4
  %v2623 = vsel %vm509, %v2621, %v2622
  %v2628 = vadd.f32 %v2579, %v2614
  %v2629 = vadd.f32 %v2580, %v2617
  %v2630 = vadd.f32 %v2581, %v2620
  %v2631 = vadd.f32 %v2582, %v2623
  %s2632 = scalar_lea.vmem %s530, 3
  %v2633 = vld [vmem:[%s2632] ss:$4 sm:$0x3]
  %v2635 = vlaneseq
  %v2636 = vshrl.u32 %v2635, 7
  %v2637 = vsub.s32 0, %v2636
  %v2638 = vrot.slane %v2633, %v2637
  %v2639 = vlaneseq
  %v2640 = vshrl.u32 %v2639, 7
  %v2641 = vsub.s32 1, %v2640
  %v2642 = vrot.slane %v2633, %v2641
  %v2645 = vmul.f32 %v2638, %v2231
  %v2646 = vmul.f32 %v2642, %v2243
  %v2647 = vmul.f32 %v2638, %v2232
  %v2648 = vmul.f32 %v2642, %v2244
  %v2649 = vmul.f32 %v2638, %v2233
  %v2650 = vmul.f32 %v2642, %v2245
  %v2651 = vmul.f32 %v2638, %v2234
  %v2652 = vmul.f32 %v2642, %v2246
  %v2661 = vrot.slane %v2645, 4
  %v2662 = vrot.slane %v2647, 4
  %v2663 = vsel %vm509, %v2661, %v2662
  %v2664 = vrot.slane %v2646, 4
  %v2665 = vrot.slane %v2648, 4
  %v2666 = vsel %vm509, %v2664, %v2665
  %v2667 = vrot.slane %v2649, 4
  %v2668 = vrot.slane %v2651, 4
  %v2669 = vsel %vm509, %v2667, %v2668
  %v2670 = vrot.slane %v2650, 4
  %v2671 = vrot.slane %v2652, 4
  %v2672 = vsel %vm509, %v2670, %v2671
  %v2677 = vadd.f32 %v2628, %v2663
  %v2678 = vadd.f32 %v2629, %v2666
  %v2679 = vadd.f32 %v2630, %v2669
  %v2680 = vadd.f32 %v2631, %v2672
  %s2681 = scalar_lea.vmem %s579, 3
  %v2682 = vld [vmem:[%s2681] ss:$4 sm:$0x3]
  %v2684 = vlaneseq
  %v2685 = vshrl.u32 %v2684, 7
  %v2686 = vsub.s32 0, %v2685
  %v2687 = vrot.slane %v2682, %v2686
  %v2688 = vlaneseq
  %v2689 = vshrl.u32 %v2688, 7
  %v2690 = vsub.s32 1, %v2689
  %v2691 = vrot.slane %v2682, %v2690
  %v2694 = vmul.f32 %v2687, %v2199
  %v2695 = vmul.f32 %v2691, %v2211
  %v2696 = vmul.f32 %v2687, %v2200
  %v2697 = vmul.f32 %v2691, %v2212
  %v2698 = vmul.f32 %v2687, %v2201
  %v2699 = vmul.f32 %v2691, %v2213
  %v2700 = vmul.f32 %v2687, %v2202
  %v2701 = vmul.f32 %v2691, %v2214
  %v2710 = vrot.slane %v2694, 5
  %v2711 = vrot.slane %v2696, 5
  %v2712 = vsel %vm73, %v2710, %v2711
  %v2713 = vrot.slane %v2695, 5
  %v2714 = vrot.slane %v2697, 5
  %v2715 = vsel %vm73, %v2713, %v2714
  %v2716 = vrot.slane %v2698, 5
  %v2717 = vrot.slane %v2700, 5
  %v2718 = vsel %vm73, %v2716, %v2717
  %v2719 = vrot.slane %v2699, 5
  %v2720 = vrot.slane %v2701, 5
  %v2721 = vsel %vm73, %v2719, %v2720
  %v2726 = vadd.f32 %v2677, %v2712
  %v2727 = vadd.f32 %v2678, %v2715
  %v2728 = vadd.f32 %v2679, %v2718
  %v2729 = vadd.f32 %v2680, %v2721
  %s2730 = scalar_lea.vmem %s628, 3
  %v2731 = vld [vmem:[%s2730] ss:$4 sm:$0x3]
  %v2733 = vlaneseq
  %v2734 = vshrl.u32 %v2733, 7
  %v2735 = vsub.s32 0, %v2734
  %v2736 = vrot.slane %v2731, %v2735
  %v2737 = vlaneseq
  %v2738 = vshrl.u32 %v2737, 7
  %v2739 = vsub.s32 1, %v2738
  %v2740 = vrot.slane %v2731, %v2739
  %v2743 = vmul.f32 %v2736, %v2231
  %v2744 = vmul.f32 %v2740, %v2243
  %v2745 = vmul.f32 %v2736, %v2232
  %v2746 = vmul.f32 %v2740, %v2244
  %v2747 = vmul.f32 %v2736, %v2233
  %v2748 = vmul.f32 %v2740, %v2245
  %v2749 = vmul.f32 %v2736, %v2234
  %v2750 = vmul.f32 %v2740, %v2246
  %v2759 = vrot.slane %v2743, 5
  %v2760 = vrot.slane %v2745, 5
  %v2761 = vsel %vm73, %v2759, %v2760
  %v2762 = vrot.slane %v2744, 5
  %v2763 = vrot.slane %v2746, 5
  %v2764 = vsel %vm73, %v2762, %v2763
  %v2765 = vrot.slane %v2747, 5
  %v2766 = vrot.slane %v2749, 5
  %v2767 = vsel %vm73, %v2765, %v2766
  %v2768 = vrot.slane %v2748, 5
  %v2769 = vrot.slane %v2750, 5
  %v2770 = vsel %vm73, %v2768, %v2769
  %v2775 = vadd.f32 %v2726, %v2761
  %v2776 = vadd.f32 %v2727, %v2764
  %v2777 = vadd.f32 %v2728, %v2767
  %v2778 = vadd.f32 %v2729, %v2770
  %s2779 = scalar_lea.vmem %s677, 3
  %v2780 = vld [vmem:[%s2779] ss:$4 sm:$0x3]
  %v2782 = vlaneseq
  %v2783 = vshrl.u32 %v2782, 7
  %v2784 = vsub.s32 0, %v2783
  %v2785 = vrot.slane %v2780, %v2784
  %v2786 = vlaneseq
  %v2787 = vshrl.u32 %v2786, 7
  %v2788 = vsub.s32 1, %v2787
  %v2789 = vrot.slane %v2780, %v2788
  %v2792 = vmul.f32 %v2785, %v2199
  %v2793 = vmul.f32 %v2789, %v2211
  %v2794 = vmul.f32 %v2785, %v2200
  %v2795 = vmul.f32 %v2789, %v2212
  %v2796 = vmul.f32 %v2785, %v2201
  %v2797 = vmul.f32 %v2789, %v2213
  %v2798 = vmul.f32 %v2785, %v2202
  %v2799 = vmul.f32 %v2789, %v2214
  %v2808 = vrot.slane %v2792, 6
  %v2809 = vrot.slane %v2794, 6
  %v2810 = vsel %vm706, %v2808, %v2809
  %v2811 = vrot.slane %v2793, 6
  %v2812 = vrot.slane %v2795, 6
  %v2813 = vsel %vm706, %v2811, %v2812
  %v2814 = vrot.slane %v2796, 6
  %v2815 = vrot.slane %v2798, 6
  %v2816 = vsel %vm706, %v2814, %v2815
  %v2817 = vrot.slane %v2797, 6
  %v2818 = vrot.slane %v2799, 6
  %v2819 = vsel %vm706, %v2817, %v2818
  %v2824 = vadd.f32 %v2775, %v2810
  %v2825 = vadd.f32 %v2776, %v2813
  %v2826 = vadd.f32 %v2777, %v2816
  %v2827 = vadd.f32 %v2778, %v2819
  %s2828 = scalar_lea.vmem %s727, 3
  %v2829 = vld [vmem:[%s2828] ss:$4 sm:$0x3]
  %v2831 = vlaneseq
  %v2832 = vshrl.u32 %v2831, 7
  %v2833 = vsub.s32 0, %v2832
  %v2834 = vrot.slane %v2829, %v2833
  %v2835 = vlaneseq
  %v2836 = vshrl.u32 %v2835, 7
  %v2837 = vsub.s32 1, %v2836
  %v2838 = vrot.slane %v2829, %v2837
  %v2841 = vmul.f32 %v2834, %v2231
  %v2842 = vmul.f32 %v2838, %v2243
  %v2843 = vmul.f32 %v2834, %v2232
  %v2844 = vmul.f32 %v2838, %v2244
  %v2845 = vmul.f32 %v2834, %v2233
  %v2846 = vmul.f32 %v2838, %v2245
  %v2847 = vmul.f32 %v2834, %v2234
  %v2848 = vmul.f32 %v2838, %v2246
  %v2857 = vrot.slane %v2841, 6
  %v2858 = vrot.slane %v2843, 6
  %v2859 = vsel %vm706, %v2857, %v2858
  %v2860 = vrot.slane %v2842, 6
  %v2861 = vrot.slane %v2844, 6
  %v2862 = vsel %vm706, %v2860, %v2861
  %v2863 = vrot.slane %v2845, 6
  %v2864 = vrot.slane %v2847, 6
  %v2865 = vsel %vm706, %v2863, %v2864
  %v2866 = vrot.slane %v2846, 6
  %v2867 = vrot.slane %v2848, 6
  %v2868 = vsel %vm706, %v2866, %v2867
  %v2873 = vadd.f32 %v2824, %v2859
  %v2874 = vadd.f32 %v2825, %v2862
  %v2875 = vadd.f32 %v2826, %v2865
  %v2876 = vadd.f32 %v2827, %v2868
  %v2877 = vlaneseq
  %v2878 = vand.u32 %v2877, 127
  %v2879 = vadd.s32 %v2878, 128
  %vm2880 = vcmp.lt.s32.totalorder %v2878, 0
  %v2881 = vsub.s32 0, %v2878
  %v2882 = vsel %vm2880, %v2881, %v2878
  %v2883 = vshrl.u32 %v2882, 5
  %v2884 = vand.u32 %v2882, 31
  %v2885 = vsub.s32 0, %v2884
  %v2886 = vsel %vm2880, %v2885, %v2884
  %vm2887 = vcmp.lt.s32.totalorder %v2879, 0
  %v2888 = vsub.s32 0, %v2879
  %v2889 = vsel %vm2887, %v2888, %v2879
  %v2890 = vshrl.u32 %v2889, 5
  %v2891 = vand.u32 %v2889, 31
  %v2892 = vsub.s32 0, %v2891
  %v2893 = vsel %vm2887, %v2892, %v2891
  %vm2894 = vcmp.ne.s32.totalorder %v2886, 0
  %vm2895 = vcmp.ne.s32.totalorder %v2893, 0
  %vm2896 = vcmp.lt.s32.totalorder %v2886, 0
  %vm2897 = vcmp.lt.s32.totalorder %v2893, 0
  %vm2898 = vmand %vm2896, %vm2894
  %vm2899 = vmand %vm2897, %vm2895
  %v2900 = vadd.s32 %v2886, 32
  %v2901 = vadd.s32 %v2893, 32
  %v2902 = vsel %vm2898, %v2900, %v2886
  %v2903 = vsel %vm2899, %v2901, %v2893
  %vm2904 = vcmp.lt.s32.totalorder %v2902, 29
  %vm2905 = vcmp.lt.s32.totalorder %v2903, 29
  %vm2906 = vcmp.lt.s32.totalorder %v2878, 192
  %vm2907 = vcmp.lt.s32.totalorder %v2879, 192
  %vm2908 = vmand %vm2904, %vm2906
  %vm2909 = vmand %vm2905, %vm2907
  %v2910 = vsel %vm2908, 1, 0
  %v2911 = vsel %vm2909, 1, 0
  %vm2912 = vcmp.eq.s32.totalorder %v2910, 1
  %vm2913 = vcmp.eq.s32.totalorder %v2911, 1
  %v2914 = vsel %vm2912, %v2873, -inf
  %v2915 = vsel %vm2913, %v2874, -inf
  %v2916 = vsel %vm2912, %v2875, -inf
  %v2917 = vsel %vm2913, %v2876, -inf
  %v2918 = vrot.slane %v2914, 4
  %v2919 = vmax.f32 %v2914, %v2918
  %v2920 = vrot.slane %v2919, 2
  %v2921 = vmax.f32 %v2919, %v2920
  %v2922 = vrot.slane %v2921, 1
  %v2923 = vmax.f32 %v2921, %v2922
  %v2924 = vrot.slane %v2915, 4
  %v2925 = vmax.f32 %v2915, %v2924
  %v2926 = vrot.slane %v2925, 2
  %v2927 = vmax.f32 %v2925, %v2926
  %v2928 = vrot.slane %v2927, 1
  %v2929 = vmax.f32 %v2927, %v2928
  %v2930 = vrot.slane %v2916, 4
  %v2931 = vmax.f32 %v2916, %v2930
  %v2932 = vrot.slane %v2931, 2
  %v2933 = vmax.f32 %v2931, %v2932
  %v2934 = vrot.slane %v2933, 1
  %v2935 = vmax.f32 %v2933, %v2934
  %v2936 = vrot.slane %v2917, 4
  %v2937 = vmax.f32 %v2917, %v2936
  %v2938 = vrot.slane %v2937, 2
  %v2939 = vmax.f32 %v2937, %v2938
  %v2940 = vrot.slane %v2939, 1
  %v2941 = vmax.f32 %v2939, %v2940
  %v2942 = vsel %vm2912, %v2873, 0.0
  %v2943 = vsel %vm2913, %v2874, 0.0
  %v2944 = vsel %vm2912, %v2875, 0.0
  %v2945 = vsel %vm2913, %v2876, 0.0
  %v2946 = vrot.slane %v2942, 4
  %v2947 = vadd.f32 %v2942, %v2946
  %v2948 = vrot.slane %v2947, 2
  %v2949 = vadd.f32 %v2947, %v2948
  %v2950 = vrot.slane %v2949, 1
  %v2951 = vadd.f32 %v2949, %v2950
  %v2952 = vrot.slane %v2943, 4
  %v2953 = vadd.f32 %v2943, %v2952
  %v2954 = vrot.slane %v2953, 2
  %v2955 = vadd.f32 %v2953, %v2954
  %v2956 = vrot.slane %v2955, 1
  %v2957 = vadd.f32 %v2955, %v2956
  %v2958 = vrot.slane %v2944, 4
  %v2959 = vadd.f32 %v2944, %v2958
  %v2960 = vrot.slane %v2959, 2
  %v2961 = vadd.f32 %v2959, %v2960
  %v2962 = vrot.slane %v2961, 1
  %v2963 = vadd.f32 %v2961, %v2962
  %v2964 = vrot.slane %v2945, 4
  %v2965 = vadd.f32 %v2945, %v2964
  %v2966 = vrot.slane %v2965, 2
  %v2967 = vadd.f32 %v2965, %v2966
  %v2968 = vrot.slane %v2967, 1
  %v2969 = vadd.f32 %v2967, %v2968
  %vm2972 = vcmask 1041409
  %v2973 = vsel %vm2972, %v2935, %v2923
  %vm2975 = vcmask 254976
  %v2976 = vsel %vm2975, %v2973, -inf
  %2977 = vmax.xlane.f32.xlu0 %v2976
  %v2978 = vpop.xlane.xlu0 %2977
  %v2981 = vsel %vm2972, %v2963, %v2951
  %v2983 = vsel %vm2975, %v2981, 0.0
  %2984 = vadd.xlane.f32.xlu0 %v2983
  %v2985 = vpop.xlane.xlu0 %2984
  %v2986 = vmul.f32 %v2985, 0.004310345
  %vm2987 = vcmask 517376
  %v2988 = vsel %vm2987, %v2973, -inf
  %2989 = vmax.xlane.f32.xlu0 %v2988
  %v2990 = vpop.xlane.xlu0 %2989
  %2991 = vrot.lane.b32.xlu0 %v2981, 96
  %v2992 = vpop.permute.xlu0 %2991
  %v2994 = vsel %vm2975, %v2992, 0.0
  %2995 = vadd.xlane.f32.xlu0 %v2994
  %v2996 = vpop.xlane.xlu0 %2995
  %v2997 = vmul.f32 %v2996, 0.004310345
  %vm2998 = vcmask 779776
  %v2999 = vsel %vm2998, %v2973, -inf
  %3000 = vmax.xlane.f32.xlu0 %v2999
  %v3001 = vpop.xlane.xlu0 %3000
  %3002 = vrot.lane.b32.xlu0 %v2981, 64
  %v3003 = vpop.permute.xlu0 %3002
  %v3005 = vsel %vm2975, %v3003, 0.0
  %3006 = vadd.xlane.f32.xlu0 %v3005
  %v3007 = vpop.xlane.xlu0 %3006
  %v3008 = vmul.f32 %v3007, 0.004310345
  %vm3009 = vcmask 1042176
  %v3010 = vsel %vm3009, %v2973, -inf
  %3011 = vmax.xlane.f32.xlu0 %v3010
  %v3012 = vpop.xlane.xlu0 %3011
  %3013 = vrot.lane.b32.xlu0 %v2981, 32
  %v3014 = vpop.permute.xlu0 %3013
  %v3016 = vsel %vm2975, %v3014, 0.0
  %3017 = vadd.xlane.f32.xlu0 %v3016
  %v3018 = vpop.xlane.xlu0 %3017
  %v3019 = vmul.f32 %v3018, 0.004310345
  %v3022 = vsel %vm2972, %v2941, %v2929
  %v3024 = vsel %vm2975, %v3022, -inf
  %3025 = vmax.xlane.f32.xlu0 %v3024
  %v3026 = vpop.xlane.xlu0 %3025
  %v3029 = vsel %vm2972, %v2969, %v2957
  %v3031 = vsel %vm2975, %v3029, 0.0
  %3032 = vadd.xlane.f32.xlu0 %v3031
  %v3033 = vpop.xlane.xlu0 %3032
  %v3034 = vmul.f32 %v3033, 0.004310345
  %v3035 = vsel %vm2987, %v3022, -inf
  %3036 = vmax.xlane.f32.xlu0 %v3035
  %v3037 = vpop.xlane.xlu0 %3036
  %3038 = vrot.lane.b32.xlu0 %v3029, 96
  %v3039 = vpop.permute.xlu0 %3038
  %v3041 = vsel %vm2975, %v3039, 0.0
  %3042 = vadd.xlane.f32.xlu0 %v3041
  %v3043 = vpop.xlane.xlu0 %3042
  %v3044 = vmul.f32 %v3043, 0.004310345
  %vm3045 = vcmask 7168
  %v3046 = vsel %vm3045, %v2978, %v2990
  %vm3047 = vcmask 15360
  %v3048 = vsel %vm3047, %v3046, %v3001
  %vm3049 = vcmask 23552
  %v3050 = vsel %vm3049, %v3048, %v3012
  %vm3051 = vcmask 31744
  %v3052 = vsel %vm3051, %v3050, %v3026
  %vm3053 = vcmask 39936
  %v3054 = vsel %vm3053, %v3052, %v3037
  %v3055 = vsel %vm3045, %v2986, %v2997
  %v3056 = vsel %vm3047, %v3055, %v3008
  %v3057 = vsel %vm3049, %v3056, %v3019
  %v3058 = vsel %vm3051, %v3057, %v3034
  %v3059 = vsel %vm3053, %v3058, %v3044
  %v3060 = vld [vmem:[%s3] sm:$0x3]
  %v3061 = vld [vmem:[%s4] sm:$0x3f]
  %v3064 = vunpack.c.l.s4 1966171168
  %v3065 = vunpack.c.0.s8 %v3064
  %v3066 = vlaneseq
  %v3067 = vshrl.u32 %v3066, 7
  %v3068 = vsub.s32 %v3065, %v3067
  %v3069 = vrot.slane %v3054, %v3068
  %v3070 = vcombine.high %v3069, %v3069
  %v3072 = vunpack.c.l.s4 1966171168
  %v3073 = vunpack.c.0.s8 %v3072
  %v3074 = vlaneseq
  %v3075 = vshrl.u32 %v3074, 7
  %v3076 = vsub.s32 %v3073, %v3075
  %v3077 = vrot.slane %v3069, %v3076
  %v3079 = vunpack.c.l.s4 1966171168
  %v3080 = vunpack.c.0.s8 %v3079
  %v3081 = vlaneseq
  %v3082 = vshrl.u32 %v3081, 7
  %v3083 = vsub.s32 %v3080, %v3082
  %v3084 = vrot.slane %v3070, %v3083
  %v3085 = vlaneseq
  %v3086 = vshrl.u32 %v3085, 7
  %v3087 = vsub.s32 0, %v3086
  %v3088 = vrot.slane %v3077, %v3087
  %v3089 = vlaneseq
  %v3090 = vshrl.u32 %v3089, 7
  %v3091 = vsub.s32 0, %v3090
  %v3092 = vrot.slane %v3084, %v3091
  %v3095 = vmul.f32 %v3088, %v3060
  %v3096 = vmul.f32 %v3092, %v3060
  %vm3097 = vcmask 41984
  %v3098 = vsel %vm3097, %v3095, 0.0
  %3099 = vadd.xlane.f32.xlu0 %v3098
  %v3100 = vpop.xlane.xlu0 %3099
  %v3101 = vsel %vm3097, %v3096, 0.0
  %3102 = vadd.xlane.f32.xlu0 %v3101
  %v3103 = vpop.xlane.xlu0 %3102
  %v3104 = vmax.f32 %v3100, 0.0
  %v3105 = vmax.f32 %v3103, 0.0
  %v3107 = vlaneseq
  %v3108 = vshrl.u32 %v3107, 7
  %v3109 = vsub.s32 0, %v3108
  %v3110 = vrot.slane %v3061, %v3109
  %3112 = vbcast.lane.b32.xlu0 %v3110, 256
  %v3113 = vpop.permute.xlu0 %3112
  %v3114 = vlaneseq
  %v3115 = vshrl.u32 %v3114, 7
  %v3116 = vsub.s32 1, %v3115
  %v3117 = vrot.slane %v3061, %v3116
  %3119 = vbcast.lane.b32.xlu0 %v3117, 256
  %v3120 = vpop.permute.xlu0 %3119
  %v3121 = vlaneseq
  %v3122 = vshrl.u32 %v3121, 7
  %v3123 = vsub.s32 2, %v3122
  %v3124 = vrot.slane %v3061, %v3123
  %3126 = vbcast.lane.b32.xlu0 %v3124, 256
  %v3127 = vpop.permute.xlu0 %3126
  %v3128 = vlaneseq
  %v3129 = vshrl.u32 %v3128, 7
  %v3130 = vsub.s32 3, %v3129
  %v3131 = vrot.slane %v3061, %v3130
  %3133 = vbcast.lane.b32.xlu0 %v3131, 256
  %v3134 = vpop.permute.xlu0 %3133
  %v3135 = vlaneseq
  %v3136 = vshrl.u32 %v3135, 7
  %v3137 = vsub.s32 4, %v3136
  %v3138 = vrot.slane %v3061, %v3137
  %3140 = vbcast.lane.b32.xlu0 %v3138, 256
  %v3141 = vpop.permute.xlu0 %3140
  %v3142 = vlaneseq
  %v3143 = vshrl.u32 %v3142, 7
  %v3144 = vsub.s32 5, %v3143
  %v3145 = vrot.slane %v3061, %v3144
  %3147 = vbcast.lane.b32.xlu0 %v3145, 256
  %v3148 = vpop.permute.xlu0 %3147
  %v3155 = vmul.f32 %v3104, %v3113
  %v3156 = vmul.f32 %v3104, %v3120
  %v3157 = vmul.f32 %v3104, %v3127
  %v3158 = vmul.f32 %v3104, %v3134
  %v3159 = vmul.f32 %v3104, %v3141
  %v3160 = vmul.f32 %v3104, %v3148
  %v3161 = vmul.f32 %v3105, %v3113
  %v3162 = vmul.f32 %v3105, %v3120
  %v3163 = vmul.f32 %v3105, %v3127
  %v3164 = vmul.f32 %v3105, %v3134
  %v3165 = vmul.f32 %v3105, %v3141
  %v3166 = vmul.f32 %v3105, %v3148
  %3179 = vset.pattern.permute.xlu0 0
  %3180 = vperm.xlu0 %3179, %v3155
  %v3181 = vpop.permute.xlu0 %3180
  %3182 = vset.pattern.permute.xlu0 0
  %3183 = vperm.xlu0 %3182, %v3156
  %v3184 = vpop.permute.xlu0 %3183
  %3185 = vset.pattern.permute.xlu0 0
  %3186 = vperm.xlu0 %3185, %v3157
  %v3187 = vpop.permute.xlu0 %3186
  %3188 = vset.pattern.permute.xlu0 0
  %3189 = vperm.xlu0 %3188, %v3158
  %v3190 = vpop.permute.xlu0 %3189
  %3191 = vset.pattern.permute.xlu0 0
  %3192 = vperm.xlu0 %3191, %v3159
  %v3193 = vpop.permute.xlu0 %3192
  %3194 = vset.pattern.permute.xlu0 0
  %3195 = vperm.xlu0 %3194, %v3160
  %v3196 = vpop.permute.xlu0 %3195
  %3197 = vset.pattern.permute.xlu0 0
  %3198 = vperm.xlu0 %3197, %v3161
  %v3199 = vpop.permute.xlu0 %3198
  %3200 = vset.pattern.permute.xlu0 0
  %3201 = vperm.xlu0 %3200, %v3162
  %v3202 = vpop.permute.xlu0 %3201
  %3203 = vset.pattern.permute.xlu0 0
  %3204 = vperm.xlu0 %3203, %v3163
  %v3205 = vpop.permute.xlu0 %3204
  %3206 = vset.pattern.permute.xlu0 0
  %3207 = vperm.xlu0 %3206, %v3164
  %v3208 = vpop.permute.xlu0 %3207
  %3209 = vset.pattern.permute.xlu0 0
  %3210 = vperm.xlu0 %3209, %v3165
  %v3211 = vpop.permute.xlu0 %3210
  %3212 = vset.pattern.permute.xlu0 0
  %3213 = vperm.xlu0 %3212, %v3166
  %v3214 = vpop.permute.xlu0 %3213
  %v3215 = vlaneseq
  %v3216 = vshrl.u32 %v3215, 7
  %v3217 = vsub.s32 %v2878, %v3216
  %v3218 = vrot.slane %v3181, %v3217
  %v3219 = vlaneseq
  %v3220 = vshrl.u32 %v3219, 7
  %v3221 = vsub.s32 %v2878, %v3220
  %v3222 = vrot.slane %v3184, %v3221
  %v3223 = vlaneseq
  %v3224 = vshrl.u32 %v3223, 7
  %v3225 = vsub.s32 %v2878, %v3224
  %v3226 = vrot.slane %v3187, %v3225
  %v3227 = vlaneseq
  %v3228 = vshrl.u32 %v3227, 7
  %v3229 = vsub.s32 %v2878, %v3228
  %v3230 = vrot.slane %v3190, %v3229
  %v3231 = vlaneseq
  %v3232 = vshrl.u32 %v3231, 7
  %v3233 = vsub.s32 %v2878, %v3232
  %v3234 = vrot.slane %v3193, %v3233
  %v3235 = vlaneseq
  %v3236 = vshrl.u32 %v3235, 7
  %v3237 = vsub.s32 %v2878, %v3236
  %v3238 = vrot.slane %v3196, %v3237
  %v3239 = vlaneseq
  %v3240 = vshrl.u32 %v3239, 7
  %v3241 = vsub.s32 %v2878, %v3240
  %v3242 = vrot.slane %v3199, %v3241
  %v3243 = vlaneseq
  %v3244 = vshrl.u32 %v3243, 7
  %v3245 = vsub.s32 %v2878, %v3244
  %v3246 = vrot.slane %v3202, %v3245
  %v3247 = vlaneseq
  %v3248 = vshrl.u32 %v3247, 7
  %v3249 = vsub.s32 %v2878, %v3248
  %v3250 = vrot.slane %v3205, %v3249
  %v3251 = vlaneseq
  %v3252 = vshrl.u32 %v3251, 7
  %v3253 = vsub.s32 %v2878, %v3252
  %v3254 = vrot.slane %v3208, %v3253
  %v3255 = vlaneseq
  %v3256 = vshrl.u32 %v3255, 7
  %v3257 = vsub.s32 %v2878, %v3256
  %v3258 = vrot.slane %v3211, %v3257
  %v3259 = vlaneseq
  %v3260 = vshrl.u32 %v3259, 7
  %v3261 = vsub.s32 %v2878, %v3260
  %v3262 = vrot.slane %v3214, %v3261
  %v3263 = vsel %vm2972, %v3222, %v3218
  %vm3264 = vcmask 1042434
  %v3265 = vsel %vm3264, %v3226, %v3263
  %vm3266 = vcmask 1043459
  %v3267 = vsel %vm3266, %v3230, %v3265
  %vm3268 = vcmask 1044484
  %v3269 = vsel %vm3268, %v3234, %v3267
  %vm3270 = vcmask 1045509
  %v3271 = vsel %vm3270, %v3238, %v3269
  %v3272 = vsel %vm2972, %v3246, %v3242
  %v3273 = vsel %vm3264, %v3250, %v3272
  %v3274 = vsel %vm3266, %v3254, %v3273
  %v3275 = vsel %vm3268, %v3258, %v3274
  %v3276 = vsel %vm3270, %v3262, %v3275
  %vm3279 = vcmask 13312
  %v3280 = vsel %vm3279, %v3271, 0.0
  %3281 = vadd.xlane.f32.xlu0 %v3280
  %v3282 = vpop.xlane.xlu0 %3281
  %v3283 = vsel %vm3279, %v3276, 0.0
  %3284 = vadd.xlane.f32.xlu0 %v3283
  %v3285 = vpop.xlane.xlu0 %3284
  %v3288 = vunpack.c.l.s4 1966171168
  %v3289 = vunpack.c.0.s8 %v3288
  %v3290 = vlaneseq
  %v3291 = vshrl.u32 %v3290, 7
  %v3292 = vsub.s32 %v3289, %v3291
  %v3293 = vrot.slane %v3059, %v3292
  %v3294 = vcombine.high %v3293, %v3293
  %v3296 = vunpack.c.l.s4 1966171168
  %v3297 = vunpack.c.0.s8 %v3296
  %v3298 = vlaneseq
  %v3299 = vshrl.u32 %v3298, 7
  %v3300 = vsub.s32 %v3297, %v3299
  %v3301 = vrot.slane %v3293, %v3300
  %v3303 = vunpack.c.l.s4 1966171168
  %v3304 = vunpack.c.0.s8 %v3303
  %v3305 = vlaneseq
  %v3306 = vshrl.u32 %v3305, 7
  %v3307 = vsub.s32 %v3304, %v3306
  %v3308 = vrot.slane %v3294, %v3307
  %v3309 = vlaneseq
  %v3310 = vshrl.u32 %v3309, 7
  %v3311 = vsub.s32 0, %v3310
  %v3312 = vrot.slane %v3301, %v3311
  %v3313 = vlaneseq
  %v3314 = vshrl.u32 %v3313, 7
  %v3315 = vsub.s32 0, %v3314
  %v3316 = vrot.slane %v3308, %v3315
  %v3319 = vmul.f32 %v3312, %v3060
  %v3320 = vmul.f32 %v3316, %v3060
  %v3321 = vsel %vm3097, %v3319, 0.0
  %3322 = vadd.xlane.f32.xlu0 %v3321
  %v3323 = vpop.xlane.xlu0 %3322
  %v3324 = vsel %vm3097, %v3320, 0.0
  %3325 = vadd.xlane.f32.xlu0 %v3324
  %v3326 = vpop.xlane.xlu0 %3325
  %v3327 = vmax.f32 %v3323, 0.0
  %v3328 = vmax.f32 %v3326, 0.0
  %v3329 = vmul.f32 %v3327, %v3113
  %v3330 = vmul.f32 %v3327, %v3120
  %v3331 = vmul.f32 %v3327, %v3127
  %v3332 = vmul.f32 %v3327, %v3134
  %v3333 = vmul.f32 %v3327, %v3141
  %v3334 = vmul.f32 %v3327, %v3148
  %v3335 = vmul.f32 %v3328, %v3113
  %v3336 = vmul.f32 %v3328, %v3120
  %v3337 = vmul.f32 %v3328, %v3127
  %v3338 = vmul.f32 %v3328, %v3134
  %v3339 = vmul.f32 %v3328, %v3141
  %v3340 = vmul.f32 %v3328, %v3148
  %3353 = vset.pattern.permute.xlu0 0
  %3354 = vperm.xlu0 %3353, %v3329
  %v3355 = vpop.permute.xlu0 %3354
  %3356 = vset.pattern.permute.xlu0 0
  %3357 = vperm.xlu0 %3356, %v3330
  %v3358 = vpop.permute.xlu0 %3357
  %3359 = vset.pattern.permute.xlu0 0
  %3360 = vperm.xlu0 %3359, %v3331
  %v3361 = vpop.permute.xlu0 %3360
  %3362 = vset.pattern.permute.xlu0 0
  %3363 = vperm.xlu0 %3362, %v3332
  %v3364 = vpop.permute.xlu0 %3363
  %3365 = vset.pattern.permute.xlu0 0
  %3366 = vperm.xlu0 %3365, %v3333
  %v3367 = vpop.permute.xlu0 %3366
  %3368 = vset.pattern.permute.xlu0 0
  %3369 = vperm.xlu0 %3368, %v3334
  %v3370 = vpop.permute.xlu0 %3369
  %3371 = vset.pattern.permute.xlu0 0
  %3372 = vperm.xlu0 %3371, %v3335
  %v3373 = vpop.permute.xlu0 %3372
  %3374 = vset.pattern.permute.xlu0 0
  %3375 = vperm.xlu0 %3374, %v3336
  %v3376 = vpop.permute.xlu0 %3375
  %3377 = vset.pattern.permute.xlu0 0
  %3378 = vperm.xlu0 %3377, %v3337
  %v3379 = vpop.permute.xlu0 %3378
  %3380 = vset.pattern.permute.xlu0 0
  %3381 = vperm.xlu0 %3380, %v3338
  %v3382 = vpop.permute.xlu0 %3381
  %3383 = vset.pattern.permute.xlu0 0
  %3384 = vperm.xlu0 %3383, %v3339
  %v3385 = vpop.permute.xlu0 %3384
  %3386 = vset.pattern.permute.xlu0 0
  %3387 = vperm.xlu0 %3386, %v3340
  %v3388 = vpop.permute.xlu0 %3387
  %v3389 = vlaneseq
  %v3390 = vshrl.u32 %v3389, 7
  %v3391 = vsub.s32 %v2878, %v3390
  %v3392 = vrot.slane %v3355, %v3391
  %v3393 = vlaneseq
  %v3394 = vshrl.u32 %v3393, 7
  %v3395 = vsub.s32 %v2878, %v3394
  %v3396 = vrot.slane %v3358, %v3395
  %v3397 = vlaneseq
  %v3398 = vshrl.u32 %v3397, 7
  %v3399 = vsub.s32 %v2878, %v3398
  %v3400 = vrot.slane %v3361, %v3399
  %v3401 = vlaneseq
  %v3402 = vshrl.u32 %v3401, 7
  %v3403 = vsub.s32 %v2878, %v3402
  %v3404 = vrot.slane %v3364, %v3403
  %v3405 = vlaneseq
  %v3406 = vshrl.u32 %v3405, 7
  %v3407 = vsub.s32 %v2878, %v3406
  %v3408 = vrot.slane %v3367, %v3407
  %v3409 = vlaneseq
  %v3410 = vshrl.u32 %v3409, 7
  %v3411 = vsub.s32 %v2878, %v3410
  %v3412 = vrot.slane %v3370, %v3411
  %v3413 = vlaneseq
  %v3414 = vshrl.u32 %v3413, 7
  %v3415 = vsub.s32 %v2878, %v3414
  %v3416 = vrot.slane %v3373, %v3415
  %v3417 = vlaneseq
  %v3418 = vshrl.u32 %v3417, 7
  %v3419 = vsub.s32 %v2878, %v3418
  %v3420 = vrot.slane %v3376, %v3419
  %v3421 = vlaneseq
  %v3422 = vshrl.u32 %v3421, 7
  %v3423 = vsub.s32 %v2878, %v3422
  %v3424 = vrot.slane %v3379, %v3423
  %v3425 = vlaneseq
  %v3426 = vshrl.u32 %v3425, 7
  %v3427 = vsub.s32 %v2878, %v3426
  %v3428 = vrot.slane %v3382, %v3427
  %v3429 = vlaneseq
  %v3430 = vshrl.u32 %v3429, 7
  %v3431 = vsub.s32 %v2878, %v3430
  %v3432 = vrot.slane %v3385, %v3431
  %v3433 = vlaneseq
  %v3434 = vshrl.u32 %v3433, 7
  %v3435 = vsub.s32 %v2878, %v3434
  %v3436 = vrot.slane %v3388, %v3435
  %v3437 = vsel %vm2972, %v3396, %v3392
  %v3438 = vsel %vm3264, %v3400, %v3437
  %v3439 = vsel %vm3266, %v3404, %v3438
  %v3440 = vsel %vm3268, %v3408, %v3439
  %v3441 = vsel %vm3270, %v3412, %v3440
  %v3442 = vsel %vm2972, %v3420, %v3416
  %v3443 = vsel %vm3264, %v3424, %v3442
  %v3444 = vsel %vm3266, %v3428, %v3443
  %v3445 = vsel %vm3268, %v3432, %v3444
  %v3446 = vsel %vm3270, %v3436, %v3445
  %v3449 = vsel %vm3279, %v3441, 0.0
  %3450 = vadd.xlane.f32.xlu0 %v3449
  %v3451 = vpop.xlane.xlu0 %3450
  %v3452 = vsel %vm3279, %v3446, 0.0
  %3453 = vadd.xlane.f32.xlu0 %v3452
  %v3454 = vpop.xlane.xlu0 %3453
  %v3455 = vadd.f32 %v3282, %v3451
  %v3456 = vadd.f32 %v3285, %v3454
  %v3457 = vxor.u32 %v3455, 2147483648
  %v3458 = vxor.u32 %v3456, 2147483648
  %v3459 = vmul.f32 %v3457, 1.442695
  %v3460 = vpow.pop %v3459
  %v3461 = vmul.f32 %v3458, 1.442695
  %v3462 = vpow.pop %v3461
  %v3463 = vadd.f32 %v3460, 1.0
  %v3464 = vadd.f32 %v3462, 1.0
  %v3465 = vrcp.pop %v3463
  %v3466 = vmul.f32 1.0, %v3465
  %v3467 = vrcp.pop %v3464
  %v3468 = vmul.f32 1.0, %v3467
  %v3469 = vlaneseq
  %v3470 = vshrl.u32 %v3469, 7
  %v3471 = vsub.s32 0, %v3470
  %v3472 = vrot.slane %v3466, %v3471
  %v3473 = vlaneseq
  %v3474 = vshrl.u32 %v3473, 7
  %v3475 = vsub.s32 0, %v3474
  %v3476 = vrot.slane %v3468, %v3475
  %v3477 = vlaneseq
  %v3478 = vshrl.u32 %v3477, 7
  %v3479 = vsub.s32 1, %v3478
  %v3480 = vrot.slane %v3466, %v3479
  %v3481 = vlaneseq
  %v3482 = vshrl.u32 %v3481, 7
  %v3483 = vsub.s32 1, %v3482
  %v3484 = vrot.slane %v3468, %v3483
  %v3485 = vlaneseq
  %v3486 = vshrl.u32 %v3485, 7
  %v3487 = vsub.s32 2, %v3486
  %v3488 = vrot.slane %v3466, %v3487
  %v3489 = vlaneseq
  %v3490 = vshrl.u32 %v3489, 7
  %v3491 = vsub.s32 2, %v3490
  %v3492 = vrot.slane %v3468, %v3491
  %v3493 = vlaneseq
  %v3494 = vshrl.u32 %v3493, 7
  %v3495 = vsub.s32 3, %v3494
  %v3496 = vrot.slane %v3466, %v3495
  %v3497 = vlaneseq
  %v3498 = vshrl.u32 %v3497, 7
  %v3499 = vsub.s32 3, %v3498
  %v3500 = vrot.slane %v3468, %v3499
  %v3501 = vlaneseq
  %v3502 = vshrl.u32 %v3501, 7
  %v3503 = vsub.s32 4, %v3502
  %v3504 = vrot.slane %v3466, %v3503
  %v3505 = vlaneseq
  %v3506 = vshrl.u32 %v3505, 7
  %v3507 = vsub.s32 4, %v3506
  %v3508 = vrot.slane %v3468, %v3507
  %v3509 = vlaneseq
  %v3510 = vshrl.u32 %v3509, 7
  %v3511 = vsub.s32 5, %v3510
  %v3512 = vrot.slane %v3466, %v3511
  %v3513 = vlaneseq
  %v3514 = vshrl.u32 %v3513, 7
  %v3515 = vsub.s32 5, %v3514
  %v3516 = vrot.slane %v3468, %v3515
  %v3519 = vsel %vm2972, %v3476, %v3472
  %v3523 = vsel %vm2972, %v3484, %v3480
  %v3527 = vsel %vm2972, %v3492, %v3488
  %v3531 = vsel %vm2972, %v3500, %v3496
  %v3535 = vsel %vm2972, %v3508, %v3504
  %v3539 = vsel %vm2972, %v3516, %v3512
  %v3541 = vsel %vm50, %v3519, %v3523
  %v3542 = vsel %vm53, %v3541, %v3527
  %v3543 = vsel %vm56, %v3542, %v3531
  %v3544 = vsel %vm50, %v3535, %v3539
  %v3545 = vsel %vm53, %v3544, 0.0
  %v3548 = vcombine.low %v3543, %v3545
  %v3550 = vunpack.c.l.s4 1966171168
  %v3551 = vunpack.c.0.s8 %v3550
  %v3552 = vlaneseq
  %v3553 = vshrl.u32 %v3552, 7
  %v3554 = vsub.s32 %v3551, %v3553
  %v3555 = vrot.slane %v3548, %v3554
  %v3556 = vcombine.high %v3555, %v3555
  %v3558 = vunpack.c.l.s4 1966171168
  %v3559 = vunpack.c.0.s8 %v3558
  %v3560 = vlaneseq
  %v3561 = vshrl.u32 %v3560, 7
  %v3562 = vsub.s32 %v3559, %v3561
  %v3563 = vrot.slane %v3555, %v3562
  %v3565 = vunpack.c.l.s4 1966171168
  %v3566 = vunpack.c.0.s8 %v3565
  %v3567 = vlaneseq
  %v3568 = vshrl.u32 %v3567, 7
  %v3569 = vsub.s32 %v3566, %v3568
  %v3570 = vrot.slane %v3556, %v3569
  %v3571 = vlaneseq
  %v3572 = vshrl.u32 %v3571, 7
  %v3573 = vsub.s32 0, %v3572
  %v3574 = vrot.slane %v3563, %v3573
  %v3575 = vlaneseq
  %v3576 = vshrl.u32 %v3575, 7
  %v3577 = vsub.s32 1, %v3576
  %v3578 = vrot.slane %v3563, %v3577
  %v3579 = vlaneseq
  %v3580 = vshrl.u32 %v3579, 7
  %v3581 = vsub.s32 0, %v3580
  %v3582 = vrot.slane %v3570, %v3581
  %v3583 = vlaneseq
  %v3584 = vshrl.u32 %v3583, 7
  %v3585 = vsub.s32 1, %v3584
  %v3586 = vrot.slane %v3570, %v3585
  %v3591 = vmul.f32 %v2873, %v3574
  %v3592 = vmul.f32 %v2874, %v3578
  %v3593 = vmul.f32 %v2875, %v3582
  %v3594 = vmul.f32 %v2876, %v3586
  %v3595 = vld [vmem:[%s5] sm:$0xff]
  %v3596 = vld [vmem:[%s5 + $0x8] sm:$0xff]
  %v3597 = vld [vmem:[%s5 + $0x10] sm:$0xff]
  %v3598 = vld [vmem:[%s5 + $0x18] sm:$0xff]
  %v3599 = vmul.f32 %v3591, %v3595
  %v3600 = vmul.f32 %v3592, %v3596
  %v3601 = vmul.f32 %v3591, %v3597
  %v3602 = vmul.f32 %v3592, %v3598
  %v3603 = vmul.f32 %v3593, %v3595
  %v3604 = vmul.f32 %v3594, %v3596
  %v3605 = vmul.f32 %v3593, %v3597
  %v3606 = vmul.f32 %v3594, %v3598
  %v3607 = vrot.slane %v3599, 4
  %v3608 = vadd.f32 %v3599, %v3607
  %v3609 = vrot.slane %v3608, 2
  %v3610 = vadd.f32 %v3608, %v3609
  %v3611 = vrot.slane %v3610, 1
  %v3612 = vadd.f32 %v3610, %v3611
  %v3613 = vrot.slane %v3600, 4
  %v3614 = vadd.f32 %v3600, %v3613
  %v3615 = vrot.slane %v3614, 2
  %v3616 = vadd.f32 %v3614, %v3615
  %v3617 = vrot.slane %v3616, 1
  %v3618 = vadd.f32 %v3616, %v3617
  %v3619 = vrot.slane %v3601, 4
  %v3620 = vadd.f32 %v3601, %v3619
  %v3621 = vrot.slane %v3620, 2
  %v3622 = vadd.f32 %v3620, %v3621
  %v3623 = vrot.slane %v3622, 1
  %v3624 = vadd.f32 %v3622, %v3623
  %v3625 = vrot.slane %v3602, 4
  %v3626 = vadd.f32 %v3602, %v3625
  %v3627 = vrot.slane %v3626, 2
  %v3628 = vadd.f32 %v3626, %v3627
  %v3629 = vrot.slane %v3628, 1
  %v3630 = vadd.f32 %v3628, %v3629
  %v3631 = vrot.slane %v3603, 4
  %v3632 = vadd.f32 %v3603, %v3631
  %v3633 = vrot.slane %v3632, 2
  %v3634 = vadd.f32 %v3632, %v3633
  %v3635 = vrot.slane %v3634, 1
  %v3636 = vadd.f32 %v3634, %v3635
  %v3637 = vrot.slane %v3604, 4
  %v3638 = vadd.f32 %v3604, %v3637
  %v3639 = vrot.slane %v3638, 2
  %v3640 = vadd.f32 %v3638, %v3639
  %v3641 = vrot.slane %v3640, 1
  %v3642 = vadd.f32 %v3640, %v3641
  %v3643 = vrot.slane %v3605, 4
  %v3644 = vadd.f32 %v3605, %v3643
  %v3645 = vrot.slane %v3644, 2
  %v3646 = vadd.f32 %v3644, %v3645
  %v3647 = vrot.slane %v3646, 1
  %v3648 = vadd.f32 %v3646, %v3647
  %v3649 = vrot.slane %v3606, 4
  %v3650 = vadd.f32 %v3606, %v3649
  %v3651 = vrot.slane %v3650, 2
  %v3652 = vadd.f32 %v3650, %v3651
  %v3653 = vrot.slane %v3652, 1
  %v3654 = vadd.f32 %v3652, %v3653
  %3659 = vrot.lane.b32.xlu0 %v3612, 96
  %v3660 = vpop.permute.xlu0 %3659
  %3661 = vrot.lane.b32.xlu0 %v3624, 96
  %v3662 = vpop.permute.xlu0 %3661
  %3663 = vrot.lane.b32.xlu0 %v3636, 96
  %v3664 = vpop.permute.xlu0 %3663
  %3665 = vrot.lane.b32.xlu0 %v3648, 96
  %v3666 = vpop.permute.xlu0 %3665
  %v3671 = vadd.f32 %v3612, %v3660
  %v3672 = vadd.f32 %v3624, %v3662
  %v3673 = vadd.f32 %v3636, %v3664
  %v3674 = vadd.f32 %v3648, %v3666
  %3675 = vrot.lane.b32.xlu0 %v3612, 64
  %v3676 = vpop.permute.xlu0 %3675
  %3677 = vrot.lane.b32.xlu0 %v3624, 64
  %v3678 = vpop.permute.xlu0 %3677
  %3679 = vrot.lane.b32.xlu0 %v3636, 64
  %v3680 = vpop.permute.xlu0 %3679
  %3681 = vrot.lane.b32.xlu0 %v3648, 64
  %v3682 = vpop.permute.xlu0 %3681
  %v3687 = vadd.f32 %v3671, %v3676
  %v3688 = vadd.f32 %v3672, %v3678
  %v3689 = vadd.f32 %v3673, %v3680
  %v3690 = vadd.f32 %v3674, %v3682
  %3691 = vrot.lane.b32.xlu0 %v3612, 32
  %v3692 = vpop.permute.xlu0 %3691
  %3693 = vrot.lane.b32.xlu0 %v3624, 32
  %v3694 = vpop.permute.xlu0 %3693
  %3695 = vrot.lane.b32.xlu0 %v3636, 32
  %v3696 = vpop.permute.xlu0 %3695
  %3697 = vrot.lane.b32.xlu0 %v3648, 32
  %v3698 = vpop.permute.xlu0 %3697
  %v3703 = vadd.f32 %v3687, %v3692
  %v3704 = vadd.f32 %v3688, %v3694
  %v3705 = vadd.f32 %v3689, %v3696
  %v3706 = vadd.f32 %v3690, %v3698
  %v3707 = vadd.f32 %v3703, %v3618
  %v3708 = vadd.f32 %v3704, %v3630
  %v3709 = vadd.f32 %v3705, %v3642
  %v3710 = vadd.f32 %v3706, %v3654
  %3715 = vrot.lane.b32.xlu0 %v3618, 96
  %v3716 = vpop.permute.xlu0 %3715
  %3717 = vrot.lane.b32.xlu0 %v3630, 96
  %v3718 = vpop.permute.xlu0 %3717
  %3719 = vrot.lane.b32.xlu0 %v3642, 96
  %v3720 = vpop.permute.xlu0 %3719
  %3721 = vrot.lane.b32.xlu0 %v3654, 96
  %v3722 = vpop.permute.xlu0 %3721
  %v3727 = vadd.f32 %v3707, %v3716
  %v3728 = vadd.f32 %v3708, %v3718
  %v3729 = vadd.f32 %v3709, %v3720
  %v3730 = vadd.f32 %v3710, %v3722
  %v3731 = vld [vmem:[%s6] sm:$0x3]
  %v3733 = vrot.slane %v3731, 1
  %v3736 = vadd.f32 %v3727, %v3731
  %v3737 = vadd.f32 %v3728, %v3733
  %v3738 = vadd.f32 %v3729, %v3731
  %v3739 = vadd.f32 %v3730, %v3733
  %v3740 = vxor.u32 %v3736, 2147483648
  %v3741 = vxor.u32 %v3737, 2147483648
  %v3742 = vxor.u32 %v3738, 2147483648
  %v3743 = vxor.u32 %v3739, 2147483648
  %v3744 = vmul.f32 %v3740, 1.442695
  %v3745 = vpow.pop %v3744
  %v3746 = vmul.f32 %v3741, 1.442695
  %v3747 = vpow.pop %v3746
  %v3748 = vmul.f32 %v3742, 1.442695
  %v3749 = vpow.pop %v3748
  %v3750 = vmul.f32 %v3743, 1.442695
  %v3751 = vpow.pop %v3750
  %v3752 = vadd.f32 %v3745, 1.0
  %v3753 = vadd.f32 %v3747, 1.0
  %v3754 = vadd.f32 %v3749, 1.0
  %v3755 = vadd.f32 %v3751, 1.0
  %v3756 = vrcp.pop %v3752
  %v3757 = vmul.f32 1.0, %v3756
  %v3758 = vrcp.pop %v3753
  %v3759 = vmul.f32 1.0, %v3758
  %v3760 = vrcp.pop %v3754
  %v3761 = vmul.f32 1.0, %v3760
  %v3762 = vrcp.pop %v3755
  %v3763 = vmul.f32 1.0, %v3762
  %v3768 = vrot.slane %v3759, 7
  %v3769 = vsel %vm2972, %v3768, %v3757
  %v3770 = vrot.slane %v3763, 7
  %v3771 = vsel %vm2972, %v3770, %v3761
  %v3774 = vsel %vm50, %v3769, 0.0
  %v3775 = vsel %vm50, %v3771, 0.0
  %3776 = vst [vmem:[%s7] sm:$0x3] %v3774
  %3777 = vst [vmem:[%s7 + $0x2] sm:$0x3] %v3775
  // Predicated region
  $region30: #{basic_conv_forward.1} parent=0 // pred_check
    _
  $region31: #{basic_conv_forward.1} parent=0 // pred_check_branch
    %3779 = sbr.rel (0) target = $region33
  $region32: #{basic_conv_forward.1} parent=0 // pred_region
    _
  $region33: #{basic_conv_forward.1} parent=0 // pred_fallthru
    _
  // Predicated region
  $region34: #{basic_conv_forward.1} parent=0 // pred_check
    _
  $region35: #{basic_conv_forward.1} parent=0 // pred_check_branch
    %3781 = sbr.rel (0) target = $region37
  $region36: #{basic_conv_forward.1} parent=0 // pred_region
    _
  $region37: #{basic_conv_forward.1} parent=0 // pred_fallthru
    _

</llo_original>
